<compile_context>
chip_gen: v6e
topology: v6e:2x2x1
jax: 0.10.0
libtpu: 0.0.40
codegen_flags: <defaults>
</compile_context>

<pallas_src>
import functools

import jax
import jax.numpy as jnp
from jax.experimental import pallas as pl
from jax.experimental.pallas import tpu as pltpu


# ----------------------------------------------------------------------------
# Fused encoder GRU kernel: grid=(T,), hidden state carried in VMEM scratch.
# ----------------------------------------------------------------------------
def encoder_kernel(x_ref, wih_ref, whh_ref, bih_ref, bhh_ref,
                   out_ref, h_scr):
    t = pl.program_id(0)

    @pl.when(t == 0)
    def _init():
        h_scr[...] = jnp.zeros_like(h_scr)

    h = h_scr[...]                                   # (B, H)
    x = x_ref[0]                                     # (B, H) current step
    hid = h.shape[-1]

    gi = jnp.dot(x, wih_ref[...],
                 preferred_element_type=jnp.float32) + bih_ref[...]
    gh = jnp.dot(h, whh_ref[...],
                 preferred_element_type=jnp.float32) + bhh_ref[...]
    # PyTorch nn.GRUCell gate order: r, z, n
    r = jax.nn.sigmoid(gi[:, :hid] + gh[:, :hid])
    z = jax.nn.sigmoid(gi[:, hid:2 * hid] + gh[:, hid:2 * hid])
    n = jnp.tanh(gi[:, 2 * hid:] + r * gh[:, 2 * hid:])
    h_new = (1.0 - z) * n + z * h

    h_scr[...] = h_new
    out_ref[0] = h_new


def run_encoder(emb_x_t, wih, whh, bih, bhh):
    T, B, H = emb_x_t.shape
    return pl.pallas_call(
        encoder_kernel,
        out_shape=jax.ShapeDtypeStruct((T, B, H), jnp.float32),
        grid=(T,),
        in_specs=[
            pl.BlockSpec((1, B, H), lambda t: (t, 0, 0)),   # per-step x_t
            pl.BlockSpec((H, 3 * H), lambda t: (0, 0)),     # resident weights
            pl.BlockSpec((H, 3 * H), lambda t: (0, 0)),
            pl.BlockSpec((1, 3 * H), lambda t: (0, 0)),
            pl.BlockSpec((1, 3 * H), lambda t: (0, 0)),
        ],
        out_specs=pl.BlockSpec((1, B, H), lambda t: (t, 0, 0)),
        scratch_shapes=[pltpu.VMEM((B, H), jnp.float32)],
        compiler_params=pltpu.CompilerParams(
            dimension_semantics=("arbitrary",)),
    )(emb_x_t, wih, whh, bih, bhh)


# ----------------------------------------------------------------------------
# Fused decoder kernel: grid=(s_len,).  Per step: masked attention over the
# resident encoder states + GRU cell with split input weights.  Sentence
# pooling ("encoder_sent") computed once at step 0 into a VMEM scratch.
# ----------------------------------------------------------------------------
def decoder_kernel(emb_ref, enc_ref, mask_ref, sentw_ref, h0_ref,
                   wih_e_ref, wih_c_ref, wih_s_ref, whh_ref,
                   bih_ref, bhh_ref,
                   hout_ref, h_scr, sents_scr):
    s = pl.program_id(0)
    enc = enc_ref[...]                               # (B, T, H), VMEM-resident
    mask = mask_ref[...]                             # (B, T)

    @pl.when(s == 0)
    def _init():
        h_scr[...] = h0_ref[...]
        # sentence attention pooling with learned query sent_w
        w = sentw_ref[...]                           # (1, H)
        sc = jnp.sum(enc * w[None, :, :], axis=-1)   # (B, T)
        # NOTE: if a mask row is all zeros this yields a uniform softmax over
        # pad positions (same behavior as the reference), not NaN.
        sc = jnp.where(mask > 0.5, sc, -1e9)
        sc = sc - jnp.max(sc, axis=-1, keepdims=True)
        p = jnp.exp(sc)
        p = p * pl.reciprocal(jnp.sum(p, axis=-1, keepdims=True), approx=True)
        sents_scr[...] = jnp.sum(p[:, :, None] * enc, axis=1)

    h = h_scr[...]                                   # (B, H)
    sents = sents_scr[...]                           # (B, H)
    emb = emb_ref[0]                                 # (B, H) current token

    # masked dot-product attention (query = current hidden state)
    sc = jnp.sum(enc * h[:, None, :], axis=-1)       # (B, T)
    sc = jnp.where(mask > 0.5, sc, -1e9)
    sc = sc - jnp.max(sc, axis=-1, keepdims=True)
    p = jnp.exp(sc)
    p = p * pl.reciprocal(jnp.sum(p, axis=-1, keepdims=True), approx=True)
    ctx = jnp.sum(p[:, :, None] * enc, axis=1)       # (B, H)

    # GRU cell; input = [emb ; ctx ; sents] realized as three summed matmuls
    gi = (jnp.dot(emb, wih_e_ref[...], preferred_element_type=jnp.float32)
          + jnp.dot(ctx, wih_c_ref[...], preferred_element_type=jnp.float32)
          + jnp.dot(sents, wih_s_ref[...], preferred_element_type=jnp.float32)
          + bih_ref[...])
    gh = jnp.dot(h, whh_ref[...],
                 preferred_element_type=jnp.float32) + bhh_ref[...]
    hid = h.shape[-1]
    r = jax.nn.sigmoid(gi[:, :hid] + gh[:, :hid])
    z = jax.nn.sigmoid(gi[:, hid:2 * hid] + gh[:, hid:2 * hid])
    n = jnp.tanh(gi[:, 2 * hid:] + r * gh[:, 2 * hid:])
    h_new = (1.0 - z) * n + z * h

    h_scr[...] = h_new
    hout_ref[0] = h_new


def run_decoder(emb_y_t, encoder_out, masks, h0, params):
    S, B, H = emb_y_t.shape
    T = encoder_out.shape[1]
    return pl.pallas_call(
        decoder_kernel,
        out_shape=jax.ShapeDtypeStruct((S, B, H), jnp.float32),
        grid=(S,),
        in_specs=[
            pl.BlockSpec((1, B, H), lambda s: (s, 0, 0)),   # per-step token emb
            pl.BlockSpec((B, T, H), lambda s: (0, 0, 0)),   # encoder_out (resident)
            pl.BlockSpec((B, T), lambda s: (0, 0)),         # masks
            pl.BlockSpec((1, H), lambda s: (0, 0)),         # sent_w
            pl.BlockSpec((B, H), lambda s: (0, 0)),         # h0
            pl.BlockSpec((H, 3 * H), lambda s: (0, 0)),     # wih_e
            pl.BlockSpec((H, 3 * H), lambda s: (0, 0)),     # wih_c
            pl.BlockSpec((H, 3 * H), lambda s: (0, 0)),     # wih_s
            pl.BlockSpec((H, 3 * H), lambda s: (0, 0)),     # whh
            pl.BlockSpec((1, 3 * H), lambda s: (0, 0)),     # bih
            pl.BlockSpec((1, 3 * H), lambda s: (0, 0)),     # bhh
        ],
        out_specs=pl.BlockSpec((1, B, H), lambda s: (s, 0, 0)),
        scratch_shapes=[pltpu.VMEM((B, H), jnp.float32),    # h carry
                        pltpu.VMEM((B, H), jnp.float32)],   # sents
        compiler_params=pltpu.CompilerParams(
            dimension_semantics=("arbitrary",)),
    )(emb_y_t, encoder_out, masks, params["sent_w"], h0,
      params["dec_wih_e"], params["dec_wih_c"], params["dec_wih_s"],
      params["dec_whh"], params["dec_bih"], params["dec_bhh"])


# ----------------------------------------------------------------------------
# Batched vocab projection: one tiled matmul over all decoder hiddens,
# grid over 128-wide vocab tiles marked "parallel".
# ----------------------------------------------------------------------------
def project_kernel(x_ref, w_ref, b_ref, o_ref):
    o_ref[...] = (jnp.dot(x_ref[...], w_ref[...],
                          preferred_element_type=jnp.float32) + b_ref[...])


def project(x, w, b, *, tile_n=128):
    M, H = x.shape
    V = w.shape[1]
    assert V % tile_n == 0
    return pl.pallas_call(
        project_kernel,
        out_shape=jax.ShapeDtypeStruct((M, V), jnp.float32),
        grid=(V // tile_n,),
        in_specs=[
            pl.BlockSpec((M, H), lambda j: (0, 0)),         # hiddens (resident)
            pl.BlockSpec((H, tile_n), lambda j: (0, j)),    # vocab tile of W
            pl.BlockSpec((1, tile_n), lambda j: (0, j)),    # bias tile
        ],
        out_specs=pl.BlockSpec((M, tile_n), lambda j: (0, j)),
        compiler_params=pltpu.CompilerParams(
            dimension_semantics=("parallel",)),
    )(x, w, b)


# ----------------------------------------------------------------------------
# Parameters / forward
# ----------------------------------------------------------------------------
def init_params(key, vocab_size, hidden_size):
    ks = jax.random.split(key, 10)
    s = 0.02
    H, V = hidden_size, vocab_size
    return {
        "embed":     jax.random.normal(ks[0], (V, H), jnp.float32) * s,
        # encoder GRU (input = embedding, dim H); gate order r,z,n
        "enc_wih":   jax.random.normal(ks[1], (H, 3 * H), jnp.float32) * s,
        "enc_whh":   jax.random.normal(ks[2], (H, 3 * H), jnp.float32) * s,
        "enc_bih":   jnp.zeros((1, 3 * H), jnp.float32),
        "enc_bhh":   jnp.zeros((1, 3 * H), jnp.float32),
        # sentence encoder (attention pooling query)
        "sent_w":    jax.random.normal(ks[3], (1, H), jnp.float32) * s,
        # decoder GRU: input = [emb ; attn_ctx ; sents]; W_ih split per piece
        "dec_wih_e": jax.random.normal(ks[4], (H, 3 * H), jnp.float32) * s,
        "dec_wih_c": jax.random.normal(ks[5], (H, 3 * H), jnp.float32) * s,
        "dec_wih_s": jax.random.normal(ks[6], (H, 3 * H), jnp.float32) * s,
        "dec_whh":   jax.random.normal(ks[7], (H, 3 * H), jnp.float32) * s,
        "dec_bih":   jnp.zeros((1, 3 * H), jnp.float32),
        "dec_bhh":   jnp.zeros((1, 3 * H), jnp.float32),
        # output layer (hidden_size -> vocab_size), like nn.Linear
        "out_w":     jax.random.normal(ks[8], (H, V), jnp.float32) * s,
        "out_b":     jnp.zeros((1, V), jnp.float32),
    }


def convert(y, bos):
    # (batch, s_len) (w1..wn) -> (<bos>, w1..wn-1), matches Seq2seq.convert
    start = jnp.full((y.shape[0], 1), bos, dtype=y.dtype)
    return jnp.concatenate([start, y], axis=1)[:, :-1]


@functools.partial(jax.jit, static_argnames=("bos",))
def seq2seq_forward(params, x, y, masks, *, bos):
    """
    x:     (batch, t_len) int32 encoder token ids
    y:     (batch, s_len) int32 decoder token ids
    masks: (batch, t_len) float32, 1 = valid token, 0 = pad
    returns logits (batch, s_len, vocab_size)
    """
    B = x.shape[0]
    H = params["embed"].shape[1]
    V = params["out_w"].shape[1]
    s_len = y.shape[1]

    # ---- encoder: embed + fused GRU over time (single kernel) ----
    emb_x = jnp.take(params["embed"], x, axis=0)           # (B, T, H)
    emb_x_t = jnp.transpose(emb_x, (1, 0, 2))              # (T, B, H)
    enc_out_t = run_encoder(emb_x_t, params["enc_wih"], params["enc_whh"],
                            params["enc_bih"], params["enc_bhh"])  # (T, B, H)
    encoder_out = jnp.transpose(enc_out_t, (1, 0, 2))      # (B, T, H)
    h0 = enc_out_t[-1]                                     # (B, H) final state

    # ---- decoder: pre-gather all token embeddings, fused step loop ----
    y_c = convert(y, bos)                                  # (B, S)
    emb_y = jnp.take(params["embed"], y_c, axis=0)         # (B, S, H)
    emb_y_t = jnp.transpose(emb_y, (1, 0, 2))              # (S, B, H)
    dec_h_t = run_decoder(emb_y_t, encoder_out, masks, h0, params)  # (S, B, H)

    # ---- batched vocab projection (hoisted out of the step loop) ----
    logits = project(dec_h_t.reshape(s_len * B, H),
                     params["out_w"], params["out_b"])     # (S*B, V)
    logits = logits.reshape(s_len, B, V)
    return jnp.transpose(logits, (1, 0, 2))                # (B, S, V)


# ----------------------------------------------------------------------------
if __name__ == "__main__":
    # small, lane/sublane-aligned config (B multiple of 8, H/V multiples of 128)
    batch, t_len, s_len = 8, 8, 8
    hidden_size, vocab_size, bos = 128, 256, 1

    key = jax.random.PRNGKey(0)
    k_p, k_x, k_y = jax.random.split(key, 3)

    params = init_params(k_p, vocab_size, hidden_size)
    x = jax.random.randint(k_x, (batch, t_len), 0, vocab_size, dtype=jnp.int32)
    y = jax.random.randint(k_y, (batch, s_len), 0, vocab_size, dtype=jnp.int32)
    # valid/pad mask: pad the tail of a couple of batch rows
    masks = jnp.ones((batch, t_len), jnp.float32)
    masks = masks.at[1, -2:].set(0.0).at[5, -3:].set(0.0)

    out = seq2seq_forward(params, x, y, masks, bos=bos)
    jax.block_until_ready(out)
    assert out.shape == (batch, s_len, vocab_size)
    assert bool(jnp.all(jnp.isfinite(out)))
    print("KERNEL_OK")
</pallas_src>

<mosaic_0001>
module attributes {stable_mosaic.version = 11 : i64} {
  func.func @encoder_kernel(%arg0: i32, %arg1: memref<1x8x128xf32, #tpu.memory_space<vmem>>, %arg2: memref<128x384xf32, #tpu.memory_space<vmem>>, %arg3: memref<128x384xf32, #tpu.memory_space<vmem>>, %arg4: memref<1x384xf32, #tpu.memory_space<vmem>>, %arg5: memref<1x384xf32, #tpu.memory_space<vmem>>, %arg6: memref<1x8x128xf32, #tpu.memory_space<vmem>>, %arg7: memref<8x128xf32, #tpu.memory_space<vmem>>) attributes {dimension_semantics = [#tpu.dimension_semantics<arbitrary>], iteration_bounds = array<i64: 8>, scalar_prefetch = 0 : i64, scratch_operands = 1 : i64, tpu.core_type = #tpu.core_type<tc>, window_params = [{transform_indices = @transform_0, window_bounds = array<i64: 1, 8, 128>}, {pipeline_mode = #tpu.pipeline_mode<synchronous>, transform_indices = @transform_1, window_bounds = array<i64: 128, 384>}, {pipeline_mode = #tpu.pipeline_mode<synchronous>, transform_indices = @transform_2, window_bounds = array<i64: 128, 384>}, {pipeline_mode = #tpu.pipeline_mode<synchronous>, transform_indices = @transform_3, window_bounds = array<i64: 1, 384>}, {pipeline_mode = #tpu.pipeline_mode<synchronous>, transform_indices = @transform_4, window_bounds = array<i64: 1, 384>}, {transform_indices = @transform_5, window_bounds = array<i64: 1, 8, 128>}]} {
    %c0_i32 = arith.constant 0 : i32
    %0 = arith.cmpi eq, %arg0, %c0_i32 : i32
    %1 = arith.extui %0 : i1 to i32
    %c0_i32_0 = arith.constant 0 : i32
    %2 = arith.cmpi ne, %1, %c0_i32_0 : i32
    scf.if %2 {
      %cst_22 = arith.constant 0.000000e+00 : f32
      %46 = vector.broadcast %cst_22 : f32 to vector<8x128xf32>
      %c0_23 = arith.constant 0 : index
      %c0_24 = arith.constant 0 : index
      %47 = vector.load %arg7[%c0_23, %c0_24] : memref<8x128xf32, #tpu.memory_space<vmem>>, vector<8x128xf32>
      tpu.vector_store %arg7[%c0_23, %c0_24], %46 {strides = array<i32>} : memref<8x128xf32, #tpu.memory_space<vmem>>, vector<8x128xf32>,
    } else {
    }
    %c0 = arith.constant 0 : index
    %c0_1 = arith.constant 0 : index
    %3 = vector.load %arg7[%c0, %c0_1] : memref<8x128xf32, #tpu.memory_space<vmem>>, vector<8x128xf32>
    %c0_2 = arith.constant 0 : index
    %c0_3 = arith.constant 0 : index
    %c0_4 = arith.constant 0 : index
    %4 = vector.load %arg1[%c0_2, %c0_3, %c0_4] : memref<1x8x128xf32, #tpu.memory_space<vmem>>, vector<1x8x128xf32>
    %5 = vector.shape_cast %4 : vector<1x8x128xf32> to vector<8x128xf32>
    %c0_5 = arith.constant 0 : index
    %c0_6 = arith.constant 0 : index
    %6 = vector.load %arg2[%c0_5, %c0_6] : memref<128x384xf32, #tpu.memory_space<vmem>>, vector<128x384xf32>
    %cst = arith.constant dense<0.000000e+00> : vector<8x384xf32>
    %7 = tpu.matmul %5, %6, %cst {dimension_numbers = #tpu.dot_dimension_numbers<[1], [0], [0], [1], [0, 0, 1, 1], [], []>} : vector<8x128xf32>, vector<128x384xf32>, vector<8x384xf32> -> vector<8x384xf32>
    %c0_7 = arith.constant 0 : index
    %c0_8 = arith.constant 0 : index
    %8 = vector.load %arg4[%c0_7, %c0_8] : memref<1x384xf32, #tpu.memory_space<vmem>>, vector<1x384xf32>
    %9 = vector.broadcast %8 : vector<1x384xf32> to vector<8x384xf32>
    %10 = arith.addf %7, %9 : vector<8x384xf32>
    %c0_9 = arith.constant 0 : index
    %c0_10 = arith.constant 0 : index
    %11 = vector.load %arg3[%c0_9, %c0_10] : memref<128x384xf32, #tpu.memory_space<vmem>>, vector<128x384xf32>
    %cst_11 = arith.constant dense<0.000000e+00> : vector<8x384xf32>
    %12 = tpu.matmul %3, %11, %cst_11 {dimension_numbers = #tpu.dot_dimension_numbers<[1], [0], [0], [1], [0, 0, 1, 1], [], []>} : vector<8x128xf32>, vector<128x384xf32>, vector<8x384xf32> -> vector<8x384xf32>
    %c0_12 = arith.constant 0 : index
    %c0_13 = arith.constant 0 : index
    %13 = vector.load %arg5[%c0_12, %c0_13] : memref<1x384xf32, #tpu.memory_space<vmem>>, vector<1x384xf32>
    %14 = vector.broadcast %13 : vector<1x384xf32> to vector<8x384xf32>
    %15 = arith.addf %12, %14 : vector<8x384xf32>
    %16 = vector.extract_strided_slice %10 {offsets = [0, 0], sizes = [8, 128], strides = [1, 1]} : vector<8x384xf32> to vector<8x128xf32>
    %17 = vector.extract_strided_slice %15 {offsets = [0, 0], sizes = [8, 128], strides = [1, 1]} : vector<8x384xf32> to vector<8x128xf32>
    %18 = arith.addf %16, %17 : vector<8x128xf32>
    %19 = arith.negf %18 : vector<8x128xf32>
    %20 = math.exp %19 : vector<8x128xf32>
    %cst_14 = arith.constant 1.000000e+00 : f32
    %21 = vector.broadcast %cst_14 : f32 to vector<8x128xf32>
    %22 = arith.addf %21, %20 : vector<8x128xf32>
    %23 = arith.divf %21, %22 : vector<8x128xf32>
    %24 = vector.extract_strided_slice %10 {offsets = [0, 128], sizes = [8, 128], strides = [1, 1]} : vector<8x384xf32> to vector<8x128xf32>
    %25 = vector.extract_strided_slice %15 {offsets = [0, 128], sizes = [8, 128], strides = [1, 1]} : vector<8x384xf32> to vector<8x128xf32>
    %26 = arith.addf %24, %25 : vector<8x128xf32>
    %27 = arith.negf %26 : vector<8x128xf32>
    %28 = math.exp %27 : vector<8x128xf32>
    %cst_15 = arith.constant 1.000000e+00 : f32
    %29 = vector.broadcast %cst_15 : f32 to vector<8x128xf32>
    %30 = arith.addf %29, %28 : vector<8x128xf32>
    %31 = arith.divf %29, %30 : vector<8x128xf32>
    %32 = vector.extract_strided_slice %10 {offsets = [0, 256], sizes = [8, 128], strides = [1, 1]} : vector<8x384xf32> to vector<8x128xf32>
    %33 = vector.extract_strided_slice %15 {offsets = [0, 256], sizes = [8, 128], strides = [1, 1]} : vector<8x384xf32> to vector<8x128xf32>
    %34 = arith.mulf %23, %33 : vector<8x128xf32>
    %35 = arith.addf %32, %34 : vector<8x128xf32>
    %36 = math.tanh %35 : vector<8x128xf32>
    %cst_16 = arith.constant 1.000000e+00 : f32
    %37 = vector.broadcast %cst_16 : f32 to vector<8x128xf32>
    %38 = arith.subf %37, %31 : vector<8x128xf32>
    %39 = arith.mulf %38, %36 : vector<8x128xf32>
    %40 = arith.mulf %31, %3 : vector<8x128xf32>
    %41 = arith.addf %39, %40 : vector<8x128xf32>
    %c0_17 = arith.constant 0 : index
    %c0_18 = arith.constant 0 : index
    %42 = vector.load %arg7[%c0_17, %c0_18] : memref<8x128xf32, #tpu.memory_space<vmem>>, vector<8x128xf32>
    tpu.vector_store %arg7[%c0_17, %c0_18], %41 {strides = array<i32>} : memref<8x128xf32, #tpu.memory_space<vmem>>, vector<8x128xf32>,
    %c0_19 = arith.constant 0 : index
    %c0_20 = arith.constant 0 : index
    %c0_21 = arith.constant 0 : index
    %43 = vector.load %arg6[%c0_19, %c0_20, %c0_21] : memref<1x8x128xf32, #tpu.memory_space<vmem>>, vector<1x8x128xf32>
    %44 = vector.shape_cast %43 : vector<1x8x128xf32> to vector<8x128xf32>
    %45 = vector.shape_cast %41 : vector<8x128xf32> to vector<1x8x128xf32>
    tpu.vector_store %arg6[%c0_19, %c0_20, %c0_21], %45 {strides = array<i32>} : memref<1x8x128xf32, #tpu.memory_space<vmem>>, vector<1x8x128xf32>,
    return
  }
  func.func @transform_0(%arg0: i32) -> (i32, i32, i32) {
    %c0_i32 = arith.constant 0 : i32
    %c0_i32_0 = arith.constant 0 : i32
    %c0_i32_1 = arith.constant 0 : i32
    return %arg0, %c0_i32, %c0_i32_0 : i32, i32, i32
  }
  func.func @transform_1(%arg0: i32) -> (i32, i32) {
    %c0_i32 = arith.constant 0 : i32
    %c0_i32_0 = arith.constant 0 : i32
    %c0_i32_1 = arith.constant 0 : i32
    return %c0_i32, %c0_i32_0 : i32, i32
  }
  func.func @transform_2(%arg0: i32) -> (i32, i32) {
    %c0_i32 = arith.constant 0 : i32
    %c0_i32_0 = arith.constant 0 : i32
    %c0_i32_1 = arith.constant 0 : i32
    return %c0_i32, %c0_i32_0 : i32, i32
  }
  func.func @transform_3(%arg0: i32) -> (i32, i32) {
    %c0_i32 = arith.constant 0 : i32
    %c0_i32_0 = arith.constant 0 : i32
    %c0_i32_1 = arith.constant 0 : i32
    return %c0_i32, %c0_i32_0 : i32, i32
  }
  func.func @transform_4(%arg0: i32) -> (i32, i32) {
    %c0_i32 = arith.constant 0 : i32
    %c0_i32_0 = arith.constant 0 : i32
    %c0_i32_1 = arith.constant 0 : i32
    return %c0_i32, %c0_i32_0 : i32, i32
  }
  func.func @transform_5(%arg0: i32) -> (i32, i32, i32) {
    %c0_i32 = arith.constant 0 : i32
    %c0_i32_0 = arith.constant 0 : i32
    %c0_i32_1 = arith.constant 0 : i32
    return %arg0, %c0_i32, %c0_i32_0 : i32, i32, i32
  }
}

module attributes {stable_mosaic.version = 11 : i64} {
  func.func @project_kernel(%arg0: i32, %arg1: memref<64x128xf32, #tpu.memory_space<vmem>>, %arg2: memref<128x128xf32, #tpu.memory_space<vmem>>, %arg3: memref<1x128xf32, #tpu.memory_space<vmem>>, %arg4: memref<64x128xf32, #tpu.memory_space<vmem>>) attributes {dimension_semantics = [#tpu.dimension_semantics<parallel>], iteration_bounds = array<i64: 2>, scalar_prefetch = 0 : i64, scratch_operands = 0 : i64, tpu.core_type = #tpu.core_type<tc>, window_params = [{pipeline_mode = #tpu.pipeline_mode<synchronous>, transform_indices = @transform_0, window_bounds = array<i64: 64, 128>}, {transform_indices = @transform_1, window_bounds = array<i64: 128, 128>}, {transform_indices = @transform_2, window_bounds = array<i64: 1, 128>}, {transform_indices = @transform_3, window_bounds = array<i64: 64, 128>}]} {
    %c0 = arith.constant 0 : index
    %c0_0 = arith.constant 0 : index
    %0 = vector.load %arg1[%c0, %c0_0] : memref<64x128xf32, #tpu.memory_space<vmem>>, vector<64x128xf32>
    %c0_1 = arith.constant 0 : index
    %c0_2 = arith.constant 0 : index
    %1 = vector.load %arg2[%c0_1, %c0_2] : memref<128x128xf32, #tpu.memory_space<vmem>>, vector<128x128xf32>
    %cst = arith.constant dense<0.000000e+00> : vector<64x128xf32>
    %2 = tpu.matmul %0, %1, %cst {dimension_numbers = #tpu.dot_dimension_numbers<[1], [0], [0], [1], [0, 0, 1, 1], [], []>} : vector<64x128xf32>, vector<128x128xf32>, vector<64x128xf32> -> vector<64x128xf32>
    %c0_3 = arith.constant 0 : index
    %c0_4 = arith.constant 0 : index
    %3 = vector.load %arg3[%c0_3, %c0_4] : memref<1x128xf32, #tpu.memory_space<vmem>>, vector<1x128xf32>
    %4 = vector.broadcast %3 : vector<1x128xf32> to vector<64x128xf32>
    %5 = arith.addf %2, %4 : vector<64x128xf32>
    %c0_5 = arith.constant 0 : index
    %c0_6 = arith.constant 0 : index
    %6 = vector.load %arg4[%c0_5, %c0_6] : memref<64x128xf32, #tpu.memory_space<vmem>>, vector<64x128xf32>
    tpu.vector_store %arg4[%c0_5, %c0_6], %5 {strides = array<i32>} : memref<64x128xf32, #tpu.memory_space<vmem>>, vector<64x128xf32>,
    return
  }
  func.func @transform_0(%arg0: i32) -> (i32, i32) {
    %c0_i32 = arith.constant 0 : i32
    %c0_i32_0 = arith.constant 0 : i32
    %c0_i32_1 = arith.constant 0 : i32
    return %c0_i32, %c0_i32_0 : i32, i32
  }
  func.func @transform_1(%arg0: i32) -> (i32, i32) {
    %c0_i32 = arith.constant 0 : i32
    %c0_i32_0 = arith.constant 0 : i32
    return %c0_i32, %arg0 : i32, i32
  }
  func.func @transform_2(%arg0: i32) -> (i32, i32) {
    %c0_i32 = arith.constant 0 : i32
    %c0_i32_0 = arith.constant 0 : i32
    return %c0_i32, %arg0 : i32, i32
  }
  func.func @transform_3(%arg0: i32) -> (i32, i32) {
    %c0_i32 = arith.constant 0 : i32
    %c0_i32_0 = arith.constant 0 : i32
    return %c0_i32, %arg0 : i32, i32
  }
}

module attributes {stable_mosaic.version = 11 : i64} {
  func.func @decoder_kernel(%arg0: i32, %arg1: memref<1x8x128xf32, #tpu.memory_space<vmem>>, %arg2: memref<8x8x128xf32, #tpu.memory_space<vmem>>, %arg3: memref<8x8xf32, #tpu.memory_space<vmem>>, %arg4: memref<1x128xf32, #tpu.memory_space<vmem>>, %arg5: memref<8x128xf32, #tpu.memory_space<vmem>>, %arg6: memref<128x384xf32, #tpu.memory_space<vmem>>, %arg7: memref<128x384xf32, #tpu.memory_space<vmem>>, %arg8: memref<128x384xf32, #tpu.memory_space<vmem>>, %arg9: memref<128x384xf32, #tpu.memory_space<vmem>>, %arg10: memref<1x384xf32, #tpu.memory_space<vmem>>, %arg11: memref<1x384xf32, #tpu.memory_space<vmem>>, %arg12: memref<1x8x128xf32, #tpu.memory_space<vmem>>, %arg13: memref<8x128xf32, #tpu.memory_space<vmem>>, %arg14: memref<8x128xf32, #tpu.memory_space<vmem>>) attributes {dimension_semantics = [#tpu.dimension_semantics<arbitrary>], iteration_bounds = array<i64: 8>, scalar_prefetch = 0 : i64, scratch_operands = 2 : i64, tpu.core_type = #tpu.core_type<tc>, window_params = [{transform_indices = @transform_0, window_bounds = array<i64: 1, 8, 128>}, {pipeline_mode = #tpu.pipeline_mode<synchronous>, transform_indices = @transform_1, window_bounds = array<i64: 8, 8, 128>}, {pipeline_mode = #tpu.pipeline_mode<synchronous>, transform_indices = @transform_2, window_bounds = array<i64: 8, 8>}, {pipeline_mode = #tpu.pipeline_mode<synchronous>, transform_indices = @transform_3, window_bounds = array<i64: 1, 128>}, {pipeline_mode = #tpu.pipeline_mode<synchronous>, transform_indices = @transform_4, window_bounds = array<i64: 8, 128>}, {pipeline_mode = #tpu.pipeline_mode<synchronous>, transform_indices = @transform_5, window_bounds = array<i64: 128, 384>}, {pipeline_mode = #tpu.pipeline_mode<synchronous>, transform_indices = @transform_6, window_bounds = array<i64: 128, 384>}, {pipeline_mode = #tpu.pipeline_mode<synchronous>, transform_indices = @transform_7, window_bounds = array<i64: 128, 384>}, {pipeline_mode = #tpu.pipeline_mode<synchronous>, transform_indices = @transform_8, window_bounds = array<i64: 128, 384>}, {pipeline_mode = #tpu.pipeline_mode<synchronous>, transform_indices = @transform_9, window_bounds = array<i64: 1, 384>}, {pipeline_mode = #tpu.pipeline_mode<synchronous>, transform_indices = @transform_10, window_bounds = array<i64: 1, 384>}, {transform_indices = @transform_11, window_bounds = array<i64: 1, 8, 128>}]} {
    %c0 = arith.constant 0 : index
    %c0_0 = arith.constant 0 : index
    %c0_1 = arith.constant 0 : index
    %0 = vector.load %arg2[%c0, %c0_0, %c0_1] : memref<8x8x128xf32, #tpu.memory_space<vmem>>, vector<8x8x128xf32>
    %c0_2 = arith.constant 0 : index
    %c0_3 = arith.constant 0 : index
    %1 = vector.load %arg3[%c0_2, %c0_3] : memref<8x8xf32, #tpu.memory_space<vmem>>, vector<8x8xf32>
    %c0_i32 = arith.constant 0 : i32
    %2 = arith.cmpi eq, %arg0, %c0_i32 : i32
    %3 = arith.extui %2 : i1 to i32
    %c0_i32_4 = arith.constant 0 : i32
    %4 = arith.cmpi ne, %3, %c0_i32_4 : i32
    scf.if %4 {
      %c0_41 = arith.constant 0 : index
      %c0_42 = arith.constant 0 : index
      %77 = vector.load %arg5[%c0_41, %c0_42] : memref<8x128xf32, #tpu.memory_space<vmem>>, vector<8x128xf32>
      %c0_43 = arith.constant 0 : index
      %c0_44 = arith.constant 0 : index
      %78 = vector.load %arg13[%c0_43, %c0_44] : memref<8x128xf32, #tpu.memory_space<vmem>>, vector<8x128xf32>
      tpu.vector_store %arg13[%c0_43, %c0_44], %77 {strides = array<i32>} : memref<8x128xf32, #tpu.memory_space<vmem>>, vector<8x128xf32>,
      %c0_45 = arith.constant 0 : index
      %c0_46 = arith.constant 0 : index
      %79 = vector.load %arg4[%c0_45, %c0_46] : memref<1x128xf32, #tpu.memory_space<vmem>>, vector<1x128xf32>
      %80 = vector.shape_cast %79 : vector<1x128xf32> to vector<1x1x128xf32>
      %81 = vector.broadcast %80 : vector<1x1x128xf32> to vector<8x8x128xf32>
      %82 = arith.mulf %0, %81 : vector<8x8x128xf32>
      %cst_47 = arith.constant dense<0.000000e+00> : vector<8x8xf32>
      %83 = vector.multi_reduction <add>, %82, %cst_47 [2] : vector<8x8x128xf32> to vector<8x8xf32>
      %cst_48 = arith.constant 5.000000e-01 : f32
      %84 = vector.broadcast %cst_48 : f32 to vector<8x8xf32>
      %85 = arith.cmpf ogt, %1, %84 : vector<8x8xf32>
      %cst_49 = arith.constant -1.000000e+09 : f32
      %86 = vector.broadcast %cst_49 : f32 to vector<8x8xf32>
      %87 = arith.select %85, %83, %86 : vector<8x8xi1>, vector<8x8xf32>
      %cst_50 = arith.constant dense<0xFF800000> : vector<8xf32>
      %88 = vector.multi_reduction <maximumf>, %87, %cst_50 [1] : vector<8x8xf32> to vector<8xf32>
      %89 = vector.shape_cast %88 : vector<8xf32> to vector<8x1xf32>
      %90 = vector.broadcast %89 : vector<8x1xf32> to vector<8x8xf32>
      %91 = arith.subf %87, %90 : vector<8x8xf32>
      %92 = math.exp %91 : vector<8x8xf32>
      %cst_51 = arith.constant dense<0.000000e+00> : vector<8xf32>
      %93 = vector.multi_reduction <add>, %92, %cst_51 [1] : vector<8x8xf32> to vector<8xf32>
      %94 = vector.shape_cast %93 : vector<8xf32> to vector<8x1xf32>
      %95 = tpu.reciprocal %94 {approx = true} : vector<8x1xf32> -> vector<8x1xf32>
      %96 = vector.broadcast %95 : vector<8x1xf32> to vector<8x8xf32>
      %97 = arith.mulf %92, %96 : vector<8x8xf32>
      %98 = vector.shape_cast %97 : vector<8x8xf32> to vector<8x8x1xf32>
      %99 = vector.broadcast %98 : vector<8x8x1xf32> to vector<8x8x128xf32>
      %100 = arith.mulf %99, %0 : vector<8x8x128xf32>
      %cst_52 = arith.constant dense<0.000000e+00> : vector<8x128xf32>
      %101 = vector.multi_reduction <add>, %100, %cst_52 [1] : vector<8x8x128xf32> to vector<8x128xf32>
      %c0_53 = arith.constant 0 : index
      %c0_54 = arith.constant 0 : index
      %102 = vector.load %arg14[%c0_53, %c0_54] : memref<8x128xf32, #tpu.memory_space<vmem>>, vector<8x128xf32>
      tpu.vector_store %arg14[%c0_53, %c0_54], %101 {strides = array<i32>} : memref<8x128xf32, #tpu.memory_space<vmem>>, vector<8x128xf32>,
    } else {
    }
    %c0_5 = arith.constant 0 : index
    %c0_6 = arith.constant 0 : index
    %5 = vector.load %arg13[%c0_5, %c0_6] : memref<8x128xf32, #tpu.memory_space<vmem>>, vector<8x128xf32>
    %c0_7 = arith.constant 0 : index
    %c0_8 = arith.constant 0 : index
    %6 = vector.load %arg14[%c0_7, %c0_8] : memref<8x128xf32, #tpu.memory_space<vmem>>, vector<8x128xf32>
    %c0_9 = arith.constant 0 : index
    %c0_10 = arith.constant 0 : index
    %c0_11 = arith.constant 0 : index
    %7 = vector.load %arg1[%c0_9, %c0_10, %c0_11] : memref<1x8x128xf32, #tpu.memory_space<vmem>>, vector<1x8x128xf32>
    %8 = vector.shape_cast %7 : vector<1x8x128xf32> to vector<8x128xf32>
    %9 = vector.shape_cast %5 : vector<8x128xf32> to vector<8x1x128xf32>
    %10 = vector.broadcast %9 : vector<8x1x128xf32> to vector<8x8x128xf32>
    %11 = arith.mulf %0, %10 : vector<8x8x128xf32>
    %cst = arith.constant dense<0.000000e+00> : vector<8x8xf32>
    %12 = vector.multi_reduction <add>, %11, %cst [2] : vector<8x8x128xf32> to vector<8x8xf32>
    %cst_12 = arith.constant 5.000000e-01 : f32
    %13 = vector.broadcast %cst_12 : f32 to vector<8x8xf32>
    %14 = arith.cmpf ogt, %1, %13 : vector<8x8xf32>
    %cst_13 = arith.constant -1.000000e+09 : f32
    %15 = vector.broadcast %cst_13 : f32 to vector<8x8xf32>
    %16 = arith.select %14, %12, %15 : vector<8x8xi1>, vector<8x8xf32>
    %cst_14 = arith.constant dense<0xFF800000> : vector<8xf32>
    %17 = vector.multi_reduction <maximumf>, %16, %cst_14 [1] : vector<8x8xf32> to vector<8xf32>
    %18 = vector.shape_cast %17 : vector<8xf32> to vector<8x1xf32>
    %19 = vector.broadcast %18 : vector<8x1xf32> to vector<8x8xf32>
    %20 = arith.subf %16, %19 : vector<8x8xf32>
    %21 = math.exp %20 : vector<8x8xf32>
    %cst_15 = arith.constant dense<0.000000e+00> : vector<8xf32>
    %22 = vector.multi_reduction <add>, %21, %cst_15 [1] : vector<8x8xf32> to vector<8xf32>
    %23 = vector.shape_cast %22 : vector<8xf32> to vector<8x1xf32>
    %24 = tpu.reciprocal %23 {approx = true} : vector<8x1xf32> -> vector<8x1xf32>
    %25 = vector.broadcast %24 : vector<8x1xf32> to vector<8x8xf32>
    %26 = arith.mulf %21, %25 : vector<8x8xf32>
    %27 = vector.shape_cast %26 : vector<8x8xf32> to vector<8x8x1xf32>
    %28 = vector.broadcast %27 : vector<8x8x1xf32> to vector<8x8x128xf32>
    %29 = arith.mulf %28, %0 : vector<8x8x128xf32>
    %cst_16 = arith.constant dense<0.000000e+00> : vector<8x128xf32>
    %30 = vector.multi_reduction <add>, %29, %cst_16 [1] : vector<8x8x128xf32> to vector<8x128xf32>
    %c0_17 = arith.constant 0 : index
    %c0_18 = arith.constant 0 : index
    %31 = vector.load %arg6[%c0_17, %c0_18] : memref<128x384xf32, #tpu.memory_space<vmem>>, vector<128x384xf32>
    %cst_19 = arith.constant dense<0.000000e+00> : vector<8x384xf32>
    %32 = tpu.matmul %8, %31, %cst_19 {dimension_numbers = #tpu.dot_dimension_numbers<[1], [0], [0], [1], [0, 0, 1, 1], [], []>} : vector<8x128xf32>, vector<128x384xf32>, vector<8x384xf32> -> vector<8x384xf32>
    %c0_20 = arith.constant 0 : index
    %c0_21 = arith.constant 0 : index
    %33 = vector.load %arg7[%c0_20, %c0_21] : memref<128x384xf32, #tpu.memory_space<vmem>>, vector<128x384xf32>
    %cst_22 = arith.constant dense<0.000000e+00> : vector<8x384xf32>
    %34 = tpu.matmul %30, %33, %cst_22 {dimension_numbers = #tpu.dot_dimension_numbers<[1], [0], [0], [1], [0, 0, 1, 1], [], []>} : vector<8x128xf32>, vector<128x384xf32>, vector<8x384xf32> -> vector<8x384xf32>
    %35 = arith.addf %32, %34 : vector<8x384xf32>
    %c0_23 = arith.constant 0 : index
    %c0_24 = arith.constant 0 : index
    %36 = vector.load %arg8[%c0_23, %c0_24] : memref<128x384xf32, #tpu.memory_space<vmem>>, vector<128x384xf32>
    %cst_25 = arith.constant dense<0.000000e+00> : vector<8x384xf32>
    %37 = tpu.matmul %6, %36, %cst_25 {dimension_numbers = #tpu.dot_dimension_numbers<[1], [0], [0], [1], [0, 0, 1, 1], [], []>} : vector<8x128xf32>, vector<128x384xf32>, vector<8x384xf32> -> vector<8x384xf32>
    %38 = arith.addf %35, %37 : vector<8x384xf32>
    %c0_26 = arith.constant 0 : index
    %c0_27 = arith.constant 0 : index
    %39 = vector.load %arg10[%c0_26, %c0_27] : memref<1x384xf32, #tpu.memory_space<vmem>>, vector<1x384xf32>
    %40 = vector.broadcast %39 : vector<1x384xf32> to vector<8x384xf32>
    %41 = arith.addf %38, %40 : vector<8x384xf32>
    %c0_28 = arith.constant 0 : index
    %c0_29 = arith.constant 0 : index
    %42 = vector.load %arg9[%c0_28, %c0_29] : memref<128x384xf32, #tpu.memory_space<vmem>>, vector<128x384xf32>
    %cst_30 = arith.constant dense<0.000000e+00> : vector<8x384xf32>
    %43 = tpu.matmul %5, %42, %cst_30 {dimension_numbers = #tpu.dot_dimension_numbers<[1], [0], [0], [1], [0, 0, 1, 1], [], []>} : vector<8x128xf32>, vector<128x384xf32>, vector<8x384xf32> -> vector<8x384xf32>
    %c0_31 = arith.constant 0 : index
    %c0_32 = arith.constant 0 : index
    %44 = vector.load %arg11[%c0_31, %c0_32] : memref<1x384xf32, #tpu.memory_space<vmem>>, vector<1x384xf32>
    %45 = vector.broadcast %44 : vector<1x384xf32> to vector<8x384xf32>
    %46 = arith.addf %43, %45 : vector<8x384xf32>
    %47 = vector.extract_strided_slice %41 {offsets = [0, 0], sizes = [8, 128], strides = [1, 1]} : vector<8x384xf32> to vector<8x128xf32>
    %48 = vector.extract_strided_slice %46 {offsets = [0, 0], sizes = [8, 128], strides = [1, 1]} : vector<8x384xf32> to vector<8x128xf32>
    %49 = arith.addf %47, %48 : vector<8x128xf32>
    %50 = arith.negf %49 : vector<8x128xf32>
    %51 = math.exp %50 : vector<8x128xf32>
    %cst_33 = arith.constant 1.000000e+00 : f32
    %52 = vector.broadcast %cst_33 : f32 to vector<8x128xf32>
    %53 = arith.addf %52, %51 : vector<8x128xf32>
    %54 = arith.divf %52, %53 : vector<8x128xf32>
    %55 = vector.extract_strided_slice %41 {offsets = [0, 128], sizes = [8, 128], strides = [1, 1]} : vector<8x384xf32> to vector<8x128xf32>
    %56 = vector.extract_strided_slice %46 {offsets = [0, 128], sizes = [8, 128], strides = [1, 1]} : vector<8x384xf32> to vector<8x128xf32>
    %57 = arith.addf %55, %56 : vector<8x128xf32>
    %58 = arith.negf %57 : vector<8x128xf32>
    %59 = math.exp %58 : vector<8x128xf32>
    %cst_34 = arith.constant 1.000000e+00 : f32
    %60 = vector.broadcast %cst_34 : f32 to vector<8x128xf32>
    %61 = arith.addf %60, %59 : vector<8x128xf32>
    %62 = arith.divf %60, %61 : vector<8x128xf32>
    %63 = vector.extract_strided_slice %41 {offsets = [0, 256], sizes = [8, 128], strides = [1, 1]} : vector<8x384xf32> to vector<8x128xf32>
    %64 = vector.extract_strided_slice %46 {offsets = [0, 256], sizes = [8, 128], strides = [1, 1]} : vector<8x384xf32> to vector<8x128xf32>
    %65 = arith.mulf %54, %64 : vector<8x128xf32>
    %66 = arith.addf %63, %65 : vector<8x128xf32>
    %67 = math.tanh %66 : vector<8x128xf32>
    %cst_35 = arith.constant 1.000000e+00 : f32
    %68 = vector.broadcast %cst_35 : f32 to vector<8x128xf32>
    %69 = arith.subf %68, %62 : vector<8x128xf32>
    %70 = arith.mulf %69, %67 : vector<8x128xf32>
    %71 = arith.mulf %62, %5 : vector<8x128xf32>
    %72 = arith.addf %70, %71 : vector<8x128xf32>
    %c0_36 = arith.constant 0 : index
    %c0_37 = arith.constant 0 : index
    %73 = vector.load %arg13[%c0_36, %c0_37] : memref<8x128xf32, #tpu.memory_space<vmem>>, vector<8x128xf32>
    tpu.vector_store %arg13[%c0_36, %c0_37], %72 {strides = array<i32>} : memref<8x128xf32, #tpu.memory_space<vmem>>, vector<8x128xf32>,
    %c0_38 = arith.constant 0 : index
    %c0_39 = arith.constant 0 : index
    %c0_40 = arith.constant 0 : index
    %74 = vector.load %arg12[%c0_38, %c0_39, %c0_40] : memref<1x8x128xf32, #tpu.memory_space<vmem>>, vector<1x8x128xf32>
    %75 = vector.shape_cast %74 : vector<1x8x128xf32> to vector<8x128xf32>
    %76 = vector.shape_cast %72 : vector<8x128xf32> to vector<1x8x128xf32>
    tpu.vector_store %arg12[%c0_38, %c0_39, %c0_40], %76 {strides = array<i32>} : memref<1x8x128xf32, #tpu.memory_space<vmem>>, vector<1x8x128xf32>,
    return
  }
  func.func @transform_0(%arg0: i32) -> (i32, i32, i32) {
    %c0_i32 = arith.constant 0 : i32
    %c0_i32_0 = arith.constant 0 : i32
    %c0_i32_1 = arith.constant 0 : i32
    return %arg0, %c0_i32, %c0_i32_0 : i32, i32, i32
  }
  func.func @transform_1(%arg0: i32) -> (i32, i32, i32) {
    %c0_i32 = arith.constant 0 : i32
    %c0_i32_0 = arith.constant 0 : i32
    %c0_i32_1 = arith.constant 0 : i32
    %c0_i32_2 = arith.constant 0 : i32
    return %c0_i32, %c0_i32_0, %c0_i32_1 : i32, i32, i32
  }
  func.func @transform_2(%arg0: i32) -> (i32, i32) {
    %c0_i32 = arith.constant 0 : i32
    %c0_i32_0 = arith.constant 0 : i32
    %c0_i32_1 = arith.constant 0 : i32
    return %c0_i32, %c0_i32_0 : i32, i32
  }
  func.func @transform_3(%arg0: i32) -> (i32, i32) {
    %c0_i32 = arith.constant 0 : i32
    %c0_i32_0 = arith.constant 0 : i32
    %c0_i32_1 = arith.constant 0 : i32
    return %c0_i32, %c0_i32_0 : i32, i32
  }
  func.func @transform_4(%arg0: i32) -> (i32, i32) {
    %c0_i32 = arith.constant 0 : i32
    %c0_i32_0 = arith.constant 0 : i32
    %c0_i32_1 = arith.constant 0 : i32
    return %c0_i32, %c0_i32_0 : i32, i32
  }
  func.func @transform_5(%arg0: i32) -> (i32, i32) {
    %c0_i32 = arith.constant 0 : i32
    %c0_i32_0 = arith.constant 0 : i32
    %c0_i32_1 = arith.constant 0 : i32
    return %c0_i32, %c0_i32_0 : i32, i32
  }
  func.func @transform_6(%arg0: i32) -> (i32, i32) {
    %c0_i32 = arith.constant 0 : i32
    %c0_i32_0 = arith.constant 0 : i32
    %c0_i32_1 = arith.constant 0 : i32
    return %c0_i32, %c0_i32_0 : i32, i32
  }
  func.func @transform_7(%arg0: i32) -> (i32, i32) {
    %c0_i32 = arith.constant 0 : i32
    %c0_i32_0 = arith.constant 0 : i32
    %c0_i32_1 = arith.constant 0 : i32
    return %c0_i32, %c0_i32_0 : i32, i32
  }
  func.func @transform_8(%arg0: i32) -> (i32, i32) {
    %c0_i32 = arith.constant 0 : i32
    %c0_i32_0 = arith.constant 0 : i32
    %c0_i32_1 = arith.constant 0 : i32
    return %c0_i32, %c0_i32_0 : i32, i32
  }
  func.func @transform_9(%arg0: i32) -> (i32, i32) {
    %c0_i32 = arith.constant 0 : i32
    %c0_i32_0 = arith.constant 0 : i32
    %c0_i32_1 = arith.constant 0 : i32
    return %c0_i32, %c0_i32_0 : i32, i32
  }
  func.func @transform_10(%arg0: i32) -> (i32, i32) {
    %c0_i32 = arith.constant 0 : i32
    %c0_i32_0 = arith.constant 0 : i32
    %c0_i32_1 = arith.constant 0 : i32
    return %c0_i32, %c0_i32_0 : i32, i32
  }
  func.func @transform_11(%arg0: i32) -> (i32, i32, i32) {
    %c0_i32 = arith.constant 0 : i32
    %c0_i32_0 = arith.constant 0 : i32
    %c0_i32_1 = arith.constant 0 : i32
    return %arg0, %c0_i32, %c0_i32_0 : i32, i32, i32
  }
}

</mosaic_0001>

<llo_original>
// kernel: seq2seq_forward.5
$region0: #{seq2seq_forward.5}
  #allocation0 [shape = 'u32[]', space=smem, size = 0x4, offset = 0x4, fixed_abs, tag = 'smem constant byte address 0x4 - core index']
  #allocation1 [shape = 'u32[144,128]{1,0:T(1,128)}', space=vmem, size = 0x12000, scoped, tag = 'internal scratch']
  %s0 = inlined_call_operand.vmem [shape: f32[64,128], index: 0, kind: input, shape index: {}]
  %s1 = inlined_call_operand.vmem [shape: f32[128,256], index: 1, kind: input, shape index: {}]
  %s2 = inlined_call_operand.vmem [shape: f32[1,256], index: 2, kind: input, shape index: {}]
  %s3 = inlined_call_operand.vmem [shape: f32[64,256], index: 3, kind: output, shape index: {}]
  %s4 = sld [smem:[#allocation0]]
  $region117: #{seq2seq_forward.5} parent=0
    _
  %s6 = ssub.s32 1, %s4
  %s7 = scalar_select 0, %s6, %s4
  $region1: #{seq2seq_forward.5} parent=0
    #allocation2 [shape = 'u8[131072]{0}', space=vmem, size = 0x20000, scoped, tag = 'input window, operand 1']
    #allocation3 [shape = 'u8[65536]{0}', space=vmem, size = 0x10000, scoped, tag = 'output window, operand 0']
    loop: start=0, step=1, limit=4
    $region2: #{seq2seq_forward.5} parent=1 // loop_pre_header
      _
    $region3: #{seq2seq_forward.5} parent=1 // loop_header
      %s9 = sphi 0, %s13
      %p10 = scmp.ge.s32.totalorder %s9, 4
      %s17 = sphi 0, %s17
      %s19 = sphi 0, %s17
      %s20 = sphi 0, %s19
      %s34 = sphi 0, %s20
      %s40 = sphi 0, %s42
      %s43 = sphi 0, %s40
      %s44 = sphi 0, %s43
      %s60 = sphi 0, %s44
      %s66 = sphi 0, %s68
      %s69 = sphi 0, %s66
      %s70 = sphi 0, %s69
      %s86 = sphi 0, %s70
      %s92 = sphi 0, %s94
      %s95 = sphi 0, %s92
      %s96 = sphi 0, %s95
      %s112 = sphi 0, %s96
    $region4: #{seq2seq_forward.5} parent=1 // loop_header_branch
      %12 = sbr.rel (%p10) target = $region8
    $region5: #{seq2seq_forward.5} parent=1 // loop_body
      %s14 = ssub.s32 %s9, 1
      %s15 = ssub.s32 %s9, 2
      %s16 = sadd.s32 %s9, 1
      %s18 = sadd.s32 %s17, 1
      %p21 = scmp.eq.s32.totalorder %s9, 1
      %p22 = scmp.ne.s32.totalorder %s17, %s19
      %p23 = scmp.eq.s32.totalorder %s9, 0
      %p24 = por %p22, %p23
      %p25 = scmp.ne.s32.totalorder %s17, %s19
      %p26 = scmp.eq.s32.totalorder %s14, 1
      %p27 = por %p25, %p26
      %p28 = scmp.ne.s32.totalorder %s19, %s20
      %p29 = scmp.eq.s32.totalorder %s14, 0
      %p30 = por %p28, %p29
      %p31 = scmp.ne.s32.totalorder %s19, %s20
      %p32 = scmp.eq.s32.totalorder %s15, 1
      %p33 = por %p31, %p32
      %p35 = scmp.ne.s32.totalorder %s20, %s34
      %p36 = scmp.eq.s32.totalorder %s15, 0
      %p37 = por %p35, %p36
      %s38 = ssub.s32 %s9, %s16
      %p39 = scmp.eq.s32.totalorder %s38, 0
      %s41 = sadd.s32 %s40, 1
      %s42 = scalar_select %p39, %s40, %s41
      %p45 = pneg %p39
      %p46 = scmp.eq.s32.totalorder %s9, 1
      %p47 = por %p45, %p46
      %p48 = scmp.ne.s32.totalorder %s40, %s43
      %p49 = scmp.eq.s32.totalorder %s9, 0
      %p50 = por %p48, %p49
      %p51 = scmp.ne.s32.totalorder %s40, %s43
      %p52 = scmp.eq.s32.totalorder %s14, 1
      %p53 = por %p51, %p52
      %p54 = scmp.ne.s32.totalorder %s43, %s44
      %p55 = scmp.eq.s32.totalorder %s14, 0
      %p56 = por %p54, %p55
      %p57 = scmp.ne.s32.totalorder %s43, %s44
      %p58 = scmp.eq.s32.totalorder %s15, 1
      %p59 = por %p57, %p58
      %p61 = scmp.ne.s32.totalorder %s44, %s60
      %p62 = scmp.eq.s32.totalorder %s15, 0
      %p63 = por %p61, %p62
      %s64 = ssub.s32 %s9, %s16
      %p65 = scmp.eq.s32.totalorder %s64, 0
      %s67 = sadd.s32 %s66, 1
      %s68 = scalar_select %p65, %s66, %s67
      %p71 = pneg %p65
      %p72 = scmp.eq.s32.totalorder %s9, 1
      %p73 = por %p71, %p72
      %p74 = scmp.ne.s32.totalorder %s66, %s69
      %p75 = scmp.eq.s32.totalorder %s9, 0
      %p76 = por %p74, %p75
      %p77 = scmp.ne.s32.totalorder %s66, %s69
      %p78 = scmp.eq.s32.totalorder %s14, 1
      %p79 = por %p77, %p78
      %p80 = scmp.ne.s32.totalorder %s69, %s70
      %p81 = scmp.eq.s32.totalorder %s14, 0
      %p82 = por %p80, %p81
      %p83 = scmp.ne.s32.totalorder %s69, %s70
      %p84 = scmp.eq.s32.totalorder %s15, 1
      %p85 = por %p83, %p84
      %p87 = scmp.ne.s32.totalorder %s70, %s86
      %p88 = scmp.eq.s32.totalorder %s15, 0
      %p89 = por %p87, %p88
      %s90 = ssub.s32 %s9, %s16
      %p91 = scmp.eq.s32.totalorder %s90, 0
      %s93 = sadd.s32 %s92, 1
      %s94 = scalar_select %p91, %s92, %s93
      %p97 = pneg %p91
      %p98 = scmp.eq.s32.totalorder %s9, 1
      %p99 = por %p97, %p98
      %p100 = scmp.ne.s32.totalorder %s92, %s95
      %p101 = scmp.eq.s32.totalorder %s9, 0
      %p102 = por %p100, %p101
      %p103 = scmp.ne.s32.totalorder %s92, %s95
      %p104 = scmp.eq.s32.totalorder %s14, 1
      %p105 = por %p103, %p104
      %p106 = scmp.ne.s32.totalorder %s95, %s96
      %p107 = scmp.eq.s32.totalorder %s14, 0
      %p108 = por %p106, %p107
      %p109 = scmp.ne.s32.totalorder %s95, %s96
      %p110 = scmp.eq.s32.totalorder %s15, 1
      %p111 = por %p109, %p110
      %p113 = scmp.ne.s32.totalorder %s96, %s112
      %p114 = scmp.eq.s32.totalorder %s15, 0
      %p115 = por %p113, %p114
      %p116 = scmp.le.s32.totalorder 1, %s9
      %p117 = scmp.lt.s32.totalorder %s9, 3
      %p118 = pnand %p116, %p117
      %p119 = pneg %p118
      // Predicated region
      $region9: #{seq2seq_forward.5} parent=5 // pred_check
        _
      $region10: #{seq2seq_forward.5} parent=5 // pred_check_branch
        %121 = sbr.rel (%p118) target = $region12
      $region11: #{seq2seq_forward.5} parent=5 // pred_region
        %s122 = ssub.s32 %s9, 1
        // Predicated region
        $region13: #{seq2seq_forward.5} parent=11 // pred_check
          %p123 = pneg %p30
        $region14: #{seq2seq_forward.5} parent=11 // pred_check_branch
          %125 = sbr.rel (%p123) target = $region16
        $region15: #{seq2seq_forward.5} parent=11 // pred_region
          _
        $region16: #{seq2seq_forward.5} parent=11 // pred_fallthru
          _
      $region12: #{seq2seq_forward.5} parent=5 // pred_fallthru
        _
      %p126 = scmp.lt.s32.totalorder %s9, 2
      // Predicated region
      $region17: #{seq2seq_forward.5} parent=5 // pred_check
        %p127 = pneg %p126
      $region18: #{seq2seq_forward.5} parent=5 // pred_check_branch
        %129 = sbr.rel (%p127) target = $region20
      $region19: #{seq2seq_forward.5} parent=5 // pred_region
        // Predicated region
        $region21: #{seq2seq_forward.5} parent=19 // pred_check
          %p130 = pneg %p50
        $region22: #{seq2seq_forward.5} parent=19 // pred_check_branch
          %132 = sbr.rel (%p130) target = $region24
        $region23: #{seq2seq_forward.5} parent=19 // pred_region
          %s133 = sand.u32 %s40, 1
          %s134 = sand.u32 %s40, 1
          %s135 = smul.addr %s134, 128
          %s136 = scalar_lea.vmem [#allocation2], %s135
          %s137 = smul.addr %s9, 8
          %s138 = scalar_lea.vmem %s1, %s137
          // Predicated region
          $region25: #{seq2seq_forward.5} parent=23 // pred_check
            _
          $region26: #{seq2seq_forward.5} parent=23 // pred_check_branch
            %140 = sbr.rel (0) target = $region28
          $region27: #{seq2seq_forward.5} parent=23 // pred_region
            // Predicated region
            $region29: #{seq2seq_forward.5} parent=27 // pred_check
              _
            $region30: #{seq2seq_forward.5} parent=27 // pred_check_branch
              %142 = sbr.rel (0) target = $region32
            $region31: #{seq2seq_forward.5} parent=27 // pred_region
              // Predicated region
              $region44: #{seq2seq_forward.5} parent=31 // pred_check
                _
              $region45: #{seq2seq_forward.5} parent=31 // pred_check_branch
                %188 = sbr.rel (0) target = $region47
              $region46: #{seq2seq_forward.5} parent=31 // pred_region
                loop: start=0, step=1, limit=1
                $region48: #{seq2seq_forward.5} parent=46 // loop_pre_header
                  _
                $region49: #{seq2seq_forward.5} parent=46 // loop_header
                  %s190 = sphi 0, %s194
                  %p191 = scmp.ge.s32.totalorder %s190, 1
                  %s195 = sphi %s138, %s138
                  %s196 = sphi %s136, %s136
                $region50: #{seq2seq_forward.5} parent=46 // loop_header_branch
                  %193 = sbr.rel (%p191) target = $region54
                $region51: #{seq2seq_forward.5} parent=46 // loop_body
                  %v197 = vld [vmem:[%s195] sm:$0xff]
                  %198 = vst [vmem:[%s196] sm:$0xff] %v197
                  %v199 = vld [vmem:[%s195 + $0x10] sm:$0xff]
                  %200 = vst [vmem:[%s196 + $0x8] sm:$0xff] %v199
                  %v201 = vld [vmem:[%s195 + $0x20] sm:$0xff]
                  %202 = vst [vmem:[%s196 + $0x10] sm:$0xff] %v201
                  %v203 = vld [vmem:[%s195 + $0x30] sm:$0xff]
                  %204 = vst [vmem:[%s196 + $0x18] sm:$0xff] %v203
                  %v205 = vld [vmem:[%s195 + $0x40] sm:$0xff]
                  %206 = vst [vmem:[%s196 + $0x20] sm:$0xff] %v205
                  %v207 = vld [vmem:[%s195 + $0x50] sm:$0xff]
                  %208 = vst [vmem:[%s196 + $0x28] sm:$0xff] %v207
                  %v209 = vld [vmem:[%s195 + $0x60] sm:$0xff]
                  %210 = vst [vmem:[%s196 + $0x30] sm:$0xff] %v209
                  %v211 = vld [vmem:[%s195 + $0x70] sm:$0xff]
                  %212 = vst [vmem:[%s196 + $0x38] sm:$0xff] %v211
                  %v213 = vld [vmem:[%s195 + $0x80] sm:$0xff]
                  %214 = vst [vmem:[%s196 + $0x40] sm:$0xff] %v213
                  %v215 = vld [vmem:[%s195 + $0x90] sm:$0xff]
                  %216 = vst [vmem:[%s196 + $0x48] sm:$0xff] %v215
                  %v217 = vld [vmem:[%s195 + $0xa0] sm:$0xff]
                  %218 = vst [vmem:[%s196 + $0x50] sm:$0xff] %v217
                  %v219 = vld [vmem:[%s195 + $0xb0] sm:$0xff]
                  %220 = vst [vmem:[%s196 + $0x58] sm:$0xff] %v219
                  %v221 = vld [vmem:[%s195 + $0xc0] sm:$0xff]
                  %222 = vst [vmem:[%s196 + $0x60] sm:$0xff] %v221
                  %v223 = vld [vmem:[%s195 + $0xd0] sm:$0xff]
                  %224 = vst [vmem:[%s196 + $0x68] sm:$0xff] %v223
                  %v225 = vld [vmem:[%s195 + $0xe0] sm:$0xff]
                  %226 = vst [vmem:[%s196 + $0x70] sm:$0xff] %v225
                  %v227 = vld [vmem:[%s195 + $0xf0] sm:$0xff]
                  %228 = vst [vmem:[%s196 + $0x78] sm:$0xff] %v227
                $region52: #{seq2seq_forward.5} parent=46 // loop_footer
                  %s194 = sadd.s32 1, %s190
                $region53: #{seq2seq_forward.5} parent=46 // loop_footer_branch
                  %189 = sbr.rel target = $region49
                $region54: #{seq2seq_forward.5} parent=46 // loop_exit
                  _
              $region47: #{seq2seq_forward.5} parent=31 // pred_fallthru
                _
              // Predicated region
              $region55: #{seq2seq_forward.5} parent=31 // pred_check
                _
              $region56: #{seq2seq_forward.5} parent=31 // pred_check_branch
                %230 = sbr.rel target = $region58
              $region57: #{seq2seq_forward.5} parent=31 // pred_region
                _
              $region58: #{seq2seq_forward.5} parent=31 // pred_fallthru
                _
            $region32: #{seq2seq_forward.5} parent=27 // pred_fallthru
              _
            // Predicated region
            $region33: #{seq2seq_forward.5} parent=27 // pred_check
              _
            $region34: #{seq2seq_forward.5} parent=27 // pred_check_branch
              %144 = sbr.rel target = $region36
            $region35: #{seq2seq_forward.5} parent=27 // pred_region
              %s146 = ssub.s32 256, 1
              loop: start=0, step=1, limit=1
              $region37: #{seq2seq_forward.5} parent=35 // loop_pre_header
                _
              $region38: #{seq2seq_forward.5} parent=35 // loop_header
                %s148 = sphi 0, %s152
                %p149 = scmp.ge.s32.totalorder %s148, 1
                %s153 = sphi %s138, %s138
                %s154 = sphi %s136, %s136
              $region39: #{seq2seq_forward.5} parent=35 // loop_header_branch
                %151 = sbr.rel (%p149) target = $region43
              $region40: #{seq2seq_forward.5} parent=35 // loop_body
                %v155 = vld [vmem:[%s153] sm:%s146]
                %156 = vst [vmem:[%s154] sm:%s146] %v155
                %v157 = vld [vmem:[%s153 + $0x10] sm:%s146]
                %158 = vst [vmem:[%s154 + $0x8] sm:%s146] %v157
                %v159 = vld [vmem:[%s153 + $0x20] sm:%s146]
                %160 = vst [vmem:[%s154 + $0x10] sm:%s146] %v159
                %v161 = vld [vmem:[%s153 + $0x30] sm:%s146]
                %162 = vst [vmem:[%s154 + $0x18] sm:%s146] %v161
                %v163 = vld [vmem:[%s153 + $0x40] sm:%s146]
                %164 = vst [vmem:[%s154 + $0x20] sm:%s146] %v163
                %v165 = vld [vmem:[%s153 + $0x50] sm:%s146]
                %166 = vst [vmem:[%s154 + $0x28] sm:%s146] %v165
                %v167 = vld [vmem:[%s153 + $0x60] sm:%s146]
                %168 = vst [vmem:[%s154 + $0x30] sm:%s146] %v167
                %v169 = vld [vmem:[%s153 + $0x70] sm:%s146]
                %170 = vst [vmem:[%s154 + $0x38] sm:%s146] %v169
                %v171 = vld [vmem:[%s153 + $0x80] sm:%s146]
                %172 = vst [vmem:[%s154 + $0x40] sm:%s146] %v171
                %v173 = vld [vmem:[%s153 + $0x90] sm:%s146]
                %174 = vst [vmem:[%s154 + $0x48] sm:%s146] %v173
                %v175 = vld [vmem:[%s153 + $0xa0] sm:%s146]
                %176 = vst [vmem:[%s154 + $0x50] sm:%s146] %v175
                %v177 = vld [vmem:[%s153 + $0xb0] sm:%s146]
                %178 = vst [vmem:[%s154 + $0x58] sm:%s146] %v177
                %v179 = vld [vmem:[%s153 + $0xc0] sm:%s146]
                %180 = vst [vmem:[%s154 + $0x60] sm:%s146] %v179
                %v181 = vld [vmem:[%s153 + $0xd0] sm:%s146]
                %182 = vst [vmem:[%s154 + $0x68] sm:%s146] %v181
                %v183 = vld [vmem:[%s153 + $0xe0] sm:%s146]
                %184 = vst [vmem:[%s154 + $0x70] sm:%s146] %v183
                %v185 = vld [vmem:[%s153 + $0xf0] sm:%s146]
                %186 = vst [vmem:[%s154 + $0x78] sm:%s146] %v185
              $region41: #{seq2seq_forward.5} parent=35 // loop_footer
                %s152 = sadd.s32 1, %s148
              $region42: #{seq2seq_forward.5} parent=35 // loop_footer_branch
                %147 = sbr.rel target = $region38
              $region43: #{seq2seq_forward.5} parent=35 // loop_exit
                _
            $region36: #{seq2seq_forward.5} parent=27 // pred_fallthru
              _
          $region28: #{seq2seq_forward.5} parent=23 // pred_fallthru
            _
          %231 = vnop
        $region24: #{seq2seq_forward.5} parent=19 // pred_fallthru
          _
        // Predicated region
        $region59: #{seq2seq_forward.5} parent=19 // pred_check
          %p232 = pneg %p76
        $region60: #{seq2seq_forward.5} parent=19 // pred_check_branch
          %234 = sbr.rel (%p232) target = $region62
        $region61: #{seq2seq_forward.5} parent=19 // pred_region
          %p235 = scmp.lt.s32.totalorder %s9, 1
          %s236 = scalar_select %p235, %s9, 1
          %s237 = scalar_lea.vmem %s2, %s236
        $region62: #{seq2seq_forward.5} parent=19 // pred_fallthru
          _
      $region20: #{seq2seq_forward.5} parent=5 // pred_fallthru
        _
      %p238 = scmp.le.s32.totalorder 1, %s9
      %p239 = scmp.lt.s32.totalorder %s9, 3
      %p240 = pnand %p238, %p239
      %p241 = pneg %p240
      // Predicated region
      $region63: #{seq2seq_forward.5} parent=5 // pred_check
        _
      $region64: #{seq2seq_forward.5} parent=5 // pred_check_branch
        %243 = sbr.rel (%p240) target = $region66
      $region65: #{seq2seq_forward.5} parent=5 // pred_region
        %s244 = ssub.s32 %s9, 1
        %s245 = sand.u32 %s43, 1
        %s246 = sand.u32 %s43, 1
        %s247 = smul.addr %s246, 128
        %s248 = scalar_lea.vmem [#allocation2], %s247
        // Predicated region
        $region67: #{seq2seq_forward.5} parent=65 // pred_check
          %p249 = pneg %p56
        $region68: #{seq2seq_forward.5} parent=65 // pred_check_branch
          %251 = sbr.rel (%p249) target = $region70
        $region69: #{seq2seq_forward.5} parent=65 // pred_region
          _
        $region70: #{seq2seq_forward.5} parent=65 // pred_fallthru
          _
        %p252 = pneg %p30
        %p253 = pneg %p27
        %s254 = sand.u32 %s43, 1
        %s255 = sand.u32 %s43, 1
        %s256 = smul.addr %s255, 128
        %s257 = scalar_lea.vmem [#allocation2], %s256
        %p258 = pneg %p56
        %p259 = pneg %p53
        %p260 = scmp.lt.s32.totalorder %s14, 1
        %s261 = scalar_select %p260, %s14, 1
        %s262 = scalar_lea.vmem %s2, %s261
        %p263 = pneg %p82
        %p264 = pneg %p79
        %p265 = pneg %p108
        %p266 = pneg %p105
        %s267 = sand.u32 %s95, 1
        %s268 = sand.u32 %s95, 1
        %s269 = smul.addr %s268, 64
        %s270 = scalar_lea.vmem [#allocation3], %s269
        %p271 = scmp.lt.s32.totalorder %s14, 1
        %s272 = scalar_select %p271, %s14, 1
        %s273 = scalar_lea.vmem %s2, %s272
        %v274 = vld [vmem:[%s0] sm:$0xff]
        %v275 = vld [vmem:[%s0 + $0x8] sm:$0xff]
        %v276 = vld [vmem:[%s0 + $0x10] sm:$0xff]
        %v277 = vld [vmem:[%s0 + $0x18] sm:$0xff]
        %v278 = vld [vmem:[%s0 + $0x20] sm:$0xff]
        %v279 = vld [vmem:[%s0 + $0x28] sm:$0xff]
        %v280 = vld [vmem:[%s0 + $0x30] sm:$0xff]
        %v281 = vld [vmem:[%s0 + $0x38] sm:$0xff]
        %v282 = vld [vmem:[%s248] sm:$0xff]
        %v283 = vld [vmem:[%s248 + $0x8] sm:$0xff]
        %v284 = vld [vmem:[%s248 + $0x10] sm:$0xff]
        %v285 = vld [vmem:[%s248 + $0x18] sm:$0xff]
        %v286 = vld [vmem:[%s248 + $0x20] sm:$0xff]
        %v287 = vld [vmem:[%s248 + $0x28] sm:$0xff]
        %v288 = vld [vmem:[%s248 + $0x30] sm:$0xff]
        %v289 = vld [vmem:[%s248 + $0x38] sm:$0xff]
        %v290 = vld [vmem:[%s248 + $0x40] sm:$0xff]
        %v291 = vld [vmem:[%s248 + $0x48] sm:$0xff]
        %v292 = vld [vmem:[%s248 + $0x50] sm:$0xff]
        %v293 = vld [vmem:[%s248 + $0x58] sm:$0xff]
        %v294 = vld [vmem:[%s248 + $0x60] sm:$0xff]
        %v295 = vld [vmem:[%s248 + $0x68] sm:$0xff]
        %v296 = vld [vmem:[%s248 + $0x70] sm:$0xff]
        %v297 = vld [vmem:[%s248 + $0x78] sm:$0xff]
        %v298 = vld [vmem:[%s273] sm:$0x1]
        %v300 = vlaneseq
        %v301 = vshrl.u32 %v300, 7
        %v302 = vsub.s32 0, %v301
        %v303 = vrot.slane %v298, %v302
        %305 = vmatprep.subr.mxu0 0.0
        %306 = vmatpush1.msra.mxu0 %v297
        %307 = vmatprep.subr.mxu0 0.0
        %308 = vmatpush1.msra.mxu0 %v296
        %309 = vmatprep.subr.mxu0 0.0
        %310 = vmatpush1.msra.mxu0 %v295
        %311 = vmatprep.subr.mxu0 0.0
        %312 = vmatpush1.msra.mxu0 %v294
        %313 = vmatprep.subr.mxu0 0.0
        %314 = vmatpush1.msra.mxu0 %v293
        %315 = vmatprep.subr.mxu0 0.0
        %316 = vmatpush1.msra.mxu0 %v292
        %317 = vmatprep.subr.mxu0 0.0
        %318 = vmatpush1.msra.mxu0 %v291
        %319 = vmatprep.subr.mxu0 0.0
        %320 = vmatpush1.msra.mxu0 %v290
        %321 = vmatprep.subr.mxu0 0.0
        %322 = vmatpush1.msra.mxu0 %v289
        %323 = vmatprep.subr.mxu0 0.0
        %324 = vmatpush1.msra.mxu0 %v288
        %325 = vmatprep.subr.mxu0 0.0
        %326 = vmatpush1.msra.mxu0 %v287
        %327 = vmatprep.subr.mxu0 0.0
        %328 = vmatpush1.msra.mxu0 %v286
        %329 = vmatprep.subr.mxu0 0.0
        %330 = vmatpush1.msra.mxu0 %v285
        %331 = vmatprep.subr.mxu0 0.0
        %332 = vmatpush1.msra.mxu0 %v284
        %333 = vmatprep.subr.mxu0 0.0
        %334 = vmatpush1.msra.mxu0 %v283
        %335 = vmatprep.subr.mxu0 0.0
        %336 = vmatpush1.msra.mxu0 %v282
        %337 = vmatprep.subr.mxu0 0.0
        %338 = vmatpush2.msra.mxu0 0.0
        %339 = vmatprep.subr.mxu0 0.0
        %340 = vmatpush2.msra.mxu0 0.0
        %341 = vmatprep.subr.mxu0 0.0
        %342 = vmatpush2.msra.mxu0 0.0
        %343 = vmatprep.subr.mxu0 0.0
        %344 = vmatpush2.msra.mxu0 0.0
        %345 = vmatprep.subr.mxu0 0.0
        %346 = vmatpush2.msra.mxu0 0.0
        %347 = vmatprep.subr.mxu0 0.0
        %348 = vmatpush2.msra.mxu0 0.0
        %349 = vmatprep.subr.mxu0 0.0
        %350 = vmatpush2.msra.mxu0 0.0
        %351 = vmatprep.subr.mxu0 0.0
        %352 = vmatpush2.msra.mxu0 0.0
        %353 = vmatprep.subr.mxu0 0.0
        %354 = vmatpush2.msra.mxu0 0.0
        %355 = vmatprep.subr.mxu0 0.0
        %356 = vmatpush2.msra.mxu0 0.0
        %357 = vmatprep.subr.mxu0 0.0
        %358 = vmatpush2.msra.mxu0 0.0
        %359 = vmatprep.subr.mxu0 0.0
        %360 = vmatpush2.msra.mxu0 0.0
        %361 = vmatprep.subr.mxu0 0.0
        %362 = vmatpush2.msra.mxu0 0.0
        %363 = vmatprep.subr.mxu0 0.0
        %364 = vmatpush2.msra.mxu0 0.0
        %365 = vmatprep.subr.mxu0 0.0
        %366 = vmatpush2.msra.mxu0 0.0
        %367 = vmatprep.subr.mxu0 0.0
        %368 = vmatpush2.msra.mxu0 0.0
        %369 = vmatprep.mubr.f32.mxu0 0.0
        %370 = vmatmul.mubr.f32.gmra.mxu0 %v274
        %v371 = vpop.f32.mrf.mxu0
        %v372 = vadd.f32 %v303, %v371
        %v373 = vpop.f32.mrf.mxu0
        %374 = vmatprep.mubr.f32.mxu0 0.0
        %375 = vmatmul.mubr.f32.gmra.mxu0 %v275
        %v376 = vpop.f32.mrf.mxu0
        %v377 = vadd.f32 %v303, %v376
        %v378 = vpop.f32.mrf.mxu0
        %379 = vmatprep.mubr.f32.mxu0 0.0
        %380 = vmatmul.mubr.f32.gmra.mxu0 %v276
        %v381 = vpop.f32.mrf.mxu0
        %v382 = vadd.f32 %v303, %v381
        %v383 = vpop.f32.mrf.mxu0
        %384 = vmatprep.mubr.f32.mxu0 0.0
        %385 = vmatmul.mubr.f32.gmra.mxu0 %v277
        %v386 = vpop.f32.mrf.mxu0
        %v387 = vadd.f32 %v303, %v386
        %v388 = vpop.f32.mrf.mxu0
        %389 = vmatprep.mubr.f32.mxu0 0.0
        %390 = vmatmul.mubr.f32.gmra.mxu0 %v278
        %v391 = vpop.f32.mrf.mxu0
        %v392 = vadd.f32 %v303, %v391
        %v393 = vpop.f32.mrf.mxu0
        %394 = vmatprep.mubr.f32.mxu0 0.0
        %395 = vmatmul.mubr.f32.gmra.mxu0 %v279
        %v396 = vpop.f32.mrf.mxu0
        %v397 = vadd.f32 %v303, %v396
        %v398 = vpop.f32.mrf.mxu0
        %399 = vmatprep.mubr.f32.mxu0 0.0
        %400 = vmatmul.mubr.f32.gmra.mxu0 %v280
        %v401 = vpop.f32.mrf.mxu0
        %v402 = vadd.f32 %v303, %v401
        %v403 = vpop.f32.mrf.mxu0
        %404 = vmatprep.mubr.f32.mxu0 0.0
        %405 = vmatmul.mubr.f32.gmra.mxu0 %v281
        %v406 = vpop.f32.mrf.mxu0
        %v407 = vadd.f32 %v303, %v406
        %v408 = vpop.f32.mrf.mxu0
        %409 = vdwg.mxu0
        %410 = vst [vmem:[%s270] sm:$0xff] %v372
        %411 = vst [vmem:[%s270 + $0x8] sm:$0xff] %v377
        %412 = vst [vmem:[%s270 + $0x10] sm:$0xff] %v382
        %413 = vst [vmem:[%s270 + $0x18] sm:$0xff] %v387
        %414 = vst [vmem:[%s270 + $0x20] sm:$0xff] %v392
        %415 = vst [vmem:[%s270 + $0x28] sm:$0xff] %v397
        %416 = vst [vmem:[%s270 + $0x30] sm:$0xff] %v402
        %417 = vst [vmem:[%s270 + $0x38] sm:$0xff] %v407
        %s418 = sand.u32 %s95, 1
        %s419 = sand.u32 %s95, 1
        %s420 = smul.addr %s419, 64
        %s421 = scalar_lea.vmem [#allocation3], %s420
        // Predicated region
        $region71: #{seq2seq_forward.5} parent=65 // pred_check
          %p422 = pneg %p105
        $region72: #{seq2seq_forward.5} parent=65 // pred_check_branch
          %424 = sbr.rel (%p422) target = $region74
        $region73: #{seq2seq_forward.5} parent=65 // pred_region
          %s425 = smul.addr %s14, 8
          %s426 = scalar_lea.vmem %s3, %s425
          // Predicated region
          $region75: #{seq2seq_forward.5} parent=73 // pred_check
            _
          $region76: #{seq2seq_forward.5} parent=73 // pred_check_branch
            %428 = sbr.rel (0) target = $region78
          $region77: #{seq2seq_forward.5} parent=73 // pred_region
            // Predicated region
            $region79: #{seq2seq_forward.5} parent=77 // pred_check
              _
            $region80: #{seq2seq_forward.5} parent=77 // pred_check_branch
              %430 = sbr.rel (0) target = $region82
            $region81: #{seq2seq_forward.5} parent=77 // pred_region
              // Predicated region
              $region94: #{seq2seq_forward.5} parent=81 // pred_check
                _
              $region95: #{seq2seq_forward.5} parent=81 // pred_check_branch
                %460 = sbr.rel (0) target = $region97
              $region96: #{seq2seq_forward.5} parent=81 // pred_region
                loop: start=0, step=1, limit=1
                $region98: #{seq2seq_forward.5} parent=96 // loop_pre_header
                  _
                $region99: #{seq2seq_forward.5} parent=96 // loop_header
                  %s462 = sphi 0, %s466
                  %p463 = scmp.ge.s32.totalorder %s462, 1
                  %s467 = sphi %s421, %s421
                  %s468 = sphi %s426, %s426
                $region100: #{seq2seq_forward.5} parent=96 // loop_header_branch
                  %465 = sbr.rel (%p463) target = $region104
                $region101: #{seq2seq_forward.5} parent=96 // loop_body
                  %v469 = vld [vmem:[%s467] sm:$0xff]
                  %470 = vst [vmem:[%s468] sm:$0xff] %v469
                  %v471 = vld [vmem:[%s467 + $0x8] sm:$0xff]
                  %472 = vst [vmem:[%s468 + $0x10] sm:$0xff] %v471
                  %v473 = vld [vmem:[%s467 + $0x10] sm:$0xff]
                  %474 = vst [vmem:[%s468 + $0x20] sm:$0xff] %v473
                  %v475 = vld [vmem:[%s467 + $0x18] sm:$0xff]
                  %476 = vst [vmem:[%s468 + $0x30] sm:$0xff] %v475
                  %v477 = vld [vmem:[%s467 + $0x20] sm:$0xff]
                  %478 = vst [vmem:[%s468 + $0x40] sm:$0xff] %v477
                  %v479 = vld [vmem:[%s467 + $0x28] sm:$0xff]
                  %480 = vst [vmem:[%s468 + $0x50] sm:$0xff] %v479
                  %v481 = vld [vmem:[%s467 + $0x30] sm:$0xff]
                  %482 = vst [vmem:[%s468 + $0x60] sm:$0xff] %v481
                  %v483 = vld [vmem:[%s467 + $0x38] sm:$0xff]
                  %484 = vst [vmem:[%s468 + $0x70] sm:$0xff] %v483
                $region102: #{seq2seq_forward.5} parent=96 // loop_footer
                  %s466 = sadd.s32 1, %s462
                $region103: #{seq2seq_forward.5} parent=96 // loop_footer_branch
                  %461 = sbr.rel target = $region99
                $region104: #{seq2seq_forward.5} parent=96 // loop_exit
                  _
              $region97: #{seq2seq_forward.5} parent=81 // pred_fallthru
                _
              // Predicated region
              $region105: #{seq2seq_forward.5} parent=81 // pred_check
                _
              $region106: #{seq2seq_forward.5} parent=81 // pred_check_branch
                %486 = sbr.rel target = $region108
              $region107: #{seq2seq_forward.5} parent=81 // pred_region
                _
              $region108: #{seq2seq_forward.5} parent=81 // pred_fallthru
                _
            $region82: #{seq2seq_forward.5} parent=77 // pred_fallthru
              _
            // Predicated region
            $region83: #{seq2seq_forward.5} parent=77 // pred_check
              _
            $region84: #{seq2seq_forward.5} parent=77 // pred_check_branch
              %432 = sbr.rel target = $region86
            $region85: #{seq2seq_forward.5} parent=77 // pred_region
              %s434 = ssub.s32 256, 1
              loop: start=0, step=1, limit=1
              $region87: #{seq2seq_forward.5} parent=85 // loop_pre_header
                _
              $region88: #{seq2seq_forward.5} parent=85 // loop_header
                %s436 = sphi 0, %s440
                %p437 = scmp.ge.s32.totalorder %s436, 1
                %s441 = sphi %s421, %s421
                %s442 = sphi %s426, %s426
              $region89: #{seq2seq_forward.5} parent=85 // loop_header_branch
                %439 = sbr.rel (%p437) target = $region93
              $region90: #{seq2seq_forward.5} parent=85 // loop_body
                %v443 = vld [vmem:[%s441] sm:%s434]
                %444 = vst [vmem:[%s442] sm:%s434] %v443
                %v445 = vld [vmem:[%s441 + $0x8] sm:%s434]
                %446 = vst [vmem:[%s442 + $0x10] sm:%s434] %v445
                %v447 = vld [vmem:[%s441 + $0x10] sm:%s434]
                %448 = vst [vmem:[%s442 + $0x20] sm:%s434] %v447
                %v449 = vld [vmem:[%s441 + $0x18] sm:%s434]
                %450 = vst [vmem:[%s442 + $0x30] sm:%s434] %v449
                %v451 = vld [vmem:[%s441 + $0x20] sm:%s434]
                %452 = vst [vmem:[%s442 + $0x40] sm:%s434] %v451
                %v453 = vld [vmem:[%s441 + $0x28] sm:%s434]
                %454 = vst [vmem:[%s442 + $0x50] sm:%s434] %v453
                %v455 = vld [vmem:[%s441 + $0x30] sm:%s434]
                %456 = vst [vmem:[%s442 + $0x60] sm:%s434] %v455
                %v457 = vld [vmem:[%s441 + $0x38] sm:%s434]
                %458 = vst [vmem:[%s442 + $0x70] sm:%s434] %v457
              $region91: #{seq2seq_forward.5} parent=85 // loop_footer
                %s440 = sadd.s32 1, %s436
              $region92: #{seq2seq_forward.5} parent=85 // loop_footer_branch
                %435 = sbr.rel target = $region88
              $region93: #{seq2seq_forward.5} parent=85 // loop_exit
                _
            $region86: #{seq2seq_forward.5} parent=77 // pred_fallthru
              _
          $region78: #{seq2seq_forward.5} parent=73 // pred_fallthru
            _
          %487 = vnop
        $region74: #{seq2seq_forward.5} parent=65 // pred_fallthru
          _
      $region66: #{seq2seq_forward.5} parent=5 // pred_fallthru
        _
      %p488 = scmp.le.s32.totalorder 2, %s9
      // Predicated region
      $region109: #{seq2seq_forward.5} parent=5 // pred_check
        %p489 = pneg %p488
      $region110: #{seq2seq_forward.5} parent=5 // pred_check_branch
        %491 = sbr.rel (%p489) target = $region112
      $region111: #{seq2seq_forward.5} parent=5 // pred_region
        %s492 = ssub.s32 %s9, 2
        // Predicated region
        $region113: #{seq2seq_forward.5} parent=111 // pred_check
          %p493 = pneg %p111
        $region114: #{seq2seq_forward.5} parent=111 // pred_check_branch
          %495 = sbr.rel (%p493) target = $region116
        $region115: #{seq2seq_forward.5} parent=111 // pred_region
          %s496 = sand.u32 %s96, 1
          %s497 = sand.u32 %s96, 1
          %s498 = smul.addr %s497, 64
          %s499 = scalar_lea.vmem [#allocation3], %s498
        $region116: #{seq2seq_forward.5} parent=111 // pred_fallthru
          _
      $region112: #{seq2seq_forward.5} parent=5 // pred_fallthru
        _
    $region6: #{seq2seq_forward.5} parent=1 // loop_footer
      %s13 = sadd.s32 1, %s9
    $region7: #{seq2seq_forward.5} parent=1 // loop_footer_branch
      %8 = sbr.rel target = $region3
    $region8: #{seq2seq_forward.5} parent=1 // loop_exit
      _

// kernel: seq2seq_forward.3
$region0: #{seq2seq_forward.3}
  #allocation0 [shape = 'u32[]', space=smem, size = 0x4, offset = 0x4, fixed_abs, tag = 'smem constant byte address 0x4 - core index']
  #allocation1 [shape = 'u32[144,128]{1,0:T(1,128)}', space=vmem, size = 0x12000, scoped, tag = 'internal scratch']
  #allocation2 [shape = 'f32[8,128]{1,0:T(8,128)}', space=vmem, size = 0x1000, scoped, tag = 'scratch operand']
  %s0 = inlined_call_operand.vmem [shape: f32[8,8,128], index: 0, kind: input, shape index: {}]
  %s1 = inlined_call_operand.vmem [shape: f32[128,384], index: 1, kind: input, shape index: {}]
  %s2 = inlined_call_operand.vmem [shape: f32[128,384], index: 2, kind: input, shape index: {}]
  %s3 = inlined_call_operand.vmem [shape: f32[1,384], index: 3, kind: input, shape index: {}]
  %s4 = inlined_call_operand.vmem [shape: f32[1,384], index: 4, kind: input, shape index: {}]
  %s5 = inlined_call_operand.vmem [shape: f32[8,8,128], index: 5, kind: output, shape index: {}]
  %s6 = sld [smem:[#allocation0]]
  $region57: #{seq2seq_forward.3} parent=0
    _
  %s8 = ssub.s32 1, %s6
  %s9 = scalar_select 0, %s8, %s6
  loop: start=0, step=1, limit=10
  $region2: #{seq2seq_forward.3} parent=0 // loop_pre_header
    _
  $region3: #{seq2seq_forward.3} parent=0 // loop_header
    %s11 = sphi 0, %s15
    %p12 = scmp.ge.s32.totalorder %s11, 10
    %s21 = sphi 0, %s23
    %s24 = sphi 0, %s21
    %s25 = sphi 0, %s24
    %s41 = sphi 0, %s25
    %s45 = sphi 0, %s45
    %s47 = sphi 0, %s45
    %s48 = sphi 0, %s47
    %s62 = sphi 0, %s48
    %s66 = sphi 0, %s66
    %s68 = sphi 0, %s66
    %s69 = sphi 0, %s68
    %s83 = sphi 0, %s69
    %s87 = sphi 0, %s87
    %s89 = sphi 0, %s87
    %s90 = sphi 0, %s89
    %s104 = sphi 0, %s90
    %s108 = sphi 0, %s108
    %s110 = sphi 0, %s108
    %s111 = sphi 0, %s110
    %s125 = sphi 0, %s111
    %s131 = sphi 0, %s133
    %s134 = sphi 0, %s131
    %s135 = sphi 0, %s134
    %s151 = sphi 0, %s135
  $region4: #{seq2seq_forward.3} parent=0 // loop_header_branch
    %14 = sbr.rel (%p12) target = $region8
  $region5: #{seq2seq_forward.3} parent=0 // loop_body
    %s16 = ssub.s32 %s11, 1
    %s17 = ssub.s32 %s11, 2
    %s18 = sadd.s32 %s11, 1
    %s19 = ssub.s32 %s11, %s18
    %p20 = scmp.eq.s32.totalorder %s19, 0
    %s22 = sadd.s32 %s21, 1
    %s23 = scalar_select %p20, %s21, %s22
    %p26 = pneg %p20
    %p27 = scmp.eq.s32.totalorder %s11, 7
    %p28 = por %p26, %p27
    %p29 = scmp.ne.s32.totalorder %s21, %s24
    %p30 = scmp.eq.s32.totalorder %s11, 0
    %p31 = por %p29, %p30
    %p32 = scmp.ne.s32.totalorder %s21, %s24
    %p33 = scmp.eq.s32.totalorder %s16, 7
    %p34 = por %p32, %p33
    %p35 = scmp.ne.s32.totalorder %s24, %s25
    %p36 = scmp.eq.s32.totalorder %s16, 0
    %p37 = por %p35, %p36
    %p38 = scmp.ne.s32.totalorder %s24, %s25
    %p39 = scmp.eq.s32.totalorder %s17, 7
    %p40 = por %p38, %p39
    %p42 = scmp.ne.s32.totalorder %s25, %s41
    %p43 = scmp.eq.s32.totalorder %s17, 0
    %p44 = por %p42, %p43
    %s46 = sadd.s32 %s45, 1
    %p49 = scmp.eq.s32.totalorder %s11, 7
    %p50 = scmp.ne.s32.totalorder %s45, %s47
    %p51 = scmp.eq.s32.totalorder %s11, 0
    %p52 = por %p50, %p51
    %p53 = scmp.ne.s32.totalorder %s45, %s47
    %p54 = scmp.eq.s32.totalorder %s16, 7
    %p55 = por %p53, %p54
    %p56 = scmp.ne.s32.totalorder %s47, %s48
    %p57 = scmp.eq.s32.totalorder %s16, 0
    %p58 = por %p56, %p57
    %p59 = scmp.ne.s32.totalorder %s47, %s48
    %p60 = scmp.eq.s32.totalorder %s17, 7
    %p61 = por %p59, %p60
    %p63 = scmp.ne.s32.totalorder %s48, %s62
    %p64 = scmp.eq.s32.totalorder %s17, 0
    %p65 = por %p63, %p64
    %s67 = sadd.s32 %s66, 1
    %p70 = scmp.eq.s32.totalorder %s11, 7
    %p71 = scmp.ne.s32.totalorder %s66, %s68
    %p72 = scmp.eq.s32.totalorder %s11, 0
    %p73 = por %p71, %p72
    %p74 = scmp.ne.s32.totalorder %s66, %s68
    %p75 = scmp.eq.s32.totalorder %s16, 7
    %p76 = por %p74, %p75
    %p77 = scmp.ne.s32.totalorder %s68, %s69
    %p78 = scmp.eq.s32.totalorder %s16, 0
    %p79 = por %p77, %p78
    %p80 = scmp.ne.s32.totalorder %s68, %s69
    %p81 = scmp.eq.s32.totalorder %s17, 7
    %p82 = por %p80, %p81
    %p84 = scmp.ne.s32.totalorder %s69, %s83
    %p85 = scmp.eq.s32.totalorder %s17, 0
    %p86 = por %p84, %p85
    %s88 = sadd.s32 %s87, 1
    %p91 = scmp.eq.s32.totalorder %s11, 7
    %p92 = scmp.ne.s32.totalorder %s87, %s89
    %p93 = scmp.eq.s32.totalorder %s11, 0
    %p94 = por %p92, %p93
    %p95 = scmp.ne.s32.totalorder %s87, %s89
    %p96 = scmp.eq.s32.totalorder %s16, 7
    %p97 = por %p95, %p96
    %p98 = scmp.ne.s32.totalorder %s89, %s90
    %p99 = scmp.eq.s32.totalorder %s16, 0
    %p100 = por %p98, %p99
    %p101 = scmp.ne.s32.totalorder %s89, %s90
    %p102 = scmp.eq.s32.totalorder %s17, 7
    %p103 = por %p101, %p102
    %p105 = scmp.ne.s32.totalorder %s90, %s104
    %p106 = scmp.eq.s32.totalorder %s17, 0
    %p107 = por %p105, %p106
    %s109 = sadd.s32 %s108, 1
    %p112 = scmp.eq.s32.totalorder %s11, 7
    %p113 = scmp.ne.s32.totalorder %s108, %s110
    %p114 = scmp.eq.s32.totalorder %s11, 0
    %p115 = por %p113, %p114
    %p116 = scmp.ne.s32.totalorder %s108, %s110
    %p117 = scmp.eq.s32.totalorder %s16, 7
    %p118 = por %p116, %p117
    %p119 = scmp.ne.s32.totalorder %s110, %s111
    %p120 = scmp.eq.s32.totalorder %s16, 0
    %p121 = por %p119, %p120
    %p122 = scmp.ne.s32.totalorder %s110, %s111
    %p123 = scmp.eq.s32.totalorder %s17, 7
    %p124 = por %p122, %p123
    %p126 = scmp.ne.s32.totalorder %s111, %s125
    %p127 = scmp.eq.s32.totalorder %s17, 0
    %p128 = por %p126, %p127
    %s129 = ssub.s32 %s11, %s18
    %p130 = scmp.eq.s32.totalorder %s129, 0
    %s132 = sadd.s32 %s131, 1
    %s133 = scalar_select %p130, %s131, %s132
    %p136 = pneg %p130
    %p137 = scmp.eq.s32.totalorder %s11, 7
    %p138 = por %p136, %p137
    %p139 = scmp.ne.s32.totalorder %s131, %s134
    %p140 = scmp.eq.s32.totalorder %s11, 0
    %p141 = por %p139, %p140
    %p142 = scmp.ne.s32.totalorder %s131, %s134
    %p143 = scmp.eq.s32.totalorder %s16, 7
    %p144 = por %p142, %p143
    %p145 = scmp.ne.s32.totalorder %s134, %s135
    %p146 = scmp.eq.s32.totalorder %s16, 0
    %p147 = por %p145, %p146
    %p148 = scmp.ne.s32.totalorder %s134, %s135
    %p149 = scmp.eq.s32.totalorder %s17, 7
    %p150 = por %p148, %p149
    %p152 = scmp.ne.s32.totalorder %s135, %s151
    %p153 = scmp.eq.s32.totalorder %s17, 0
    %p154 = por %p152, %p153
    %p155 = scmp.le.s32.totalorder 1, %s11
    %p156 = scmp.lt.s32.totalorder %s11, 9
    %p157 = pnand %p155, %p156
    %p158 = pneg %p157
    // Predicated region
    $region9: #{seq2seq_forward.3} parent=5 // pred_check
      _
    $region10: #{seq2seq_forward.3} parent=5 // pred_check_branch
      %160 = sbr.rel (%p157) target = $region12
    $region11: #{seq2seq_forward.3} parent=5 // pred_region
      %s161 = ssub.s32 %s11, 1
      // Predicated region
      $region13: #{seq2seq_forward.3} parent=11 // pred_check
        %p162 = pneg %p58
      $region14: #{seq2seq_forward.3} parent=11 // pred_check_branch
        %164 = sbr.rel (%p162) target = $region16
      $region15: #{seq2seq_forward.3} parent=11 // pred_region
        _
      $region16: #{seq2seq_forward.3} parent=11 // pred_fallthru
        _
      // Predicated region
      $region17: #{seq2seq_forward.3} parent=11 // pred_check
        %p165 = pneg %p79
      $region18: #{seq2seq_forward.3} parent=11 // pred_check_branch
        %167 = sbr.rel (%p165) target = $region20
      $region19: #{seq2seq_forward.3} parent=11 // pred_region
        _
      $region20: #{seq2seq_forward.3} parent=11 // pred_fallthru
        _
      // Predicated region
      $region21: #{seq2seq_forward.3} parent=11 // pred_check
        %p168 = pneg %p100
      $region22: #{seq2seq_forward.3} parent=11 // pred_check_branch
        %170 = sbr.rel (%p168) target = $region24
      $region23: #{seq2seq_forward.3} parent=11 // pred_region
        _
      $region24: #{seq2seq_forward.3} parent=11 // pred_fallthru
        _
      // Predicated region
      $region25: #{seq2seq_forward.3} parent=11 // pred_check
        %p171 = pneg %p121
      $region26: #{seq2seq_forward.3} parent=11 // pred_check_branch
        %173 = sbr.rel (%p171) target = $region28
      $region27: #{seq2seq_forward.3} parent=11 // pred_region
        _
      $region28: #{seq2seq_forward.3} parent=11 // pred_fallthru
        _
    $region12: #{seq2seq_forward.3} parent=5 // pred_fallthru
      _
    %p174 = scmp.lt.s32.totalorder %s11, 8
    // Predicated region
    $region29: #{seq2seq_forward.3} parent=5 // pred_check
      %p175 = pneg %p174
    $region30: #{seq2seq_forward.3} parent=5 // pred_check_branch
      %177 = sbr.rel (%p175) target = $region32
    $region31: #{seq2seq_forward.3} parent=5 // pred_region
      // Predicated region
      $region33: #{seq2seq_forward.3} parent=31 // pred_check
        %p178 = pneg %p31
      $region34: #{seq2seq_forward.3} parent=31 // pred_check_branch
        %180 = sbr.rel (%p178) target = $region36
      $region35: #{seq2seq_forward.3} parent=31 // pred_region
        %p181 = scmp.lt.s32.totalorder %s11, 7
        %s182 = scalar_select %p181, %s11, 7
        %s183 = smul.addr %s182, 8
        %s184 = scalar_lea.vmem %s0, %s183
      $region36: #{seq2seq_forward.3} parent=31 // pred_fallthru
        _
    $region32: #{seq2seq_forward.3} parent=5 // pred_fallthru
      _
    %p185 = scmp.le.s32.totalorder 1, %s11
    %p186 = scmp.lt.s32.totalorder %s11, 9
    %p187 = pnand %p185, %p186
    %p188 = pneg %p187
    // Predicated region
    $region37: #{seq2seq_forward.3} parent=5 // pred_check
      _
    $region38: #{seq2seq_forward.3} parent=5 // pred_check_branch
      %190 = sbr.rel (%p187) target = $region40
    $region39: #{seq2seq_forward.3} parent=5 // pred_region
      %s191 = ssub.s32 %s11, 1
      %p192 = scmp.lt.s32.totalorder %s16, 7
      %s193 = scalar_select %p192, %s16, 7
      %s194 = smul.addr %s193, 8
      %s195 = scalar_lea.vmem %s0, %s194
      %p196 = pneg %p37
      %p197 = pneg %p34
      %p198 = pneg %p58
      %p199 = pneg %p55
      %p200 = pneg %p79
      %p201 = pneg %p76
      %p202 = pneg %p100
      %p203 = pneg %p97
      %p204 = pneg %p121
      %p205 = pneg %p118
      %p206 = pneg %p147
      %p207 = pneg %p144
      %p208 = scmp.lt.s32.totalorder %s16, 7
      %s209 = scalar_select %p208, %s16, 7
      %s210 = smul.addr %s209, 8
      %s211 = scalar_lea.vmem %s5, %s210
      %p212 = scmp.lt.s32.totalorder %s16, 7
      %s213 = scalar_select %p212, %s16, 7
      %s214 = smul.addr %s213, 8
      %s215 = scalar_lea.vmem %s0, %s214
      %p216 = scmp.lt.s32.totalorder %s16, 7
      %s217 = scalar_select %p216, %s16, 7
      %s218 = smul.addr %s217, 8
      %s219 = scalar_lea.vmem %s5, %s218
      %p220 = scmp.eq.s32.totalorder %s16, 0
      // Predicated region
      $region41: #{seq2seq_forward.3} parent=39 // pred_check
        %p221 = pneg %p220
      $region42: #{seq2seq_forward.3} parent=39 // pred_check_branch
        %223 = sbr.rel (%p221) target = $region44
      $region43: #{seq2seq_forward.3} parent=39 // pred_region
        %224 = vst [vmem:[#allocation2] sm:$0xff] 0.0
      $region44: #{seq2seq_forward.3} parent=39 // pred_fallthru
        _
      %v225 = vld [vmem:[#allocation2] sm:$0xff]
      %v226 = vld [vmem:[%s215] sm:$0xff]
      %v227 = vld [vmem:[%s1] sm:$0xff]
      %v228 = vld [vmem:[%s1 + $0x8] sm:$0xff]
      %v229 = vld [vmem:[%s1 + $0x10] sm:$0xff]
      %v230 = vld [vmem:[%s1 + $0x18] sm:$0xff]
      %v231 = vld [vmem:[%s1 + $0x20] sm:$0xff]
      %v232 = vld [vmem:[%s1 + $0x28] sm:$0xff]
      %v233 = vld [vmem:[%s1 + $0x30] sm:$0xff]
      %v234 = vld [vmem:[%s1 + $0x38] sm:$0xff]
      %v235 = vld [vmem:[%s1 + $0x40] sm:$0xff]
      %v236 = vld [vmem:[%s1 + $0x48] sm:$0xff]
      %v237 = vld [vmem:[%s1 + $0x50] sm:$0xff]
      %v238 = vld [vmem:[%s1 + $0x58] sm:$0xff]
      %v239 = vld [vmem:[%s1 + $0x60] sm:$0xff]
      %v240 = vld [vmem:[%s1 + $0x68] sm:$0xff]
      %v241 = vld [vmem:[%s1 + $0x70] sm:$0xff]
      %v242 = vld [vmem:[%s1 + $0x78] sm:$0xff]
      %v243 = vld [vmem:[%s1 + $0x80] sm:$0xff]
      %v244 = vld [vmem:[%s1 + $0x88] sm:$0xff]
      %v245 = vld [vmem:[%s1 + $0x90] sm:$0xff]
      %v246 = vld [vmem:[%s1 + $0x98] sm:$0xff]
      %v247 = vld [vmem:[%s1 + $0xa0] sm:$0xff]
      %v248 = vld [vmem:[%s1 + $0xa8] sm:$0xff]
      %v249 = vld [vmem:[%s1 + $0xb0] sm:$0xff]
      %v250 = vld [vmem:[%s1 + $0xb8] sm:$0xff]
      %v251 = vld [vmem:[%s1 + $0xc0] sm:$0xff]
      %v252 = vld [vmem:[%s1 + $0xc8] sm:$0xff]
      %v253 = vld [vmem:[%s1 + $0xd0] sm:$0xff]
      %v254 = vld [vmem:[%s1 + $0xd8] sm:$0xff]
      %v255 = vld [vmem:[%s1 + $0xe0] sm:$0xff]
      %v256 = vld [vmem:[%s1 + $0xe8] sm:$0xff]
      %v257 = vld [vmem:[%s1 + $0xf0] sm:$0xff]
      %v258 = vld [vmem:[%s1 + $0xf8] sm:$0xff]
      %v259 = vld [vmem:[%s1 + $0x100] sm:$0xff]
      %v260 = vld [vmem:[%s1 + $0x108] sm:$0xff]
      %v261 = vld [vmem:[%s1 + $0x110] sm:$0xff]
      %v262 = vld [vmem:[%s1 + $0x118] sm:$0xff]
      %v263 = vld [vmem:[%s1 + $0x120] sm:$0xff]
      %v264 = vld [vmem:[%s1 + $0x128] sm:$0xff]
      %v265 = vld [vmem:[%s1 + $0x130] sm:$0xff]
      %v266 = vld [vmem:[%s1 + $0x138] sm:$0xff]
      %v267 = vld [vmem:[%s1 + $0x140] sm:$0xff]
      %v268 = vld [vmem:[%s1 + $0x148] sm:$0xff]
      %v269 = vld [vmem:[%s1 + $0x150] sm:$0xff]
      %v270 = vld [vmem:[%s1 + $0x158] sm:$0xff]
      %v271 = vld [vmem:[%s1 + $0x160] sm:$0xff]
      %v272 = vld [vmem:[%s1 + $0x168] sm:$0xff]
      %v273 = vld [vmem:[%s1 + $0x170] sm:$0xff]
      %v274 = vld [vmem:[%s1 + $0x178] sm:$0xff]
      %v275 = vld [vmem:[%s3] sm:$0x7]
      %v277 = vlaneseq
      %v278 = vshrl.u32 %v277, 7
      %v279 = vsub.s32 0, %v278
      %v280 = vrot.slane %v275, %v279
      %v281 = vlaneseq
      %v282 = vshrl.u32 %v281, 7
      %v283 = vsub.s32 1, %v282
      %v284 = vrot.slane %v275, %v283
      %v285 = vlaneseq
      %v286 = vshrl.u32 %v285, 7
      %v287 = vsub.s32 2, %v286
      %v288 = vrot.slane %v275, %v287
      %292 = vmatprep.subr.mxu0 %v273
      %293 = vmatpush1.msra.mxu0 %v272
      %294 = vmatprep.subr.mxu0 %v270
      %295 = vmatpush1.msra.mxu0 %v269
      %296 = vmatprep.subr.mxu0 %v267
      %297 = vmatpush1.msra.mxu0 %v266
      %298 = vmatprep.subr.mxu0 %v264
      %299 = vmatpush1.msra.mxu0 %v263
      %300 = vmatprep.subr.mxu0 %v261
      %301 = vmatpush1.msra.mxu0 %v260
      %302 = vmatprep.subr.mxu0 %v258
      %303 = vmatpush1.msra.mxu0 %v257
      %304 = vmatprep.subr.mxu0 %v255
      %305 = vmatpush1.msra.mxu0 %v254
      %306 = vmatprep.subr.mxu0 %v252
      %307 = vmatpush1.msra.mxu0 %v251
      %308 = vmatprep.subr.mxu0 %v249
      %309 = vmatpush1.msra.mxu0 %v248
      %310 = vmatprep.subr.mxu0 %v246
      %311 = vmatpush1.msra.mxu0 %v245
      %312 = vmatprep.subr.mxu0 %v243
      %313 = vmatpush1.msra.mxu0 %v242
      %314 = vmatprep.subr.mxu0 %v240
      %315 = vmatpush1.msra.mxu0 %v239
      %316 = vmatprep.subr.mxu0 %v237
      %317 = vmatpush1.msra.mxu0 %v236
      %318 = vmatprep.subr.mxu0 %v234
      %319 = vmatpush1.msra.mxu0 %v233
      %320 = vmatprep.subr.mxu0 %v231
      %321 = vmatpush1.msra.mxu0 %v230
      %322 = vmatprep.subr.mxu0 %v228
      %323 = vmatpush1.msra.mxu0 %v227
      %324 = vmatprep.subr.mxu0 0.0
      %325 = vmatpush2.msra.mxu0 0.0
      %326 = vmatprep.subr.mxu0 0.0
      %327 = vmatpush2.msra.mxu0 0.0
      %328 = vmatprep.subr.mxu0 0.0
      %329 = vmatpush2.msra.mxu0 0.0
      %330 = vmatprep.subr.mxu0 0.0
      %331 = vmatpush2.msra.mxu0 0.0
      %332 = vmatprep.subr.mxu0 0.0
      %333 = vmatpush2.msra.mxu0 0.0
      %334 = vmatprep.subr.mxu0 0.0
      %335 = vmatpush2.msra.mxu0 0.0
      %336 = vmatprep.subr.mxu0 0.0
      %337 = vmatpush2.msra.mxu0 0.0
      %338 = vmatprep.subr.mxu0 0.0
      %339 = vmatpush2.msra.mxu0 0.0
      %340 = vmatprep.subr.mxu0 0.0
      %341 = vmatpush2.msra.mxu0 0.0
      %342 = vmatprep.subr.mxu0 0.0
      %343 = vmatpush2.msra.mxu0 0.0
      %344 = vmatprep.subr.mxu0 0.0
      %345 = vmatpush2.msra.mxu0 0.0
      %346 = vmatprep.subr.mxu0 0.0
      %347 = vmatpush2.msra.mxu0 0.0
      %348 = vmatprep.subr.mxu0 0.0
      %349 = vmatpush2.msra.mxu0 0.0
      %350 = vmatprep.subr.mxu0 0.0
      %351 = vmatpush2.msra.mxu0 0.0
      %352 = vmatprep.subr.mxu0 0.0
      %353 = vmatpush2.msra.mxu0 0.0
      %354 = vmatprep.subr.mxu0 0.0
      %355 = vmatpush2.msra.mxu0 0.0
      %356 = vmatprep.mubr.f32.mxu0 0.0
      %357 = vmatmul.mubr.f32.gmra.mxu0 %v226
      %v358 = vpop.f32.mrf.mxu0
      %v359 = vadd.f32 %v280, %v358
      %v360 = vpop.f32.mrf.mxu0
      %v361 = vadd.f32 %v284, %v360
      %362 = vdwg.mxu0
      %363 = vmatprep.subr.mxu0 0.0
      %364 = vmatpush1.msra.mxu0 %v274
      %365 = vmatprep.subr.mxu0 0.0
      %366 = vmatpush1.msra.mxu0 %v271
      %367 = vmatprep.subr.mxu0 0.0
      %368 = vmatpush1.msra.mxu0 %v268
      %369 = vmatprep.subr.mxu0 0.0
      %370 = vmatpush1.msra.mxu0 %v265
      %371 = vmatprep.subr.mxu0 0.0
      %372 = vmatpush1.msra.mxu0 %v262
      %373 = vmatprep.subr.mxu0 0.0
      %374 = vmatpush1.msra.mxu0 %v259
      %375 = vmatprep.subr.mxu0 0.0
      %376 = vmatpush1.msra.mxu0 %v256
      %377 = vmatprep.subr.mxu0 0.0
      %378 = vmatpush1.msra.mxu0 %v253
      %379 = vmatprep.subr.mxu0 0.0
      %380 = vmatpush1.msra.mxu0 %v250
      %381 = vmatprep.subr.mxu0 0.0
      %382 = vmatpush1.msra.mxu0 %v247
      %383 = vmatprep.subr.mxu0 0.0
      %384 = vmatpush1.msra.mxu0 %v244
      %385 = vmatprep.subr.mxu0 0.0
      %386 = vmatpush1.msra.mxu0 %v241
      %387 = vmatprep.subr.mxu0 0.0
      %388 = vmatpush1.msra.mxu0 %v238
      %389 = vmatprep.subr.mxu0 0.0
      %390 = vmatpush1.msra.mxu0 %v235
      %391 = vmatprep.subr.mxu0 0.0
      %392 = vmatpush1.msra.mxu0 %v232
      %393 = vmatprep.subr.mxu0 0.0
      %394 = vmatpush1.msra.mxu0 %v229
      %395 = vmatprep.subr.mxu0 0.0
      %396 = vmatpush2.msra.mxu0 0.0
      %397 = vmatprep.subr.mxu0 0.0
      %398 = vmatpush2.msra.mxu0 0.0
      %399 = vmatprep.subr.mxu0 0.0
      %400 = vmatpush2.msra.mxu0 0.0
      %401 = vmatprep.subr.mxu0 0.0
      %402 = vmatpush2.msra.mxu0 0.0
      %403 = vmatprep.subr.mxu0 0.0
      %404 = vmatpush2.msra.mxu0 0.0
      %405 = vmatprep.subr.mxu0 0.0
      %406 = vmatpush2.msra.mxu0 0.0
      %407 = vmatprep.subr.mxu0 0.0
      %408 = vmatpush2.msra.mxu0 0.0
      %409 = vmatprep.subr.mxu0 0.0
      %410 = vmatpush2.msra.mxu0 0.0
      %411 = vmatprep.subr.mxu0 0.0
      %412 = vmatpush2.msra.mxu0 0.0
      %413 = vmatprep.subr.mxu0 0.0
      %414 = vmatpush2.msra.mxu0 0.0
      %415 = vmatprep.subr.mxu0 0.0
      %416 = vmatpush2.msra.mxu0 0.0
      %417 = vmatprep.subr.mxu0 0.0
      %418 = vmatpush2.msra.mxu0 0.0
      %419 = vmatprep.subr.mxu0 0.0
      %420 = vmatpush2.msra.mxu0 0.0
      %421 = vmatprep.subr.mxu0 0.0
      %422 = vmatpush2.msra.mxu0 0.0
      %423 = vmatprep.subr.mxu0 0.0
      %424 = vmatpush2.msra.mxu0 0.0
      %425 = vmatprep.subr.mxu0 0.0
      %426 = vmatpush2.msra.mxu0 0.0
      %427 = vmatprep.mubr.f32.mxu0 0.0
      %428 = vmatmul.mubr.f32.gmra.mxu0 %v226
      %v429 = vpop.f32.mrf.mxu0
      %v430 = vadd.f32 %v288, %v429
      %v431 = vpop.f32.mrf.mxu0
      %432 = vdwg.mxu0
      %v433 = vld [vmem:[%s2] sm:$0xff]
      %v434 = vld [vmem:[%s2 + $0x8] sm:$0xff]
      %v435 = vld [vmem:[%s2 + $0x10] sm:$0xff]
      %v436 = vld [vmem:[%s2 + $0x18] sm:$0xff]
      %v437 = vld [vmem:[%s2 + $0x20] sm:$0xff]
      %v438 = vld [vmem:[%s2 + $0x28] sm:$0xff]
      %v439 = vld [vmem:[%s2 + $0x30] sm:$0xff]
      %v440 = vld [vmem:[%s2 + $0x38] sm:$0xff]
      %v441 = vld [vmem:[%s2 + $0x40] sm:$0xff]
      %v442 = vld [vmem:[%s2 + $0x48] sm:$0xff]
      %v443 = vld [vmem:[%s2 + $0x50] sm:$0xff]
      %v444 = vld [vmem:[%s2 + $0x58] sm:$0xff]
      %v445 = vld [vmem:[%s2 + $0x60] sm:$0xff]
      %v446 = vld [vmem:[%s2 + $0x68] sm:$0xff]
      %v447 = vld [vmem:[%s2 + $0x70] sm:$0xff]
      %v448 = vld [vmem:[%s2 + $0x78] sm:$0xff]
      %v449 = vld [vmem:[%s2 + $0x80] sm:$0xff]
      %v450 = vld [vmem:[%s2 + $0x88] sm:$0xff]
      %v451 = vld [vmem:[%s2 + $0x90] sm:$0xff]
      %v452 = vld [vmem:[%s2 + $0x98] sm:$0xff]
      %v453 = vld [vmem:[%s2 + $0xa0] sm:$0xff]
      %v454 = vld [vmem:[%s2 + $0xa8] sm:$0xff]
      %v455 = vld [vmem:[%s2 + $0xb0] sm:$0xff]
      %v456 = vld [vmem:[%s2 + $0xb8] sm:$0xff]
      %v457 = vld [vmem:[%s2 + $0xc0] sm:$0xff]
      %v458 = vld [vmem:[%s2 + $0xc8] sm:$0xff]
      %v459 = vld [vmem:[%s2 + $0xd0] sm:$0xff]
      %v460 = vld [vmem:[%s2 + $0xd8] sm:$0xff]
      %v461 = vld [vmem:[%s2 + $0xe0] sm:$0xff]
      %v462 = vld [vmem:[%s2 + $0xe8] sm:$0xff]
      %v463 = vld [vmem:[%s2 + $0xf0] sm:$0xff]
      %v464 = vld [vmem:[%s2 + $0xf8] sm:$0xff]
      %v465 = vld [vmem:[%s2 + $0x100] sm:$0xff]
      %v466 = vld [vmem:[%s2 + $0x108] sm:$0xff]
      %v467 = vld [vmem:[%s2 + $0x110] sm:$0xff]
      %v468 = vld [vmem:[%s2 + $0x118] sm:$0xff]
      %v469 = vld [vmem:[%s2 + $0x120] sm:$0xff]
      %v470 = vld [vmem:[%s2 + $0x128] sm:$0xff]
      %v471 = vld [vmem:[%s2 + $0x130] sm:$0xff]
      %v472 = vld [vmem:[%s2 + $0x138] sm:$0xff]
      %v473 = vld [vmem:[%s2 + $0x140] sm:$0xff]
      %v474 = vld [vmem:[%s2 + $0x148] sm:$0xff]
      %v475 = vld [vmem:[%s2 + $0x150] sm:$0xff]
      %v476 = vld [vmem:[%s2 + $0x158] sm:$0xff]
      %v477 = vld [vmem:[%s2 + $0x160] sm:$0xff]
      %v478 = vld [vmem:[%s2 + $0x168] sm:$0xff]
      %v479 = vld [vmem:[%s2 + $0x170] sm:$0xff]
      %v480 = vld [vmem:[%s2 + $0x178] sm:$0xff]
      %v481 = vld [vmem:[%s4] sm:$0x7]
      %v483 = vlaneseq
      %v484 = vshrl.u32 %v483, 7
      %v485 = vsub.s32 0, %v484
      %v486 = vrot.slane %v481, %v485
      %v487 = vlaneseq
      %v488 = vshrl.u32 %v487, 7
      %v489 = vsub.s32 1, %v488
      %v490 = vrot.slane %v481, %v489
      %v491 = vlaneseq
      %v492 = vshrl.u32 %v491, 7
      %v493 = vsub.s32 2, %v492
      %v494 = vrot.slane %v481, %v493
      %498 = vmatprep.subr.mxu0 %v479
      %499 = vmatpush1.msra.mxu0 %v478
      %500 = vmatprep.subr.mxu0 %v476
      %501 = vmatpush1.msra.mxu0 %v475
      %502 = vmatprep.subr.mxu0 %v473
      %503 = vmatpush1.msra.mxu0 %v472
      %504 = vmatprep.subr.mxu0 %v470
      %505 = vmatpush1.msra.mxu0 %v469
      %506 = vmatprep.subr.mxu0 %v467
      %507 = vmatpush1.msra.mxu0 %v466
      %508 = vmatprep.subr.mxu0 %v464
      %509 = vmatpush1.msra.mxu0 %v463
      %510 = vmatprep.subr.mxu0 %v461
      %511 = vmatpush1.msra.mxu0 %v460
      %512 = vmatprep.subr.mxu0 %v458
      %513 = vmatpush1.msra.mxu0 %v457
      %514 = vmatprep.subr.mxu0 %v455
      %515 = vmatpush1.msra.mxu0 %v454
      %516 = vmatprep.subr.mxu0 %v452
      %517 = vmatpush1.msra.mxu0 %v451
      %518 = vmatprep.subr.mxu0 %v449
      %519 = vmatpush1.msra.mxu0 %v448
      %520 = vmatprep.subr.mxu0 %v446
      %521 = vmatpush1.msra.mxu0 %v445
      %522 = vmatprep.subr.mxu0 %v443
      %523 = vmatpush1.msra.mxu0 %v442
      %524 = vmatprep.subr.mxu0 %v440
      %525 = vmatpush1.msra.mxu0 %v439
      %526 = vmatprep.subr.mxu0 %v437
      %527 = vmatpush1.msra.mxu0 %v436
      %528 = vmatprep.subr.mxu0 %v434
      %529 = vmatpush1.msra.mxu0 %v433
      %530 = vmatprep.subr.mxu0 0.0
      %531 = vmatpush2.msra.mxu0 0.0
      %532 = vmatprep.subr.mxu0 0.0
      %533 = vmatpush2.msra.mxu0 0.0
      %534 = vmatprep.subr.mxu0 0.0
      %535 = vmatpush2.msra.mxu0 0.0
      %536 = vmatprep.subr.mxu0 0.0
      %537 = vmatpush2.msra.mxu0 0.0
      %538 = vmatprep.subr.mxu0 0.0
      %539 = vmatpush2.msra.mxu0 0.0
      %540 = vmatprep.subr.mxu0 0.0
      %541 = vmatpush2.msra.mxu0 0.0
      %542 = vmatprep.subr.mxu0 0.0
      %543 = vmatpush2.msra.mxu0 0.0
      %544 = vmatprep.subr.mxu0 0.0
      %545 = vmatpush2.msra.mxu0 0.0
      %546 = vmatprep.subr.mxu0 0.0
      %547 = vmatpush2.msra.mxu0 0.0
      %548 = vmatprep.subr.mxu0 0.0
      %549 = vmatpush2.msra.mxu0 0.0
      %550 = vmatprep.subr.mxu0 0.0
      %551 = vmatpush2.msra.mxu0 0.0
      %552 = vmatprep.subr.mxu0 0.0
      %553 = vmatpush2.msra.mxu0 0.0
      %554 = vmatprep.subr.mxu0 0.0
      %555 = vmatpush2.msra.mxu0 0.0
      %556 = vmatprep.subr.mxu0 0.0
      %557 = vmatpush2.msra.mxu0 0.0
      %558 = vmatprep.subr.mxu0 0.0
      %559 = vmatpush2.msra.mxu0 0.0
      %560 = vmatprep.subr.mxu0 0.0
      %561 = vmatpush2.msra.mxu0 0.0
      %562 = vmatprep.mubr.f32.mxu0 0.0
      %563 = vmatmul.mubr.f32.gmra.mxu0 %v225
      %v564 = vpop.f32.mrf.mxu0
      %v565 = vadd.f32 %v486, %v564
      %v566 = vpop.f32.mrf.mxu0
      %v567 = vadd.f32 %v490, %v566
      %568 = vdwg.mxu0
      %569 = vmatprep.subr.mxu0 0.0
      %570 = vmatpush1.msra.mxu0 %v480
      %571 = vmatprep.subr.mxu0 0.0
      %572 = vmatpush1.msra.mxu0 %v477
      %573 = vmatprep.subr.mxu0 0.0
      %574 = vmatpush1.msra.mxu0 %v474
      %575 = vmatprep.subr.mxu0 0.0
      %576 = vmatpush1.msra.mxu0 %v471
      %577 = vmatprep.subr.mxu0 0.0
      %578 = vmatpush1.msra.mxu0 %v468
      %579 = vmatprep.subr.mxu0 0.0
      %580 = vmatpush1.msra.mxu0 %v465
      %581 = vmatprep.subr.mxu0 0.0
      %582 = vmatpush1.msra.mxu0 %v462
      %583 = vmatprep.subr.mxu0 0.0
      %584 = vmatpush1.msra.mxu0 %v459
      %585 = vmatprep.subr.mxu0 0.0
      %586 = vmatpush1.msra.mxu0 %v456
      %587 = vmatprep.subr.mxu0 0.0
      %588 = vmatpush1.msra.mxu0 %v453
      %589 = vmatprep.subr.mxu0 0.0
      %590 = vmatpush1.msra.mxu0 %v450
      %591 = vmatprep.subr.mxu0 0.0
      %592 = vmatpush1.msra.mxu0 %v447
      %593 = vmatprep.subr.mxu0 0.0
      %594 = vmatpush1.msra.mxu0 %v444
      %595 = vmatprep.subr.mxu0 0.0
      %596 = vmatpush1.msra.mxu0 %v441
      %597 = vmatprep.subr.mxu0 0.0
      %598 = vmatpush1.msra.mxu0 %v438
      %599 = vmatprep.subr.mxu0 0.0
      %600 = vmatpush1.msra.mxu0 %v435
      %601 = vmatprep.subr.mxu0 0.0
      %602 = vmatpush2.msra.mxu0 0.0
      %603 = vmatprep.subr.mxu0 0.0
      %604 = vmatpush2.msra.mxu0 0.0
      %605 = vmatprep.subr.mxu0 0.0
      %606 = vmatpush2.msra.mxu0 0.0
      %607 = vmatprep.subr.mxu0 0.0
      %608 = vmatpush2.msra.mxu0 0.0
      %609 = vmatprep.subr.mxu0 0.0
      %610 = vmatpush2.msra.mxu0 0.0
      %611 = vmatprep.subr.mxu0 0.0
      %612 = vmatpush2.msra.mxu0 0.0
      %613 = vmatprep.subr.mxu0 0.0
      %614 = vmatpush2.msra.mxu0 0.0
      %615 = vmatprep.subr.mxu0 0.0
      %616 = vmatpush2.msra.mxu0 0.0
      %617 = vmatprep.subr.mxu0 0.0
      %618 = vmatpush2.msra.mxu0 0.0
      %619 = vmatprep.subr.mxu0 0.0
      %620 = vmatpush2.msra.mxu0 0.0
      %621 = vmatprep.subr.mxu0 0.0
      %622 = vmatpush2.msra.mxu0 0.0
      %623 = vmatprep.subr.mxu0 0.0
      %624 = vmatpush2.msra.mxu0 0.0
      %625 = vmatprep.subr.mxu0 0.0
      %626 = vmatpush2.msra.mxu0 0.0
      %627 = vmatprep.subr.mxu0 0.0
      %628 = vmatpush2.msra.mxu0 0.0
      %629 = vmatprep.subr.mxu0 0.0
      %630 = vmatpush2.msra.mxu0 0.0
      %631 = vmatprep.subr.mxu0 0.0
      %632 = vmatpush2.msra.mxu0 0.0
      %633 = vmatprep.mubr.f32.mxu0 0.0
      %634 = vmatmul.mubr.f32.gmra.mxu0 %v225
      %v635 = vpop.f32.mrf.mxu0
      %v636 = vadd.f32 %v494, %v635
      %v637 = vpop.f32.mrf.mxu0
      %638 = vdwg.mxu0
      %v639 = vadd.f32 %v359, %v565
      %v640 = vxor.u32 %v639, 2147483648
      %v641 = vmul.f32 %v640, 1.442695
      %v642 = vpow.pop %v641
      %v643 = vadd.f32 %v642, 1.0
      %v644 = vrcp.pop %v643
      %v645 = vmul.f32 1.0, %v644
      %v646 = vadd.f32 %v361, %v567
      %v647 = vxor.u32 %v646, 2147483648
      %v648 = vmul.f32 %v647, 1.442695
      %v649 = vpow.pop %v648
      %v650 = vadd.f32 %v649, 1.0
      %v651 = vrcp.pop %v650
      %v652 = vmul.f32 1.0, %v651
      %v653 = vmul.f32 %v645, %v636
      %v654 = vadd.f32 %v430, %v653
      %v655 = vtanh.pop %v654
      %v656 = vsub.f32 1.0, %v652
      %v657 = vmul.f32 %v656, %v655
      %v658 = vmul.f32 %v652, %v225
      %v659 = vadd.f32 %v657, %v658
      %660 = vst [vmem:[#allocation2] sm:$0xff] %v659
      %661 = vst [vmem:[%s219] sm:$0xff] %v659
      %p662 = scmp.lt.s32.totalorder %s16, 7
      %s663 = scalar_select %p662, %s16, 7
      %s664 = smul.addr %s663, 8
      %s665 = scalar_lea.vmem %s5, %s664
      // Predicated region
      $region45: #{seq2seq_forward.3} parent=39 // pred_check
        %p666 = pneg %p144
      $region46: #{seq2seq_forward.3} parent=39 // pred_check_branch
        %668 = sbr.rel (%p666) target = $region48
      $region47: #{seq2seq_forward.3} parent=39 // pred_region
        _
      $region48: #{seq2seq_forward.3} parent=39 // pred_fallthru
        _
    $region40: #{seq2seq_forward.3} parent=5 // pred_fallthru
      _
    %p669 = scmp.le.s32.totalorder 2, %s11
    // Predicated region
    $region49: #{seq2seq_forward.3} parent=5 // pred_check
      %p670 = pneg %p669
    $region50: #{seq2seq_forward.3} parent=5 // pred_check_branch
      %672 = sbr.rel (%p670) target = $region52
    $region51: #{seq2seq_forward.3} parent=5 // pred_region
      %s673 = ssub.s32 %s11, 2
      // Predicated region
      $region53: #{seq2seq_forward.3} parent=51 // pred_check
        %p674 = pneg %p150
      $region54: #{seq2seq_forward.3} parent=51 // pred_check_branch
        %676 = sbr.rel (%p674) target = $region56
      $region55: #{seq2seq_forward.3} parent=51 // pred_region
        %p677 = scmp.lt.s32.totalorder %s17, 7
        %s678 = scalar_select %p677, %s17, 7
        %s679 = smul.addr %s678, 8
        %s680 = scalar_lea.vmem %s5, %s679
      $region56: #{seq2seq_forward.3} parent=51 // pred_fallthru
        _
    $region52: #{seq2seq_forward.3} parent=5 // pred_fallthru
      _
  $region6: #{seq2seq_forward.3} parent=0 // loop_footer
    %s15 = sadd.s32 1, %s11
  $region7: #{seq2seq_forward.3} parent=0 // loop_footer_branch
    %10 = sbr.rel target = $region3
  $region8: #{seq2seq_forward.3} parent=0 // loop_exit
    _

// kernel: seq2seq_forward.4
$region0: #{seq2seq_forward.4}
  #allocation0 [shape = 'u32[]', space=smem, size = 0x4, offset = 0x4, fixed_abs, tag = 'smem constant byte address 0x4 - core index']
  #allocation1 [shape = 'u32[144,128]{1,0:T(1,128)}', space=vmem, size = 0x12000, scoped, tag = 'internal scratch']
  #allocation2 [shape = 'f32[8,128]{1,0:T(8,128)}', space=vmem, size = 0x1000, scoped, tag = 'scratch operand']
  #allocation3 [shape = 'f32[8,128]{1,0:T(8,128)}', space=vmem, size = 0x1000, scoped, tag = 'scratch operand']
  %s0 = inlined_call_operand.vmem [shape: f32[8,8,128], index: 0, kind: input, shape index: {}]
  %s1 = inlined_call_operand.vmem [shape: f32[8,8,128], index: 1, kind: input, shape index: {}]
  %s2 = inlined_call_operand.vmem [shape: f32[8,8], index: 2, kind: input, shape index: {}]
  %s3 = inlined_call_operand.vmem [shape: f32[1,128], index: 3, kind: input, shape index: {}]
  %s4 = inlined_call_operand.vmem [shape: f32[8,128], index: 4, kind: input, shape index: {}]
  %s5 = inlined_call_operand.vmem [shape: f32[128,384], index: 5, kind: input, shape index: {}]
  %s6 = inlined_call_operand.vmem [shape: f32[128,384], index: 6, kind: input, shape index: {}]
  %s7 = inlined_call_operand.vmem [shape: f32[128,384], index: 7, kind: input, shape index: {}]
  %s8 = inlined_call_operand.vmem [shape: f32[128,384], index: 8, kind: input, shape index: {}]
  %s9 = inlined_call_operand.vmem [shape: f32[1,384], index: 9, kind: input, shape index: {}]
  %s10 = inlined_call_operand.vmem [shape: f32[1,384], index: 10, kind: input, shape index: {}]
  %s11 = inlined_call_operand.vmem [shape: f32[8,8,128], index: 11, kind: output, shape index: {}]
  %s12 = sld [smem:[#allocation0]]
  $region81: #{seq2seq_forward.4} parent=0
    _
  %s14 = ssub.s32 1, %s12
  %s15 = scalar_select 0, %s14, %s12
  loop: start=0, step=1, limit=10
  $region2: #{seq2seq_forward.4} parent=0 // loop_pre_header
    _
  $region3: #{seq2seq_forward.4} parent=0 // loop_header
    %s17 = sphi 0, %s21
    %p18 = scmp.ge.s32.totalorder %s17, 10
    %s27 = sphi 0, %s29
    %s30 = sphi 0, %s27
    %s31 = sphi 0, %s30
    %s47 = sphi 0, %s31
    %s51 = sphi 0, %s51
    %s53 = sphi 0, %s51
    %s54 = sphi 0, %s53
    %s68 = sphi 0, %s54
    %s72 = sphi 0, %s72
    %s74 = sphi 0, %s72
    %s75 = sphi 0, %s74
    %s89 = sphi 0, %s75
    %s93 = sphi 0, %s93
    %s95 = sphi 0, %s93
    %s96 = sphi 0, %s95
    %s110 = sphi 0, %s96
    %s114 = sphi 0, %s114
    %s116 = sphi 0, %s114
    %s117 = sphi 0, %s116
    %s131 = sphi 0, %s117
    %s135 = sphi 0, %s135
    %s137 = sphi 0, %s135
    %s138 = sphi 0, %s137
    %s152 = sphi 0, %s138
    %s156 = sphi 0, %s156
    %s158 = sphi 0, %s156
    %s159 = sphi 0, %s158
    %s173 = sphi 0, %s159
    %s177 = sphi 0, %s177
    %s179 = sphi 0, %s177
    %s180 = sphi 0, %s179
    %s194 = sphi 0, %s180
    %s198 = sphi 0, %s198
    %s200 = sphi 0, %s198
    %s201 = sphi 0, %s200
    %s215 = sphi 0, %s201
    %s219 = sphi 0, %s219
    %s221 = sphi 0, %s219
    %s222 = sphi 0, %s221
    %s236 = sphi 0, %s222
    %s240 = sphi 0, %s240
    %s242 = sphi 0, %s240
    %s243 = sphi 0, %s242
    %s257 = sphi 0, %s243
    %s263 = sphi 0, %s265
    %s266 = sphi 0, %s263
    %s267 = sphi 0, %s266
    %s283 = sphi 0, %s267
  $region4: #{seq2seq_forward.4} parent=0 // loop_header_branch
    %20 = sbr.rel (%p18) target = $region8
  $region5: #{seq2seq_forward.4} parent=0 // loop_body
    %s22 = ssub.s32 %s17, 1
    %s23 = ssub.s32 %s17, 2
    %s24 = sadd.s32 %s17, 1
    %s25 = ssub.s32 %s17, %s24
    %p26 = scmp.eq.s32.totalorder %s25, 0
    %s28 = sadd.s32 %s27, 1
    %s29 = scalar_select %p26, %s27, %s28
    %p32 = pneg %p26
    %p33 = scmp.eq.s32.totalorder %s17, 7
    %p34 = por %p32, %p33
    %p35 = scmp.ne.s32.totalorder %s27, %s30
    %p36 = scmp.eq.s32.totalorder %s17, 0
    %p37 = por %p35, %p36
    %p38 = scmp.ne.s32.totalorder %s27, %s30
    %p39 = scmp.eq.s32.totalorder %s22, 7
    %p40 = por %p38, %p39
    %p41 = scmp.ne.s32.totalorder %s30, %s31
    %p42 = scmp.eq.s32.totalorder %s22, 0
    %p43 = por %p41, %p42
    %p44 = scmp.ne.s32.totalorder %s30, %s31
    %p45 = scmp.eq.s32.totalorder %s23, 7
    %p46 = por %p44, %p45
    %p48 = scmp.ne.s32.totalorder %s31, %s47
    %p49 = scmp.eq.s32.totalorder %s23, 0
    %p50 = por %p48, %p49
    %s52 = sadd.s32 %s51, 1
    %p55 = scmp.eq.s32.totalorder %s17, 7
    %p56 = scmp.ne.s32.totalorder %s51, %s53
    %p57 = scmp.eq.s32.totalorder %s17, 0
    %p58 = por %p56, %p57
    %p59 = scmp.ne.s32.totalorder %s51, %s53
    %p60 = scmp.eq.s32.totalorder %s22, 7
    %p61 = por %p59, %p60
    %p62 = scmp.ne.s32.totalorder %s53, %s54
    %p63 = scmp.eq.s32.totalorder %s22, 0
    %p64 = por %p62, %p63
    %p65 = scmp.ne.s32.totalorder %s53, %s54
    %p66 = scmp.eq.s32.totalorder %s23, 7
    %p67 = por %p65, %p66
    %p69 = scmp.ne.s32.totalorder %s54, %s68
    %p70 = scmp.eq.s32.totalorder %s23, 0
    %p71 = por %p69, %p70
    %s73 = sadd.s32 %s72, 1
    %p76 = scmp.eq.s32.totalorder %s17, 7
    %p77 = scmp.ne.s32.totalorder %s72, %s74
    %p78 = scmp.eq.s32.totalorder %s17, 0
    %p79 = por %p77, %p78
    %p80 = scmp.ne.s32.totalorder %s72, %s74
    %p81 = scmp.eq.s32.totalorder %s22, 7
    %p82 = por %p80, %p81
    %p83 = scmp.ne.s32.totalorder %s74, %s75
    %p84 = scmp.eq.s32.totalorder %s22, 0
    %p85 = por %p83, %p84
    %p86 = scmp.ne.s32.totalorder %s74, %s75
    %p87 = scmp.eq.s32.totalorder %s23, 7
    %p88 = por %p86, %p87
    %p90 = scmp.ne.s32.totalorder %s75, %s89
    %p91 = scmp.eq.s32.totalorder %s23, 0
    %p92 = por %p90, %p91
    %s94 = sadd.s32 %s93, 1
    %p97 = scmp.eq.s32.totalorder %s17, 7
    %p98 = scmp.ne.s32.totalorder %s93, %s95
    %p99 = scmp.eq.s32.totalorder %s17, 0
    %p100 = por %p98, %p99
    %p101 = scmp.ne.s32.totalorder %s93, %s95
    %p102 = scmp.eq.s32.totalorder %s22, 7
    %p103 = por %p101, %p102
    %p104 = scmp.ne.s32.totalorder %s95, %s96
    %p105 = scmp.eq.s32.totalorder %s22, 0
    %p106 = por %p104, %p105
    %p107 = scmp.ne.s32.totalorder %s95, %s96
    %p108 = scmp.eq.s32.totalorder %s23, 7
    %p109 = por %p107, %p108
    %p111 = scmp.ne.s32.totalorder %s96, %s110
    %p112 = scmp.eq.s32.totalorder %s23, 0
    %p113 = por %p111, %p112
    %s115 = sadd.s32 %s114, 1
    %p118 = scmp.eq.s32.totalorder %s17, 7
    %p119 = scmp.ne.s32.totalorder %s114, %s116
    %p120 = scmp.eq.s32.totalorder %s17, 0
    %p121 = por %p119, %p120
    %p122 = scmp.ne.s32.totalorder %s114, %s116
    %p123 = scmp.eq.s32.totalorder %s22, 7
    %p124 = por %p122, %p123
    %p125 = scmp.ne.s32.totalorder %s116, %s117
    %p126 = scmp.eq.s32.totalorder %s22, 0
    %p127 = por %p125, %p126
    %p128 = scmp.ne.s32.totalorder %s116, %s117
    %p129 = scmp.eq.s32.totalorder %s23, 7
    %p130 = por %p128, %p129
    %p132 = scmp.ne.s32.totalorder %s117, %s131
    %p133 = scmp.eq.s32.totalorder %s23, 0
    %p134 = por %p132, %p133
    %s136 = sadd.s32 %s135, 1
    %p139 = scmp.eq.s32.totalorder %s17, 7
    %p140 = scmp.ne.s32.totalorder %s135, %s137
    %p141 = scmp.eq.s32.totalorder %s17, 0
    %p142 = por %p140, %p141
    %p143 = scmp.ne.s32.totalorder %s135, %s137
    %p144 = scmp.eq.s32.totalorder %s22, 7
    %p145 = por %p143, %p144
    %p146 = scmp.ne.s32.totalorder %s137, %s138
    %p147 = scmp.eq.s32.totalorder %s22, 0
    %p148 = por %p146, %p147
    %p149 = scmp.ne.s32.totalorder %s137, %s138
    %p150 = scmp.eq.s32.totalorder %s23, 7
    %p151 = por %p149, %p150
    %p153 = scmp.ne.s32.totalorder %s138, %s152
    %p154 = scmp.eq.s32.totalorder %s23, 0
    %p155 = por %p153, %p154
    %s157 = sadd.s32 %s156, 1
    %p160 = scmp.eq.s32.totalorder %s17, 7
    %p161 = scmp.ne.s32.totalorder %s156, %s158
    %p162 = scmp.eq.s32.totalorder %s17, 0
    %p163 = por %p161, %p162
    %p164 = scmp.ne.s32.totalorder %s156, %s158
    %p165 = scmp.eq.s32.totalorder %s22, 7
    %p166 = por %p164, %p165
    %p167 = scmp.ne.s32.totalorder %s158, %s159
    %p168 = scmp.eq.s32.totalorder %s22, 0
    %p169 = por %p167, %p168
    %p170 = scmp.ne.s32.totalorder %s158, %s159
    %p171 = scmp.eq.s32.totalorder %s23, 7
    %p172 = por %p170, %p171
    %p174 = scmp.ne.s32.totalorder %s159, %s173
    %p175 = scmp.eq.s32.totalorder %s23, 0
    %p176 = por %p174, %p175
    %s178 = sadd.s32 %s177, 1
    %p181 = scmp.eq.s32.totalorder %s17, 7
    %p182 = scmp.ne.s32.totalorder %s177, %s179
    %p183 = scmp.eq.s32.totalorder %s17, 0
    %p184 = por %p182, %p183
    %p185 = scmp.ne.s32.totalorder %s177, %s179
    %p186 = scmp.eq.s32.totalorder %s22, 7
    %p187 = por %p185, %p186
    %p188 = scmp.ne.s32.totalorder %s179, %s180
    %p189 = scmp.eq.s32.totalorder %s22, 0
    %p190 = por %p188, %p189
    %p191 = scmp.ne.s32.totalorder %s179, %s180
    %p192 = scmp.eq.s32.totalorder %s23, 7
    %p193 = por %p191, %p192
    %p195 = scmp.ne.s32.totalorder %s180, %s194
    %p196 = scmp.eq.s32.totalorder %s23, 0
    %p197 = por %p195, %p196
    %s199 = sadd.s32 %s198, 1
    %p202 = scmp.eq.s32.totalorder %s17, 7
    %p203 = scmp.ne.s32.totalorder %s198, %s200
    %p204 = scmp.eq.s32.totalorder %s17, 0
    %p205 = por %p203, %p204
    %p206 = scmp.ne.s32.totalorder %s198, %s200
    %p207 = scmp.eq.s32.totalorder %s22, 7
    %p208 = por %p206, %p207
    %p209 = scmp.ne.s32.totalorder %s200, %s201
    %p210 = scmp.eq.s32.totalorder %s22, 0
    %p211 = por %p209, %p210
    %p212 = scmp.ne.s32.totalorder %s200, %s201
    %p213 = scmp.eq.s32.totalorder %s23, 7
    %p214 = por %p212, %p213
    %p216 = scmp.ne.s32.totalorder %s201, %s215
    %p217 = scmp.eq.s32.totalorder %s23, 0
    %p218 = por %p216, %p217
    %s220 = sadd.s32 %s219, 1
    %p223 = scmp.eq.s32.totalorder %s17, 7
    %p224 = scmp.ne.s32.totalorder %s219, %s221
    %p225 = scmp.eq.s32.totalorder %s17, 0
    %p226 = por %p224, %p225
    %p227 = scmp.ne.s32.totalorder %s219, %s221
    %p228 = scmp.eq.s32.totalorder %s22, 7
    %p229 = por %p227, %p228
    %p230 = scmp.ne.s32.totalorder %s221, %s222
    %p231 = scmp.eq.s32.totalorder %s22, 0
    %p232 = por %p230, %p231
    %p233 = scmp.ne.s32.totalorder %s221, %s222
    %p234 = scmp.eq.s32.totalorder %s23, 7
    %p235 = por %p233, %p234
    %p237 = scmp.ne.s32.totalorder %s222, %s236
    %p238 = scmp.eq.s32.totalorder %s23, 0
    %p239 = por %p237, %p238
    %s241 = sadd.s32 %s240, 1
    %p244 = scmp.eq.s32.totalorder %s17, 7
    %p245 = scmp.ne.s32.totalorder %s240, %s242
    %p246 = scmp.eq.s32.totalorder %s17, 0
    %p247 = por %p245, %p246
    %p248 = scmp.ne.s32.totalorder %s240, %s242
    %p249 = scmp.eq.s32.totalorder %s22, 7
    %p250 = por %p248, %p249
    %p251 = scmp.ne.s32.totalorder %s242, %s243
    %p252 = scmp.eq.s32.totalorder %s22, 0
    %p253 = por %p251, %p252
    %p254 = scmp.ne.s32.totalorder %s242, %s243
    %p255 = scmp.eq.s32.totalorder %s23, 7
    %p256 = por %p254, %p255
    %p258 = scmp.ne.s32.totalorder %s243, %s257
    %p259 = scmp.eq.s32.totalorder %s23, 0
    %p260 = por %p258, %p259
    %s261 = ssub.s32 %s17, %s24
    %p262 = scmp.eq.s32.totalorder %s261, 0
    %s264 = sadd.s32 %s263, 1
    %s265 = scalar_select %p262, %s263, %s264
    %p268 = pneg %p262
    %p269 = scmp.eq.s32.totalorder %s17, 7
    %p270 = por %p268, %p269
    %p271 = scmp.ne.s32.totalorder %s263, %s266
    %p272 = scmp.eq.s32.totalorder %s17, 0
    %p273 = por %p271, %p272
    %p274 = scmp.ne.s32.totalorder %s263, %s266
    %p275 = scmp.eq.s32.totalorder %s22, 7
    %p276 = por %p274, %p275
    %p277 = scmp.ne.s32.totalorder %s266, %s267
    %p278 = scmp.eq.s32.totalorder %s22, 0
    %p279 = por %p277, %p278
    %p280 = scmp.ne.s32.totalorder %s266, %s267
    %p281 = scmp.eq.s32.totalorder %s23, 7
    %p282 = por %p280, %p281
    %p284 = scmp.ne.s32.totalorder %s267, %s283
    %p285 = scmp.eq.s32.totalorder %s23, 0
    %p286 = por %p284, %p285
    %p287 = scmp.le.s32.totalorder 1, %s17
    %p288 = scmp.lt.s32.totalorder %s17, 9
    %p289 = pnand %p287, %p288
    %p290 = pneg %p289
    // Predicated region
    $region9: #{seq2seq_forward.4} parent=5 // pred_check
      _
    $region10: #{seq2seq_forward.4} parent=5 // pred_check_branch
      %292 = sbr.rel (%p289) target = $region12
    $region11: #{seq2seq_forward.4} parent=5 // pred_region
      %s293 = ssub.s32 %s17, 1
      // Predicated region
      $region13: #{seq2seq_forward.4} parent=11 // pred_check
        %p294 = pneg %p64
      $region14: #{seq2seq_forward.4} parent=11 // pred_check_branch
        %296 = sbr.rel (%p294) target = $region16
      $region15: #{seq2seq_forward.4} parent=11 // pred_region
        _
      $region16: #{seq2seq_forward.4} parent=11 // pred_fallthru
        _
      // Predicated region
      $region17: #{seq2seq_forward.4} parent=11 // pred_check
        %p297 = pneg %p85
      $region18: #{seq2seq_forward.4} parent=11 // pred_check_branch
        %299 = sbr.rel (%p297) target = $region20
      $region19: #{seq2seq_forward.4} parent=11 // pred_region
        _
      $region20: #{seq2seq_forward.4} parent=11 // pred_fallthru
        _
      // Predicated region
      $region21: #{seq2seq_forward.4} parent=11 // pred_check
        %p300 = pneg %p106
      $region22: #{seq2seq_forward.4} parent=11 // pred_check_branch
        %302 = sbr.rel (%p300) target = $region24
      $region23: #{seq2seq_forward.4} parent=11 // pred_region
        _
      $region24: #{seq2seq_forward.4} parent=11 // pred_fallthru
        _
      // Predicated region
      $region25: #{seq2seq_forward.4} parent=11 // pred_check
        %p303 = pneg %p127
      $region26: #{seq2seq_forward.4} parent=11 // pred_check_branch
        %305 = sbr.rel (%p303) target = $region28
      $region27: #{seq2seq_forward.4} parent=11 // pred_region
        _
      $region28: #{seq2seq_forward.4} parent=11 // pred_fallthru
        _
      // Predicated region
      $region29: #{seq2seq_forward.4} parent=11 // pred_check
        %p306 = pneg %p148
      $region30: #{seq2seq_forward.4} parent=11 // pred_check_branch
        %308 = sbr.rel (%p306) target = $region32
      $region31: #{seq2seq_forward.4} parent=11 // pred_region
        _
      $region32: #{seq2seq_forward.4} parent=11 // pred_fallthru
        _
      // Predicated region
      $region33: #{seq2seq_forward.4} parent=11 // pred_check
        %p309 = pneg %p169
      $region34: #{seq2seq_forward.4} parent=11 // pred_check_branch
        %311 = sbr.rel (%p309) target = $region36
      $region35: #{seq2seq_forward.4} parent=11 // pred_region
        _
      $region36: #{seq2seq_forward.4} parent=11 // pred_fallthru
        _
      // Predicated region
      $region37: #{seq2seq_forward.4} parent=11 // pred_check
        %p312 = pneg %p190
      $region38: #{seq2seq_forward.4} parent=11 // pred_check_branch
        %314 = sbr.rel (%p312) target = $region40
      $region39: #{seq2seq_forward.4} parent=11 // pred_region
        _
      $region40: #{seq2seq_forward.4} parent=11 // pred_fallthru
        _
      // Predicated region
      $region41: #{seq2seq_forward.4} parent=11 // pred_check
        %p315 = pneg %p211
      $region42: #{seq2seq_forward.4} parent=11 // pred_check_branch
        %317 = sbr.rel (%p315) target = $region44
      $region43: #{seq2seq_forward.4} parent=11 // pred_region
        _
      $region44: #{seq2seq_forward.4} parent=11 // pred_fallthru
        _
      // Predicated region
      $region45: #{seq2seq_forward.4} parent=11 // pred_check
        %p318 = pneg %p232
      $region46: #{seq2seq_forward.4} parent=11 // pred_check_branch
        %320 = sbr.rel (%p318) target = $region48
      $region47: #{seq2seq_forward.4} parent=11 // pred_region
        _
      $region48: #{seq2seq_forward.4} parent=11 // pred_fallthru
        _
      // Predicated region
      $region49: #{seq2seq_forward.4} parent=11 // pred_check
        %p321 = pneg %p253
      $region50: #{seq2seq_forward.4} parent=11 // pred_check_branch
        %323 = sbr.rel (%p321) target = $region52
      $region51: #{seq2seq_forward.4} parent=11 // pred_region
        _
      $region52: #{seq2seq_forward.4} parent=11 // pred_fallthru
        _
    $region12: #{seq2seq_forward.4} parent=5 // pred_fallthru
      _
    %p324 = scmp.lt.s32.totalorder %s17, 8
    // Predicated region
    $region53: #{seq2seq_forward.4} parent=5 // pred_check
      %p325 = pneg %p324
    $region54: #{seq2seq_forward.4} parent=5 // pred_check_branch
      %327 = sbr.rel (%p325) target = $region56
    $region55: #{seq2seq_forward.4} parent=5 // pred_region
      // Predicated region
      $region57: #{seq2seq_forward.4} parent=55 // pred_check
        %p328 = pneg %p37
      $region58: #{seq2seq_forward.4} parent=55 // pred_check_branch
        %330 = sbr.rel (%p328) target = $region60
      $region59: #{seq2seq_forward.4} parent=55 // pred_region
        %p331 = scmp.lt.s32.totalorder %s17, 7
        %s332 = scalar_select %p331, %s17, 7
        %s333 = smul.addr %s332, 8
        %s334 = scalar_lea.vmem %s0, %s333
      $region60: #{seq2seq_forward.4} parent=55 // pred_fallthru
        _
    $region56: #{seq2seq_forward.4} parent=5 // pred_fallthru
      _
    %p335 = scmp.le.s32.totalorder 1, %s17
    %p336 = scmp.lt.s32.totalorder %s17, 9
    %p337 = pnand %p335, %p336
    %p338 = pneg %p337
    // Predicated region
    $region61: #{seq2seq_forward.4} parent=5 // pred_check
      _
    $region62: #{seq2seq_forward.4} parent=5 // pred_check_branch
      %340 = sbr.rel (%p337) target = $region64
    $region63: #{seq2seq_forward.4} parent=5 // pred_region
      %s341 = ssub.s32 %s17, 1
      %p342 = scmp.lt.s32.totalorder %s22, 7
      %s343 = scalar_select %p342, %s22, 7
      %s344 = smul.addr %s343, 8
      %s345 = scalar_lea.vmem %s0, %s344
      %p346 = pneg %p43
      %p347 = pneg %p40
      %p348 = pneg %p64
      %p349 = pneg %p61
      %p350 = pneg %p85
      %p351 = pneg %p82
      %p352 = pneg %p106
      %p353 = pneg %p103
      %p354 = pneg %p127
      %p355 = pneg %p124
      %p356 = pneg %p148
      %p357 = pneg %p145
      %p358 = pneg %p169
      %p359 = pneg %p166
      %p360 = pneg %p190
      %p361 = pneg %p187
      %p362 = pneg %p211
      %p363 = pneg %p208
      %p364 = pneg %p232
      %p365 = pneg %p229
      %p366 = pneg %p253
      %p367 = pneg %p250
      %p368 = pneg %p279
      %p369 = pneg %p276
      %p370 = scmp.lt.s32.totalorder %s22, 7
      %s371 = scalar_select %p370, %s22, 7
      %s372 = smul.addr %s371, 8
      %s373 = scalar_lea.vmem %s11, %s372
      %p374 = scmp.lt.s32.totalorder %s22, 7
      %s375 = scalar_select %p374, %s22, 7
      %s376 = smul.addr %s375, 8
      %s377 = scalar_lea.vmem %s0, %s376
      %p378 = scmp.lt.s32.totalorder %s22, 7
      %s379 = scalar_select %p378, %s22, 7
      %s380 = smul.addr %s379, 8
      %s381 = scalar_lea.vmem %s11, %s380
      %v382 = vld [vmem:[%s1] sm:$0xff]
      %v383 = vld [vmem:[%s1 + $0x8] sm:$0xff]
      %v384 = vld [vmem:[%s1 + $0x10] sm:$0xff]
      %v385 = vld [vmem:[%s1 + $0x18] sm:$0xff]
      %v386 = vld [vmem:[%s1 + $0x20] sm:$0xff]
      %v387 = vld [vmem:[%s1 + $0x28] sm:$0xff]
      %v388 = vld [vmem:[%s1 + $0x30] sm:$0xff]
      %v389 = vld [vmem:[%s1 + $0x38] sm:$0xff]
      %v390 = vld [vmem:[%s2] sm:$0xff]
      %p391 = scmp.eq.s32.totalorder %s22, 0
      // Predicated region
      $region65: #{seq2seq_forward.4} parent=63 // pred_check
        %p392 = pneg %p391
      $region66: #{seq2seq_forward.4} parent=63 // pred_check_branch
        %394 = sbr.rel (%p392) target = $region68
      $region67: #{seq2seq_forward.4} parent=63 // pred_region
        %v395 = vld [vmem:[%s4] sm:$0xff]
        %396 = vst [vmem:[#allocation2] sm:$0xff] %v395
        %v397 = vld [vmem:[%s3] sm:$0x1]
        %v399 = vlaneseq
        %v400 = vshrl.u32 %v399, 7
        %v401 = vsub.s32 0, %v400
        %v402 = vrot.slane %v397, %v401
        %v404 = vmul.f32 %v382, %v402
        %v405 = vmul.f32 %v383, %v402
        %v406 = vmul.f32 %v384, %v402
        %v407 = vmul.f32 %v385, %v402
        %v408 = vmul.f32 %v386, %v402
        %v409 = vmul.f32 %v387, %v402
        %v410 = vmul.f32 %v388, %v402
        %v411 = vmul.f32 %v389, %v402
        %412 = vadd.xlane.f32.xlu0 %v404
        %v413 = vpop.xlane.xlu0 %412
        %414 = vadd.xlane.f32.xlu0 %v405
        %v415 = vpop.xlane.xlu0 %414
        %416 = vadd.xlane.f32.xlu0 %v406
        %v417 = vpop.xlane.xlu0 %416
        %418 = vadd.xlane.f32.xlu0 %v407
        %v419 = vpop.xlane.xlu0 %418
        %420 = vadd.xlane.f32.xlu0 %v408
        %v421 = vpop.xlane.xlu0 %420
        %422 = vadd.xlane.f32.xlu0 %v409
        %v423 = vpop.xlane.xlu0 %422
        %424 = vadd.xlane.f32.xlu0 %v410
        %v425 = vpop.xlane.xlu0 %424
        %426 = vadd.xlane.f32.xlu0 %v411
        %v427 = vpop.xlane.xlu0 %426
        %vm428 = vcmp.gt.f32.partialorder %v390, 0.5
        %v437 = vlaneseq
        %v438 = vand.u32 %v437, 127
        %v439 = vlaneseq
        %v440 = vshrl.u32 %v439, 7
        %v441 = vsub.s32 %v438, %v440
        %v442 = vrot.slane %v413, %v441
        %v443 = vlaneseq
        %v444 = vshrl.u32 %v443, 7
        %v445 = vsub.s32 %v438, %v444
        %v446 = vrot.slane %v415, %v445
        %v447 = vlaneseq
        %v448 = vshrl.u32 %v447, 7
        %v449 = vsub.s32 %v438, %v448
        %v450 = vrot.slane %v417, %v449
        %v451 = vlaneseq
        %v452 = vshrl.u32 %v451, 7
        %v453 = vsub.s32 %v438, %v452
        %v454 = vrot.slane %v419, %v453
        %v455 = vlaneseq
        %v456 = vshrl.u32 %v455, 7
        %v457 = vsub.s32 %v438, %v456
        %v458 = vrot.slane %v421, %v457
        %v459 = vlaneseq
        %v460 = vshrl.u32 %v459, 7
        %v461 = vsub.s32 %v438, %v460
        %v462 = vrot.slane %v423, %v461
        %v463 = vlaneseq
        %v464 = vshrl.u32 %v463, 7
        %v465 = vsub.s32 %v438, %v464
        %v466 = vrot.slane %v425, %v465
        %v467 = vlaneseq
        %v468 = vshrl.u32 %v467, 7
        %v469 = vsub.s32 %v438, %v468
        %v470 = vrot.slane %v427, %v469
        %vm471 = vcmask 1041409
        %v472 = vsel %vm471, %v446, %v442
        %vm473 = vcmask 1042434
        %v474 = vsel %vm473, %v450, %v472
        %vm475 = vcmask 1043459
        %v476 = vsel %vm475, %v454, %v474
        %vm477 = vcmask 1044484
        %v478 = vsel %vm477, %v458, %v476
        %vm479 = vcmask 1045509
        %v480 = vsel %vm479, %v462, %v478
        %vm481 = vcmask 1046534
        %v482 = vsel %vm481, %v466, %v480
        %vm483 = vcmask 1047559
        %v484 = vsel %vm483, %v470, %v482
        %v486 = vsel %vm428, %v484, -1e+09
        %vm487 = vcmask 64512
        %v488 = vsel %vm487, %v486, -inf
        %489 = vmax.xlane.f32.xlu0 %v488
        %v490 = vpop.xlane.xlu0 %489
        %v491 = vsub.f32 %v486, %v490
        %v492 = vmul.f32 %v491, 1.442695
        %v493 = vpow.pop %v492
        %v494 = vsel %vm487, %v493, 0.0
        %495 = vadd.xlane.f32.xlu0 %v494
        %v496 = vpop.xlane.xlu0 %495
        %v497 = vrcp.pop %v496
        %v498 = vmul.f32 %v493, %v497
        %v499 = vlaneseq
        %v500 = vshrl.u32 %v499, 7
        %v501 = vsub.s32 0, %v500
        %v502 = vrot.slane %v498, %v501
        %504 = vbcast.lane.b32.xlu0 %v502, 256
        %v505 = vpop.permute.xlu0 %504
        %v506 = vlaneseq
        %v507 = vshrl.u32 %v506, 7
        %v508 = vsub.s32 1, %v507
        %v509 = vrot.slane %v498, %v508
        %511 = vbcast.lane.b32.xlu0 %v509, 256
        %v512 = vpop.permute.xlu0 %511
        %v513 = vlaneseq
        %v514 = vshrl.u32 %v513, 7
        %v515 = vsub.s32 2, %v514
        %v516 = vrot.slane %v498, %v515
        %518 = vbcast.lane.b32.xlu0 %v516, 256
        %v519 = vpop.permute.xlu0 %518
        %v520 = vlaneseq
        %v521 = vshrl.u32 %v520, 7
        %v522 = vsub.s32 3, %v521
        %v523 = vrot.slane %v498, %v522
        %525 = vbcast.lane.b32.xlu0 %v523, 256
        %v526 = vpop.permute.xlu0 %525
        %v527 = vlaneseq
        %v528 = vshrl.u32 %v527, 7
        %v529 = vsub.s32 4, %v528
        %v530 = vrot.slane %v498, %v529
        %532 = vbcast.lane.b32.xlu0 %v530, 256
        %v533 = vpop.permute.xlu0 %532
        %v534 = vlaneseq
        %v535 = vshrl.u32 %v534, 7
        %v536 = vsub.s32 5, %v535
        %v537 = vrot.slane %v498, %v536
        %539 = vbcast.lane.b32.xlu0 %v537, 256
        %v540 = vpop.permute.xlu0 %539
        %v541 = vlaneseq
        %v542 = vshrl.u32 %v541, 7
        %v543 = vsub.s32 6, %v542
        %v544 = vrot.slane %v498, %v543
        %546 = vbcast.lane.b32.xlu0 %v544, 256
        %v547 = vpop.permute.xlu0 %546
        %v548 = vlaneseq
        %v549 = vshrl.u32 %v548, 7
        %v550 = vsub.s32 7, %v549
        %v551 = vrot.slane %v498, %v550
        %553 = vbcast.lane.b32.xlu0 %v551, 256
        %v554 = vpop.permute.xlu0 %553
        %v555 = vmul.f32 %v505, %v382
        %v556 = vmul.f32 %v512, %v383
        %v557 = vmul.f32 %v519, %v384
        %v558 = vmul.f32 %v526, %v385
        %v559 = vmul.f32 %v533, %v386
        %v560 = vmul.f32 %v540, %v387
        %v561 = vmul.f32 %v547, %v388
        %v562 = vmul.f32 %v554, %v389
        %v563 = vrot.slane %v555, 4
        %v564 = vadd.f32 %v555, %v563
        %v565 = vrot.slane %v564, 2
        %v566 = vadd.f32 %v564, %v565
        %v567 = vrot.slane %v566, 1
        %v568 = vadd.f32 %v566, %v567
        %v569 = vrot.slane %v556, 4
        %v570 = vadd.f32 %v556, %v569
        %v571 = vrot.slane %v570, 2
        %v572 = vadd.f32 %v570, %v571
        %v573 = vrot.slane %v572, 1
        %v574 = vadd.f32 %v572, %v573
        %v575 = vrot.slane %v557, 4
        %v576 = vadd.f32 %v557, %v575
        %v577 = vrot.slane %v576, 2
        %v578 = vadd.f32 %v576, %v577
        %v579 = vrot.slane %v578, 1
        %v580 = vadd.f32 %v578, %v579
        %v581 = vrot.slane %v558, 4
        %v582 = vadd.f32 %v558, %v581
        %v583 = vrot.slane %v582, 2
        %v584 = vadd.f32 %v582, %v583
        %v585 = vrot.slane %v584, 1
        %v586 = vadd.f32 %v584, %v585
        %v587 = vrot.slane %v559, 4
        %v588 = vadd.f32 %v559, %v587
        %v589 = vrot.slane %v588, 2
        %v590 = vadd.f32 %v588, %v589
        %v591 = vrot.slane %v590, 1
        %v592 = vadd.f32 %v590, %v591
        %v593 = vrot.slane %v560, 4
        %v594 = vadd.f32 %v560, %v593
        %v595 = vrot.slane %v594, 2
        %v596 = vadd.f32 %v594, %v595
        %v597 = vrot.slane %v596, 1
        %v598 = vadd.f32 %v596, %v597
        %v599 = vrot.slane %v561, 4
        %v600 = vadd.f32 %v561, %v599
        %v601 = vrot.slane %v600, 2
        %v602 = vadd.f32 %v600, %v601
        %v603 = vrot.slane %v602, 1
        %v604 = vadd.f32 %v602, %v603
        %v605 = vrot.slane %v562, 4
        %v606 = vadd.f32 %v562, %v605
        %v607 = vrot.slane %v606, 2
        %v608 = vadd.f32 %v606, %v607
        %v609 = vrot.slane %v608, 1
        %v610 = vadd.f32 %v608, %v609
        %v619 = vsel %vm471, %v574, %v568
        %v620 = vsel %vm473, %v580, %v619
        %v621 = vsel %vm475, %v586, %v620
        %v622 = vsel %vm477, %v592, %v621
        %v623 = vsel %vm479, %v598, %v622
        %v624 = vsel %vm481, %v604, %v623
        %v625 = vsel %vm483, %v610, %v624
        %627 = vst [vmem:[#allocation3] sm:$0xff] %v625
      $region68: #{seq2seq_forward.4} parent=63 // pred_fallthru
        _
      %v628 = vld [vmem:[#allocation2] sm:$0xff]
      %v629 = vld [vmem:[#allocation3] sm:$0xff]
      %v630 = vld [vmem:[%s377] sm:$0xff]
      %v632 = vcombine.high %v628, %v628
      %v634 = vunpack.c.l.s4 1966171168
      %v635 = vunpack.c.0.s8 %v634
      %v636 = vlaneseq
      %v637 = vshrl.u32 %v636, 7
      %v638 = vsub.s32 %v635, %v637
      %v639 = vrot.slane %v628, %v638
      %v641 = vunpack.c.l.s4 1966171168
      %v642 = vunpack.c.0.s8 %v641
      %v643 = vlaneseq
      %v644 = vshrl.u32 %v643, 7
      %v645 = vsub.s32 %v642, %v644
      %v646 = vrot.slane %v632, %v645
      %v647 = vcombine.high %v639, %v639
      %v648 = vcombine.high %v646, %v646
      %v650 = vunpack.c.l.s4 1966171168
      %v651 = vunpack.c.0.s8 %v650
      %v652 = vlaneseq
      %v653 = vshrl.u32 %v652, 7
      %v654 = vsub.s32 %v651, %v653
      %v655 = vrot.slane %v639, %v654
      %v657 = vunpack.c.l.s4 1966171168
      %v658 = vunpack.c.0.s8 %v657
      %v659 = vlaneseq
      %v660 = vshrl.u32 %v659, 7
      %v661 = vsub.s32 %v658, %v660
      %v662 = vrot.slane %v646, %v661
      %v664 = vunpack.c.l.s4 1966171168
      %v665 = vunpack.c.0.s8 %v664
      %v666 = vlaneseq
      %v667 = vshrl.u32 %v666, 7
      %v668 = vsub.s32 %v665, %v667
      %v669 = vrot.slane %v647, %v668
      %v671 = vunpack.c.l.s4 1966171168
      %v672 = vunpack.c.0.s8 %v671
      %v673 = vlaneseq
      %v674 = vshrl.u32 %v673, 7
      %v675 = vsub.s32 %v672, %v674
      %v676 = vrot.slane %v648, %v675
      %v677 = vcombine.high %v655, %v655
      %v678 = vcombine.high %v662, %v662
      %v679 = vcombine.high %v669, %v669
      %v680 = vcombine.high %v676, %v676
      %v681 = vlaneseq
      %v682 = vshrl.u32 %v681, 7
      %v683 = vsub.s32 0, %v682
      %v684 = vrot.slane %v655, %v683
      %v685 = vlaneseq
      %v686 = vshrl.u32 %v685, 7
      %v687 = vsub.s32 0, %v686
      %v688 = vrot.slane %v669, %v687
      %v689 = vlaneseq
      %v690 = vshrl.u32 %v689, 7
      %v691 = vsub.s32 0, %v690
      %v692 = vrot.slane %v677, %v691
      %v693 = vlaneseq
      %v694 = vshrl.u32 %v693, 7
      %v695 = vsub.s32 0, %v694
      %v696 = vrot.slane %v679, %v695
      %v697 = vlaneseq
      %v698 = vshrl.u32 %v697, 7
      %v699 = vsub.s32 0, %v698
      %v700 = vrot.slane %v662, %v699
      %v701 = vlaneseq
      %v702 = vshrl.u32 %v701, 7
      %v703 = vsub.s32 0, %v702
      %v704 = vrot.slane %v676, %v703
      %v705 = vlaneseq
      %v706 = vshrl.u32 %v705, 7
      %v707 = vsub.s32 0, %v706
      %v708 = vrot.slane %v678, %v707
      %v709 = vlaneseq
      %v710 = vshrl.u32 %v709, 7
      %v711 = vsub.s32 0, %v710
      %v712 = vrot.slane %v680, %v711
      %v721 = vmul.f32 %v382, %v684
      %v722 = vmul.f32 %v383, %v688
      %v723 = vmul.f32 %v384, %v692
      %v724 = vmul.f32 %v385, %v696
      %v725 = vmul.f32 %v386, %v700
      %v726 = vmul.f32 %v387, %v704
      %v727 = vmul.f32 %v388, %v708
      %v728 = vmul.f32 %v389, %v712
      %729 = vadd.xlane.f32.xlu0 %v721
      %v730 = vpop.xlane.xlu0 %729
      %731 = vadd.xlane.f32.xlu0 %v722
      %v732 = vpop.xlane.xlu0 %731
      %733 = vadd.xlane.f32.xlu0 %v723
      %v734 = vpop.xlane.xlu0 %733
      %735 = vadd.xlane.f32.xlu0 %v724
      %v736 = vpop.xlane.xlu0 %735
      %737 = vadd.xlane.f32.xlu0 %v725
      %v738 = vpop.xlane.xlu0 %737
      %739 = vadd.xlane.f32.xlu0 %v726
      %v740 = vpop.xlane.xlu0 %739
      %741 = vadd.xlane.f32.xlu0 %v727
      %v742 = vpop.xlane.xlu0 %741
      %743 = vadd.xlane.f32.xlu0 %v728
      %v744 = vpop.xlane.xlu0 %743
      %vm745 = vcmp.gt.f32.partialorder %v390, 0.5
      %v754 = vlaneseq
      %v755 = vand.u32 %v754, 127
      %v756 = vlaneseq
      %v757 = vshrl.u32 %v756, 7
      %v758 = vsub.s32 %v755, %v757
      %v759 = vrot.slane %v730, %v758
      %v760 = vlaneseq
      %v761 = vshrl.u32 %v760, 7
      %v762 = vsub.s32 %v755, %v761
      %v763 = vrot.slane %v732, %v762
      %v764 = vlaneseq
      %v765 = vshrl.u32 %v764, 7
      %v766 = vsub.s32 %v755, %v765
      %v767 = vrot.slane %v734, %v766
      %v768 = vlaneseq
      %v769 = vshrl.u32 %v768, 7
      %v770 = vsub.s32 %v755, %v769
      %v771 = vrot.slane %v736, %v770
      %v772 = vlaneseq
      %v773 = vshrl.u32 %v772, 7
      %v774 = vsub.s32 %v755, %v773
      %v775 = vrot.slane %v738, %v774
      %v776 = vlaneseq
      %v777 = vshrl.u32 %v776, 7
      %v778 = vsub.s32 %v755, %v777
      %v779 = vrot.slane %v740, %v778
      %v780 = vlaneseq
      %v781 = vshrl.u32 %v780, 7
      %v782 = vsub.s32 %v755, %v781
      %v783 = vrot.slane %v742, %v782
      %v784 = vlaneseq
      %v785 = vshrl.u32 %v784, 7
      %v786 = vsub.s32 %v755, %v785
      %v787 = vrot.slane %v744, %v786
      %vm788 = vcmask 1041409
      %v789 = vsel %vm788, %v763, %v759
      %vm790 = vcmask 1042434
      %v791 = vsel %vm790, %v767, %v789
      %vm792 = vcmask 1043459
      %v793 = vsel %vm792, %v771, %v791
      %vm794 = vcmask 1044484
      %v795 = vsel %vm794, %v775, %v793
      %vm796 = vcmask 1045509
      %v797 = vsel %vm796, %v779, %v795
      %vm798 = vcmask 1046534
      %v799 = vsel %vm798, %v783, %v797
      %vm800 = vcmask 1047559
      %v801 = vsel %vm800, %v787, %v799
      %v803 = vsel %vm745, %v801, -1e+09
      %vm804 = vcmask 64512
      %v805 = vsel %vm804, %v803, -inf
      %806 = vmax.xlane.f32.xlu0 %v805
      %v807 = vpop.xlane.xlu0 %806
      %v808 = vsub.f32 %v803, %v807
      %v809 = vmul.f32 %v808, 1.442695
      %v810 = vpow.pop %v809
      %v811 = vsel %vm804, %v810, 0.0
      %812 = vadd.xlane.f32.xlu0 %v811
      %v813 = vpop.xlane.xlu0 %812
      %v814 = vrcp.pop %v813
      %v815 = vmul.f32 %v810, %v814
      %v816 = vlaneseq
      %v817 = vshrl.u32 %v816, 7
      %v818 = vsub.s32 0, %v817
      %v819 = vrot.slane %v815, %v818
      %821 = vbcast.lane.b32.xlu0 %v819, 256
      %v822 = vpop.permute.xlu0 %821
      %v823 = vlaneseq
      %v824 = vshrl.u32 %v823, 7
      %v825 = vsub.s32 1, %v824
      %v826 = vrot.slane %v815, %v825
      %828 = vbcast.lane.b32.xlu0 %v826, 256
      %v829 = vpop.permute.xlu0 %828
      %v830 = vlaneseq
      %v831 = vshrl.u32 %v830, 7
      %v832 = vsub.s32 2, %v831
      %v833 = vrot.slane %v815, %v832
      %835 = vbcast.lane.b32.xlu0 %v833, 256
      %v836 = vpop.permute.xlu0 %835
      %v837 = vlaneseq
      %v838 = vshrl.u32 %v837, 7
      %v839 = vsub.s32 3, %v838
      %v840 = vrot.slane %v815, %v839
      %842 = vbcast.lane.b32.xlu0 %v840, 256
      %v843 = vpop.permute.xlu0 %842
      %v844 = vlaneseq
      %v845 = vshrl.u32 %v844, 7
      %v846 = vsub.s32 4, %v845
      %v847 = vrot.slane %v815, %v846
      %849 = vbcast.lane.b32.xlu0 %v847, 256
      %v850 = vpop.permute.xlu0 %849
      %v851 = vlaneseq
      %v852 = vshrl.u32 %v851, 7
      %v853 = vsub.s32 5, %v852
      %v854 = vrot.slane %v815, %v853
      %856 = vbcast.lane.b32.xlu0 %v854, 256
      %v857 = vpop.permute.xlu0 %856
      %v858 = vlaneseq
      %v859 = vshrl.u32 %v858, 7
      %v860 = vsub.s32 6, %v859
      %v861 = vrot.slane %v815, %v860
      %863 = vbcast.lane.b32.xlu0 %v861, 256
      %v864 = vpop.permute.xlu0 %863
      %v865 = vlaneseq
      %v866 = vshrl.u32 %v865, 7
      %v867 = vsub.s32 7, %v866
      %v868 = vrot.slane %v815, %v867
      %870 = vbcast.lane.b32.xlu0 %v868, 256
      %v871 = vpop.permute.xlu0 %870
      %v872 = vmul.f32 %v822, %v382
      %v873 = vmul.f32 %v829, %v383
      %v874 = vmul.f32 %v836, %v384
      %v875 = vmul.f32 %v843, %v385
      %v876 = vmul.f32 %v850, %v386
      %v877 = vmul.f32 %v857, %v387
      %v878 = vmul.f32 %v864, %v388
      %v879 = vmul.f32 %v871, %v389
      %v880 = vrot.slane %v872, 4
      %v881 = vadd.f32 %v872, %v880
      %v882 = vrot.slane %v881, 2
      %v883 = vadd.f32 %v881, %v882
      %v884 = vrot.slane %v883, 1
      %v885 = vadd.f32 %v883, %v884
      %v886 = vrot.slane %v873, 4
      %v887 = vadd.f32 %v873, %v886
      %v888 = vrot.slane %v887, 2
      %v889 = vadd.f32 %v887, %v888
      %v890 = vrot.slane %v889, 1
      %v891 = vadd.f32 %v889, %v890
      %v892 = vrot.slane %v874, 4
      %v893 = vadd.f32 %v874, %v892
      %v894 = vrot.slane %v893, 2
      %v895 = vadd.f32 %v893, %v894
      %v896 = vrot.slane %v895, 1
      %v897 = vadd.f32 %v895, %v896
      %v898 = vrot.slane %v875, 4
      %v899 = vadd.f32 %v875, %v898
      %v900 = vrot.slane %v899, 2
      %v901 = vadd.f32 %v899, %v900
      %v902 = vrot.slane %v901, 1
      %v903 = vadd.f32 %v901, %v902
      %v904 = vrot.slane %v876, 4
      %v905 = vadd.f32 %v876, %v904
      %v906 = vrot.slane %v905, 2
      %v907 = vadd.f32 %v905, %v906
      %v908 = vrot.slane %v907, 1
      %v909 = vadd.f32 %v907, %v908
      %v910 = vrot.slane %v877, 4
      %v911 = vadd.f32 %v877, %v910
      %v912 = vrot.slane %v911, 2
      %v913 = vadd.f32 %v911, %v912
      %v914 = vrot.slane %v913, 1
      %v915 = vadd.f32 %v913, %v914
      %v916 = vrot.slane %v878, 4
      %v917 = vadd.f32 %v878, %v916
      %v918 = vrot.slane %v917, 2
      %v919 = vadd.f32 %v917, %v918
      %v920 = vrot.slane %v919, 1
      %v921 = vadd.f32 %v919, %v920
      %v922 = vrot.slane %v879, 4
      %v923 = vadd.f32 %v879, %v922
      %v924 = vrot.slane %v923, 2
      %v925 = vadd.f32 %v923, %v924
      %v926 = vrot.slane %v925, 1
      %v927 = vadd.f32 %v925, %v926
      %v928 = vld [vmem:[%s5] sm:$0xff]
      %v929 = vld [vmem:[%s5 + $0x8] sm:$0xff]
      %v930 = vld [vmem:[%s5 + $0x10] sm:$0xff]
      %v931 = vld [vmem:[%s5 + $0x18] sm:$0xff]
      %v932 = vld [vmem:[%s5 + $0x20] sm:$0xff]
      %v933 = vld [vmem:[%s5 + $0x28] sm:$0xff]
      %v934 = vld [vmem:[%s5 + $0x30] sm:$0xff]
      %v935 = vld [vmem:[%s5 + $0x38] sm:$0xff]
      %v936 = vld [vmem:[%s5 + $0x40] sm:$0xff]
      %v937 = vld [vmem:[%s5 + $0x48] sm:$0xff]
      %v938 = vld [vmem:[%s5 + $0x50] sm:$0xff]
      %v939 = vld [vmem:[%s5 + $0x58] sm:$0xff]
      %v940 = vld [vmem:[%s5 + $0x60] sm:$0xff]
      %v941 = vld [vmem:[%s5 + $0x68] sm:$0xff]
      %v942 = vld [vmem:[%s5 + $0x70] sm:$0xff]
      %v943 = vld [vmem:[%s5 + $0x78] sm:$0xff]
      %v944 = vld [vmem:[%s5 + $0x80] sm:$0xff]
      %v945 = vld [vmem:[%s5 + $0x88] sm:$0xff]
      %v946 = vld [vmem:[%s5 + $0x90] sm:$0xff]
      %v947 = vld [vmem:[%s5 + $0x98] sm:$0xff]
      %v948 = vld [vmem:[%s5 + $0xa0] sm:$0xff]
      %v949 = vld [vmem:[%s5 + $0xa8] sm:$0xff]
      %v950 = vld [vmem:[%s5 + $0xb0] sm:$0xff]
      %v951 = vld [vmem:[%s5 + $0xb8] sm:$0xff]
      %v952 = vld [vmem:[%s5 + $0xc0] sm:$0xff]
      %v953 = vld [vmem:[%s5 + $0xc8] sm:$0xff]
      %v954 = vld [vmem:[%s5 + $0xd0] sm:$0xff]
      %v955 = vld [vmem:[%s5 + $0xd8] sm:$0xff]
      %v956 = vld [vmem:[%s5 + $0xe0] sm:$0xff]
      %v957 = vld [vmem:[%s5 + $0xe8] sm:$0xff]
      %v958 = vld [vmem:[%s5 + $0xf0] sm:$0xff]
      %v959 = vld [vmem:[%s5 + $0xf8] sm:$0xff]
      %v960 = vld [vmem:[%s5 + $0x100] sm:$0xff]
      %v961 = vld [vmem:[%s5 + $0x108] sm:$0xff]
      %v962 = vld [vmem:[%s5 + $0x110] sm:$0xff]
      %v963 = vld [vmem:[%s5 + $0x118] sm:$0xff]
      %v964 = vld [vmem:[%s5 + $0x120] sm:$0xff]
      %v965 = vld [vmem:[%s5 + $0x128] sm:$0xff]
      %v966 = vld [vmem:[%s5 + $0x130] sm:$0xff]
      %v967 = vld [vmem:[%s5 + $0x138] sm:$0xff]
      %v968 = vld [vmem:[%s5 + $0x140] sm:$0xff]
      %v969 = vld [vmem:[%s5 + $0x148] sm:$0xff]
      %v970 = vld [vmem:[%s5 + $0x150] sm:$0xff]
      %v971 = vld [vmem:[%s5 + $0x158] sm:$0xff]
      %v972 = vld [vmem:[%s5 + $0x160] sm:$0xff]
      %v973 = vld [vmem:[%s5 + $0x168] sm:$0xff]
      %v974 = vld [vmem:[%s5 + $0x170] sm:$0xff]
      %v975 = vld [vmem:[%s5 + $0x178] sm:$0xff]
      %v976 = vld [vmem:[%s6] sm:$0xff]
      %v977 = vld [vmem:[%s6 + $0x8] sm:$0xff]
      %v978 = vld [vmem:[%s6 + $0x10] sm:$0xff]
      %v979 = vld [vmem:[%s6 + $0x18] sm:$0xff]
      %v980 = vld [vmem:[%s6 + $0x20] sm:$0xff]
      %v981 = vld [vmem:[%s6 + $0x28] sm:$0xff]
      %v982 = vld [vmem:[%s6 + $0x30] sm:$0xff]
      %v983 = vld [vmem:[%s6 + $0x38] sm:$0xff]
      %v984 = vld [vmem:[%s6 + $0x40] sm:$0xff]
      %v985 = vld [vmem:[%s6 + $0x48] sm:$0xff]
      %v986 = vld [vmem:[%s6 + $0x50] sm:$0xff]
      %v987 = vld [vmem:[%s6 + $0x58] sm:$0xff]
      %v988 = vld [vmem:[%s6 + $0x60] sm:$0xff]
      %v989 = vld [vmem:[%s6 + $0x68] sm:$0xff]
      %v990 = vld [vmem:[%s6 + $0x70] sm:$0xff]
      %v991 = vld [vmem:[%s6 + $0x78] sm:$0xff]
      %v992 = vld [vmem:[%s6 + $0x80] sm:$0xff]
      %v993 = vld [vmem:[%s6 + $0x88] sm:$0xff]
      %v994 = vld [vmem:[%s6 + $0x90] sm:$0xff]
      %v995 = vld [vmem:[%s6 + $0x98] sm:$0xff]
      %v996 = vld [vmem:[%s6 + $0xa0] sm:$0xff]
      %v997 = vld [vmem:[%s6 + $0xa8] sm:$0xff]
      %v998 = vld [vmem:[%s6 + $0xb0] sm:$0xff]
      %v999 = vld [vmem:[%s6 + $0xb8] sm:$0xff]
      %v1000 = vld [vmem:[%s6 + $0xc0] sm:$0xff]
      %v1001 = vld [vmem:[%s6 + $0xc8] sm:$0xff]
      %v1002 = vld [vmem:[%s6 + $0xd0] sm:$0xff]
      %v1003 = vld [vmem:[%s6 + $0xd8] sm:$0xff]
      %v1004 = vld [vmem:[%s6 + $0xe0] sm:$0xff]
      %v1005 = vld [vmem:[%s6 + $0xe8] sm:$0xff]
      %v1006 = vld [vmem:[%s6 + $0xf0] sm:$0xff]
      %v1007 = vld [vmem:[%s6 + $0xf8] sm:$0xff]
      %v1008 = vld [vmem:[%s6 + $0x100] sm:$0xff]
      %v1009 = vld [vmem:[%s6 + $0x108] sm:$0xff]
      %v1010 = vld [vmem:[%s6 + $0x110] sm:$0xff]
      %v1011 = vld [vmem:[%s6 + $0x118] sm:$0xff]
      %v1012 = vld [vmem:[%s6 + $0x120] sm:$0xff]
      %v1013 = vld [vmem:[%s6 + $0x128] sm:$0xff]
      %v1014 = vld [vmem:[%s6 + $0x130] sm:$0xff]
      %v1015 = vld [vmem:[%s6 + $0x138] sm:$0xff]
      %v1016 = vld [vmem:[%s6 + $0x140] sm:$0xff]
      %v1017 = vld [vmem:[%s6 + $0x148] sm:$0xff]
      %v1018 = vld [vmem:[%s6 + $0x150] sm:$0xff]
      %v1019 = vld [vmem:[%s6 + $0x158] sm:$0xff]
      %v1020 = vld [vmem:[%s6 + $0x160] sm:$0xff]
      %v1021 = vld [vmem:[%s6 + $0x168] sm:$0xff]
      %v1022 = vld [vmem:[%s6 + $0x170] sm:$0xff]
      %v1023 = vld [vmem:[%s6 + $0x178] sm:$0xff]
      %v1032 = vsel %vm788, %v891, %v885
      %v1033 = vsel %vm790, %v897, %v1032
      %v1034 = vsel %vm792, %v903, %v1033
      %v1035 = vsel %vm794, %v909, %v1034
      %v1036 = vsel %vm796, %v915, %v1035
      %v1037 = vsel %vm798, %v921, %v1036
      %v1038 = vsel %vm800, %v927, %v1037
      %1040 = vmatprep.subr.mxu0 %v1022
      %1041 = vmatpush1.msra.mxu0 %v1021
      %1042 = vmatprep.subr.mxu0 %v1019
      %1043 = vmatpush1.msra.mxu0 %v1018
      %1044 = vmatprep.subr.mxu0 %v1016
      %1045 = vmatpush1.msra.mxu0 %v1015
      %1046 = vmatprep.subr.mxu0 %v1013
      %1047 = vmatpush1.msra.mxu0 %v1012
      %1048 = vmatprep.subr.mxu0 %v1010
      %1049 = vmatpush1.msra.mxu0 %v1009
      %1050 = vmatprep.subr.mxu0 %v1007
      %1051 = vmatpush1.msra.mxu0 %v1006
      %1052 = vmatprep.subr.mxu0 %v1004
      %1053 = vmatpush1.msra.mxu0 %v1003
      %1054 = vmatprep.subr.mxu0 %v1001
      %1055 = vmatpush1.msra.mxu0 %v1000
      %1056 = vmatprep.subr.mxu0 %v998
      %1057 = vmatpush1.msra.mxu0 %v997
      %1058 = vmatprep.subr.mxu0 %v995
      %1059 = vmatpush1.msra.mxu0 %v994
      %1060 = vmatprep.subr.mxu0 %v992
      %1061 = vmatpush1.msra.mxu0 %v991
      %1062 = vmatprep.subr.mxu0 %v989
      %1063 = vmatpush1.msra.mxu0 %v988
      %1064 = vmatprep.subr.mxu0 %v986
      %1065 = vmatpush1.msra.mxu0 %v985
      %1066 = vmatprep.subr.mxu0 %v983
      %1067 = vmatpush1.msra.mxu0 %v982
      %1068 = vmatprep.subr.mxu0 %v980
      %1069 = vmatpush1.msra.mxu0 %v979
      %1070 = vmatprep.subr.mxu0 %v977
      %1071 = vmatpush1.msra.mxu0 %v976
      %1072 = vmatprep.subr.mxu0 0.0
      %1073 = vmatpush2.msra.mxu0 0.0
      %1074 = vmatprep.subr.mxu0 0.0
      %1075 = vmatpush2.msra.mxu0 0.0
      %1076 = vmatprep.subr.mxu0 0.0
      %1077 = vmatpush2.msra.mxu0 0.0
      %1078 = vmatprep.subr.mxu0 0.0
      %1079 = vmatpush2.msra.mxu0 0.0
      %1080 = vmatprep.subr.mxu0 0.0
      %1081 = vmatpush2.msra.mxu0 0.0
      %1082 = vmatprep.subr.mxu0 0.0
      %1083 = vmatpush2.msra.mxu0 0.0
      %1084 = vmatprep.subr.mxu0 0.0
      %1085 = vmatpush2.msra.mxu0 0.0
      %1086 = vmatprep.subr.mxu0 0.0
      %1087 = vmatpush2.msra.mxu0 0.0
      %1088 = vmatprep.subr.mxu0 0.0
      %1089 = vmatpush2.msra.mxu0 0.0
      %1090 = vmatprep.subr.mxu0 0.0
      %1091 = vmatpush2.msra.mxu0 0.0
      %1092 = vmatprep.subr.mxu0 0.0
      %1093 = vmatpush2.msra.mxu0 0.0
      %1094 = vmatprep.subr.mxu0 0.0
      %1095 = vmatpush2.msra.mxu0 0.0
      %1096 = vmatprep.subr.mxu0 0.0
      %1097 = vmatpush2.msra.mxu0 0.0
      %1098 = vmatprep.subr.mxu0 0.0
      %1099 = vmatpush2.msra.mxu0 0.0
      %1100 = vmatprep.subr.mxu0 0.0
      %1101 = vmatpush2.msra.mxu0 0.0
      %1102 = vmatprep.subr.mxu0 0.0
      %1103 = vmatpush2.msra.mxu0 0.0
      %1104 = vmatprep.mubr.f32.mxu0 0.0
      %1105 = vmatmul.mubr.f32.gmra.mxu0 %v1038
      %v1106 = vpop.f32.mrf.mxu0
      %v1107 = vadd.f32 0.0, %v1106
      %v1108 = vpop.f32.mrf.mxu0
      %v1109 = vadd.f32 0.0, %v1108
      %1110 = vdwg.mxu0
      %1111 = vmatprep.subr.mxu0 0.0
      %1112 = vmatpush1.msra.mxu0 %v1023
      %1113 = vmatprep.subr.mxu0 0.0
      %1114 = vmatpush1.msra.mxu0 %v1020
      %1115 = vmatprep.subr.mxu0 0.0
      %1116 = vmatpush1.msra.mxu0 %v1017
      %1117 = vmatprep.subr.mxu0 0.0
      %1118 = vmatpush1.msra.mxu0 %v1014
      %1119 = vmatprep.subr.mxu0 0.0
      %1120 = vmatpush1.msra.mxu0 %v1011
      %1121 = vmatprep.subr.mxu0 0.0
      %1122 = vmatpush1.msra.mxu0 %v1008
      %1123 = vmatprep.subr.mxu0 0.0
      %1124 = vmatpush1.msra.mxu0 %v1005
      %1125 = vmatprep.subr.mxu0 0.0
      %1126 = vmatpush1.msra.mxu0 %v1002
      %1127 = vmatprep.subr.mxu0 0.0
      %1128 = vmatpush1.msra.mxu0 %v999
      %1129 = vmatprep.subr.mxu0 0.0
      %1130 = vmatpush1.msra.mxu0 %v996
      %1131 = vmatprep.subr.mxu0 0.0
      %1132 = vmatpush1.msra.mxu0 %v993
      %1133 = vmatprep.subr.mxu0 0.0
      %1134 = vmatpush1.msra.mxu0 %v990
      %1135 = vmatprep.subr.mxu0 0.0
      %1136 = vmatpush1.msra.mxu0 %v987
      %1137 = vmatprep.subr.mxu0 0.0
      %1138 = vmatpush1.msra.mxu0 %v984
      %1139 = vmatprep.subr.mxu0 0.0
      %1140 = vmatpush1.msra.mxu0 %v981
      %1141 = vmatprep.subr.mxu0 0.0
      %1142 = vmatpush1.msra.mxu0 %v978
      %1143 = vmatprep.subr.mxu0 0.0
      %1144 = vmatpush2.msra.mxu0 0.0
      %1145 = vmatprep.subr.mxu0 0.0
      %1146 = vmatpush2.msra.mxu0 0.0
      %1147 = vmatprep.subr.mxu0 0.0
      %1148 = vmatpush2.msra.mxu0 0.0
      %1149 = vmatprep.subr.mxu0 0.0
      %1150 = vmatpush2.msra.mxu0 0.0
      %1151 = vmatprep.subr.mxu0 0.0
      %1152 = vmatpush2.msra.mxu0 0.0
      %1153 = vmatprep.subr.mxu0 0.0
      %1154 = vmatpush2.msra.mxu0 0.0
      %1155 = vmatprep.subr.mxu0 0.0
      %1156 = vmatpush2.msra.mxu0 0.0
      %1157 = vmatprep.subr.mxu0 0.0
      %1158 = vmatpush2.msra.mxu0 0.0
      %1159 = vmatprep.subr.mxu0 0.0
      %1160 = vmatpush2.msra.mxu0 0.0
      %1161 = vmatprep.subr.mxu0 0.0
      %1162 = vmatpush2.msra.mxu0 0.0
      %1163 = vmatprep.subr.mxu0 0.0
      %1164 = vmatpush2.msra.mxu0 0.0
      %1165 = vmatprep.subr.mxu0 0.0
      %1166 = vmatpush2.msra.mxu0 0.0
      %1167 = vmatprep.subr.mxu0 0.0
      %1168 = vmatpush2.msra.mxu0 0.0
      %1169 = vmatprep.subr.mxu0 0.0
      %1170 = vmatpush2.msra.mxu0 0.0
      %1171 = vmatprep.subr.mxu0 0.0
      %1172 = vmatpush2.msra.mxu0 0.0
      %1173 = vmatprep.subr.mxu0 0.0
      %1174 = vmatpush2.msra.mxu0 0.0
      %1175 = vmatprep.mubr.f32.mxu0 0.0
      %1176 = vmatmul.mubr.f32.gmra.mxu0 %v1038
      %v1177 = vpop.f32.mrf.mxu0
      %v1178 = vadd.f32 0.0, %v1177
      %v1179 = vpop.f32.mrf.mxu0
      %1180 = vdwg.mxu0
      %1181 = vmatprep.subr.mxu0 %v974
      %1182 = vmatpush1.msra.mxu0 %v973
      %1183 = vmatprep.subr.mxu0 %v971
      %1184 = vmatpush1.msra.mxu0 %v970
      %1185 = vmatprep.subr.mxu0 %v968
      %1186 = vmatpush1.msra.mxu0 %v967
      %1187 = vmatprep.subr.mxu0 %v965
      %1188 = vmatpush1.msra.mxu0 %v964
      %1189 = vmatprep.subr.mxu0 %v962
      %1190 = vmatpush1.msra.mxu0 %v961
      %1191 = vmatprep.subr.mxu0 %v959
      %1192 = vmatpush1.msra.mxu0 %v958
      %1193 = vmatprep.subr.mxu0 %v956
      %1194 = vmatpush1.msra.mxu0 %v955
      %1195 = vmatprep.subr.mxu0 %v953
      %1196 = vmatpush1.msra.mxu0 %v952
      %1197 = vmatprep.subr.mxu0 %v950
      %1198 = vmatpush1.msra.mxu0 %v949
      %1199 = vmatprep.subr.mxu0 %v947
      %1200 = vmatpush1.msra.mxu0 %v946
      %1201 = vmatprep.subr.mxu0 %v944
      %1202 = vmatpush1.msra.mxu0 %v943
      %1203 = vmatprep.subr.mxu0 %v941
      %1204 = vmatpush1.msra.mxu0 %v940
      %1205 = vmatprep.subr.mxu0 %v938
      %1206 = vmatpush1.msra.mxu0 %v937
      %1207 = vmatprep.subr.mxu0 %v935
      %1208 = vmatpush1.msra.mxu0 %v934
      %1209 = vmatprep.subr.mxu0 %v932
      %1210 = vmatpush1.msra.mxu0 %v931
      %1211 = vmatprep.subr.mxu0 %v929
      %1212 = vmatpush1.msra.mxu0 %v928
      %1213 = vmatprep.subr.mxu0 0.0
      %1214 = vmatpush2.msra.mxu0 0.0
      %1215 = vmatprep.subr.mxu0 0.0
      %1216 = vmatpush2.msra.mxu0 0.0
      %1217 = vmatprep.subr.mxu0 0.0
      %1218 = vmatpush2.msra.mxu0 0.0
      %1219 = vmatprep.subr.mxu0 0.0
      %1220 = vmatpush2.msra.mxu0 0.0
      %1221 = vmatprep.subr.mxu0 0.0
      %1222 = vmatpush2.msra.mxu0 0.0
      %1223 = vmatprep.subr.mxu0 0.0
      %1224 = vmatpush2.msra.mxu0 0.0
      %1225 = vmatprep.subr.mxu0 0.0
      %1226 = vmatpush2.msra.mxu0 0.0
      %1227 = vmatprep.subr.mxu0 0.0
      %1228 = vmatpush2.msra.mxu0 0.0
      %1229 = vmatprep.subr.mxu0 0.0
      %1230 = vmatpush2.msra.mxu0 0.0
      %1231 = vmatprep.subr.mxu0 0.0
      %1232 = vmatpush2.msra.mxu0 0.0
      %1233 = vmatprep.subr.mxu0 0.0
      %1234 = vmatpush2.msra.mxu0 0.0
      %1235 = vmatprep.subr.mxu0 0.0
      %1236 = vmatpush2.msra.mxu0 0.0
      %1237 = vmatprep.subr.mxu0 0.0
      %1238 = vmatpush2.msra.mxu0 0.0
      %1239 = vmatprep.subr.mxu0 0.0
      %1240 = vmatpush2.msra.mxu0 0.0
      %1241 = vmatprep.subr.mxu0 0.0
      %1242 = vmatpush2.msra.mxu0 0.0
      %1243 = vmatprep.subr.mxu0 0.0
      %1244 = vmatpush2.msra.mxu0 0.0
      %1245 = vmatprep.mubr.f32.mxu0 0.0
      %1246 = vmatmul.mubr.f32.gmra.mxu0 %v630
      %v1247 = vpop.f32.mrf.mxu0
      %v1248 = vadd.f32 %v1107, %v1247
      %v1249 = vpop.f32.mrf.mxu0
      %v1250 = vadd.f32 %v1109, %v1249
      %1251 = vdwg.mxu0
      %1252 = vmatprep.subr.mxu0 0.0
      %1253 = vmatpush1.msra.mxu0 %v975
      %1254 = vmatprep.subr.mxu0 0.0
      %1255 = vmatpush1.msra.mxu0 %v972
      %1256 = vmatprep.subr.mxu0 0.0
      %1257 = vmatpush1.msra.mxu0 %v969
      %1258 = vmatprep.subr.mxu0 0.0
      %1259 = vmatpush1.msra.mxu0 %v966
      %1260 = vmatprep.subr.mxu0 0.0
      %1261 = vmatpush1.msra.mxu0 %v963
      %1262 = vmatprep.subr.mxu0 0.0
      %1263 = vmatpush1.msra.mxu0 %v960
      %1264 = vmatprep.subr.mxu0 0.0
      %1265 = vmatpush1.msra.mxu0 %v957
      %1266 = vmatprep.subr.mxu0 0.0
      %1267 = vmatpush1.msra.mxu0 %v954
      %1268 = vmatprep.subr.mxu0 0.0
      %1269 = vmatpush1.msra.mxu0 %v951
      %1270 = vmatprep.subr.mxu0 0.0
      %1271 = vmatpush1.msra.mxu0 %v948
      %1272 = vmatprep.subr.mxu0 0.0
      %1273 = vmatpush1.msra.mxu0 %v945
      %1274 = vmatprep.subr.mxu0 0.0
      %1275 = vmatpush1.msra.mxu0 %v942
      %1276 = vmatprep.subr.mxu0 0.0
      %1277 = vmatpush1.msra.mxu0 %v939
      %1278 = vmatprep.subr.mxu0 0.0
      %1279 = vmatpush1.msra.mxu0 %v936
      %1280 = vmatprep.subr.mxu0 0.0
      %1281 = vmatpush1.msra.mxu0 %v933
      %1282 = vmatprep.subr.mxu0 0.0
      %1283 = vmatpush1.msra.mxu0 %v930
      %1284 = vmatprep.subr.mxu0 0.0
      %1285 = vmatpush2.msra.mxu0 0.0
      %1286 = vmatprep.subr.mxu0 0.0
      %1287 = vmatpush2.msra.mxu0 0.0
      %1288 = vmatprep.subr.mxu0 0.0
      %1289 = vmatpush2.msra.mxu0 0.0
      %1290 = vmatprep.subr.mxu0 0.0
      %1291 = vmatpush2.msra.mxu0 0.0
      %1292 = vmatprep.subr.mxu0 0.0
      %1293 = vmatpush2.msra.mxu0 0.0
      %1294 = vmatprep.subr.mxu0 0.0
      %1295 = vmatpush2.msra.mxu0 0.0
      %1296 = vmatprep.subr.mxu0 0.0
      %1297 = vmatpush2.msra.mxu0 0.0
      %1298 = vmatprep.subr.mxu0 0.0
      %1299 = vmatpush2.msra.mxu0 0.0
      %1300 = vmatprep.subr.mxu0 0.0
      %1301 = vmatpush2.msra.mxu0 0.0
      %1302 = vmatprep.subr.mxu0 0.0
      %1303 = vmatpush2.msra.mxu0 0.0
      %1304 = vmatprep.subr.mxu0 0.0
      %1305 = vmatpush2.msra.mxu0 0.0
      %1306 = vmatprep.subr.mxu0 0.0
      %1307 = vmatpush2.msra.mxu0 0.0
      %1308 = vmatprep.subr.mxu0 0.0
      %1309 = vmatpush2.msra.mxu0 0.0
      %1310 = vmatprep.subr.mxu0 0.0
      %1311 = vmatpush2.msra.mxu0 0.0
      %1312 = vmatprep.subr.mxu0 0.0
      %1313 = vmatpush2.msra.mxu0 0.0
      %1314 = vmatprep.subr.mxu0 0.0
      %1315 = vmatpush2.msra.mxu0 0.0
      %1316 = vmatprep.mubr.f32.mxu0 0.0
      %1317 = vmatmul.mubr.f32.gmra.mxu0 %v630
      %v1318 = vpop.f32.mrf.mxu0
      %v1319 = vadd.f32 %v1178, %v1318
      %v1320 = vpop.f32.mrf.mxu0
      %1321 = vdwg.mxu0
      %v1322 = vld [vmem:[%s7] sm:$0xff]
      %v1323 = vld [vmem:[%s7 + $0x8] sm:$0xff]
      %v1324 = vld [vmem:[%s7 + $0x10] sm:$0xff]
      %v1325 = vld [vmem:[%s7 + $0x18] sm:$0xff]
      %v1326 = vld [vmem:[%s7 + $0x20] sm:$0xff]
      %v1327 = vld [vmem:[%s7 + $0x28] sm:$0xff]
      %v1328 = vld [vmem:[%s7 + $0x30] sm:$0xff]
      %v1329 = vld [vmem:[%s7 + $0x38] sm:$0xff]
      %v1330 = vld [vmem:[%s7 + $0x40] sm:$0xff]
      %v1331 = vld [vmem:[%s7 + $0x48] sm:$0xff]
      %v1332 = vld [vmem:[%s7 + $0x50] sm:$0xff]
      %v1333 = vld [vmem:[%s7 + $0x58] sm:$0xff]
      %v1334 = vld [vmem:[%s7 + $0x60] sm:$0xff]
      %v1335 = vld [vmem:[%s7 + $0x68] sm:$0xff]
      %v1336 = vld [vmem:[%s7 + $0x70] sm:$0xff]
      %v1337 = vld [vmem:[%s7 + $0x78] sm:$0xff]
      %v1338 = vld [vmem:[%s7 + $0x80] sm:$0xff]
      %v1339 = vld [vmem:[%s7 + $0x88] sm:$0xff]
      %v1340 = vld [vmem:[%s7 + $0x90] sm:$0xff]
      %v1341 = vld [vmem:[%s7 + $0x98] sm:$0xff]
      %v1342 = vld [vmem:[%s7 + $0xa0] sm:$0xff]
      %v1343 = vld [vmem:[%s7 + $0xa8] sm:$0xff]
      %v1344 = vld [vmem:[%s7 + $0xb0] sm:$0xff]
      %v1345 = vld [vmem:[%s7 + $0xb8] sm:$0xff]
      %v1346 = vld [vmem:[%s7 + $0xc0] sm:$0xff]
      %v1347 = vld [vmem:[%s7 + $0xc8] sm:$0xff]
      %v1348 = vld [vmem:[%s7 + $0xd0] sm:$0xff]
      %v1349 = vld [vmem:[%s7 + $0xd8] sm:$0xff]
      %v1350 = vld [vmem:[%s7 + $0xe0] sm:$0xff]
      %v1351 = vld [vmem:[%s7 + $0xe8] sm:$0xff]
      %v1352 = vld [vmem:[%s7 + $0xf0] sm:$0xff]
      %v1353 = vld [vmem:[%s7 + $0xf8] sm:$0xff]
      %v1354 = vld [vmem:[%s7 + $0x100] sm:$0xff]
      %v1355 = vld [vmem:[%s7 + $0x108] sm:$0xff]
      %v1356 = vld [vmem:[%s7 + $0x110] sm:$0xff]
      %v1357 = vld [vmem:[%s7 + $0x118] sm:$0xff]
      %v1358 = vld [vmem:[%s7 + $0x120] sm:$0xff]
      %v1359 = vld [vmem:[%s7 + $0x128] sm:$0xff]
      %v1360 = vld [vmem:[%s7 + $0x130] sm:$0xff]
      %v1361 = vld [vmem:[%s7 + $0x138] sm:$0xff]
      %v1362 = vld [vmem:[%s7 + $0x140] sm:$0xff]
      %v1363 = vld [vmem:[%s7 + $0x148] sm:$0xff]
      %v1364 = vld [vmem:[%s7 + $0x150] sm:$0xff]
      %v1365 = vld [vmem:[%s7 + $0x158] sm:$0xff]
      %v1366 = vld [vmem:[%s7 + $0x160] sm:$0xff]
      %v1367 = vld [vmem:[%s7 + $0x168] sm:$0xff]
      %v1368 = vld [vmem:[%s7 + $0x170] sm:$0xff]
      %v1369 = vld [vmem:[%s7 + $0x178] sm:$0xff]
      %1370 = vmatprep.subr.mxu0 %v1368
      %1371 = vmatpush1.msra.mxu0 %v1367
      %1372 = vmatprep.subr.mxu0 %v1365
      %1373 = vmatpush1.msra.mxu0 %v1364
      %1374 = vmatprep.subr.mxu0 %v1362
      %1375 = vmatpush1.msra.mxu0 %v1361
      %1376 = vmatprep.subr.mxu0 %v1359
      %1377 = vmatpush1.msra.mxu0 %v1358
      %1378 = vmatprep.subr.mxu0 %v1356
      %1379 = vmatpush1.msra.mxu0 %v1355
      %1380 = vmatprep.subr.mxu0 %v1353
      %1381 = vmatpush1.msra.mxu0 %v1352
      %1382 = vmatprep.subr.mxu0 %v1350
      %1383 = vmatpush1.msra.mxu0 %v1349
      %1384 = vmatprep.subr.mxu0 %v1347
      %1385 = vmatpush1.msra.mxu0 %v1346
      %1386 = vmatprep.subr.mxu0 %v1344
      %1387 = vmatpush1.msra.mxu0 %v1343
      %1388 = vmatprep.subr.mxu0 %v1341
      %1389 = vmatpush1.msra.mxu0 %v1340
      %1390 = vmatprep.subr.mxu0 %v1338
      %1391 = vmatpush1.msra.mxu0 %v1337
      %1392 = vmatprep.subr.mxu0 %v1335
      %1393 = vmatpush1.msra.mxu0 %v1334
      %1394 = vmatprep.subr.mxu0 %v1332
      %1395 = vmatpush1.msra.mxu0 %v1331
      %1396 = vmatprep.subr.mxu0 %v1329
      %1397 = vmatpush1.msra.mxu0 %v1328
      %1398 = vmatprep.subr.mxu0 %v1326
      %1399 = vmatpush1.msra.mxu0 %v1325
      %1400 = vmatprep.subr.mxu0 %v1323
      %1401 = vmatpush1.msra.mxu0 %v1322
      %1402 = vmatprep.subr.mxu0 0.0
      %1403 = vmatpush2.msra.mxu0 0.0
      %1404 = vmatprep.subr.mxu0 0.0
      %1405 = vmatpush2.msra.mxu0 0.0
      %1406 = vmatprep.subr.mxu0 0.0
      %1407 = vmatpush2.msra.mxu0 0.0
      %1408 = vmatprep.subr.mxu0 0.0
      %1409 = vmatpush2.msra.mxu0 0.0
      %1410 = vmatprep.subr.mxu0 0.0
      %1411 = vmatpush2.msra.mxu0 0.0
      %1412 = vmatprep.subr.mxu0 0.0
      %1413 = vmatpush2.msra.mxu0 0.0
      %1414 = vmatprep.subr.mxu0 0.0
      %1415 = vmatpush2.msra.mxu0 0.0
      %1416 = vmatprep.subr.mxu0 0.0
      %1417 = vmatpush2.msra.mxu0 0.0
      %1418 = vmatprep.subr.mxu0 0.0
      %1419 = vmatpush2.msra.mxu0 0.0
      %1420 = vmatprep.subr.mxu0 0.0
      %1421 = vmatpush2.msra.mxu0 0.0
      %1422 = vmatprep.subr.mxu0 0.0
      %1423 = vmatpush2.msra.mxu0 0.0
      %1424 = vmatprep.subr.mxu0 0.0
      %1425 = vmatpush2.msra.mxu0 0.0
      %1426 = vmatprep.subr.mxu0 0.0
      %1427 = vmatpush2.msra.mxu0 0.0
      %1428 = vmatprep.subr.mxu0 0.0
      %1429 = vmatpush2.msra.mxu0 0.0
      %1430 = vmatprep.subr.mxu0 0.0
      %1431 = vmatpush2.msra.mxu0 0.0
      %1432 = vmatprep.subr.mxu0 0.0
      %1433 = vmatpush2.msra.mxu0 0.0
      %1434 = vmatprep.mubr.f32.mxu0 0.0
      %1435 = vmatmul.mubr.f32.gmra.mxu0 %v629
      %v1436 = vpop.f32.mrf.mxu0
      %v1437 = vadd.f32 0.0, %v1436
      %v1438 = vpop.f32.mrf.mxu0
      %v1439 = vadd.f32 0.0, %v1438
      %1440 = vdwg.mxu0
      %1441 = vmatprep.subr.mxu0 0.0
      %1442 = vmatpush1.msra.mxu0 %v1369
      %1443 = vmatprep.subr.mxu0 0.0
      %1444 = vmatpush1.msra.mxu0 %v1366
      %1445 = vmatprep.subr.mxu0 0.0
      %1446 = vmatpush1.msra.mxu0 %v1363
      %1447 = vmatprep.subr.mxu0 0.0
      %1448 = vmatpush1.msra.mxu0 %v1360
      %1449 = vmatprep.subr.mxu0 0.0
      %1450 = vmatpush1.msra.mxu0 %v1357
      %1451 = vmatprep.subr.mxu0 0.0
      %1452 = vmatpush1.msra.mxu0 %v1354
      %1453 = vmatprep.subr.mxu0 0.0
      %1454 = vmatpush1.msra.mxu0 %v1351
      %1455 = vmatprep.subr.mxu0 0.0
      %1456 = vmatpush1.msra.mxu0 %v1348
      %1457 = vmatprep.subr.mxu0 0.0
      %1458 = vmatpush1.msra.mxu0 %v1345
      %1459 = vmatprep.subr.mxu0 0.0
      %1460 = vmatpush1.msra.mxu0 %v1342
      %1461 = vmatprep.subr.mxu0 0.0
      %1462 = vmatpush1.msra.mxu0 %v1339
      %1463 = vmatprep.subr.mxu0 0.0
      %1464 = vmatpush1.msra.mxu0 %v1336
      %1465 = vmatprep.subr.mxu0 0.0
      %1466 = vmatpush1.msra.mxu0 %v1333
      %1467 = vmatprep.subr.mxu0 0.0
      %1468 = vmatpush1.msra.mxu0 %v1330
      %1469 = vmatprep.subr.mxu0 0.0
      %1470 = vmatpush1.msra.mxu0 %v1327
      %1471 = vmatprep.subr.mxu0 0.0
      %1472 = vmatpush1.msra.mxu0 %v1324
      %1473 = vmatprep.subr.mxu0 0.0
      %1474 = vmatpush2.msra.mxu0 0.0
      %1475 = vmatprep.subr.mxu0 0.0
      %1476 = vmatpush2.msra.mxu0 0.0
      %1477 = vmatprep.subr.mxu0 0.0
      %1478 = vmatpush2.msra.mxu0 0.0
      %1479 = vmatprep.subr.mxu0 0.0
      %1480 = vmatpush2.msra.mxu0 0.0
      %1481 = vmatprep.subr.mxu0 0.0
      %1482 = vmatpush2.msra.mxu0 0.0
      %1483 = vmatprep.subr.mxu0 0.0
      %1484 = vmatpush2.msra.mxu0 0.0
      %1485 = vmatprep.subr.mxu0 0.0
      %1486 = vmatpush2.msra.mxu0 0.0
      %1487 = vmatprep.subr.mxu0 0.0
      %1488 = vmatpush2.msra.mxu0 0.0
      %1489 = vmatprep.subr.mxu0 0.0
      %1490 = vmatpush2.msra.mxu0 0.0
      %1491 = vmatprep.subr.mxu0 0.0
      %1492 = vmatpush2.msra.mxu0 0.0
      %1493 = vmatprep.subr.mxu0 0.0
      %1494 = vmatpush2.msra.mxu0 0.0
      %1495 = vmatprep.subr.mxu0 0.0
      %1496 = vmatpush2.msra.mxu0 0.0
      %1497 = vmatprep.subr.mxu0 0.0
      %1498 = vmatpush2.msra.mxu0 0.0
      %1499 = vmatprep.subr.mxu0 0.0
      %1500 = vmatpush2.msra.mxu0 0.0
      %1501 = vmatprep.subr.mxu0 0.0
      %1502 = vmatpush2.msra.mxu0 0.0
      %1503 = vmatprep.subr.mxu0 0.0
      %1504 = vmatpush2.msra.mxu0 0.0
      %1505 = vmatprep.mubr.f32.mxu0 0.0
      %1506 = vmatmul.mubr.f32.gmra.mxu0 %v629
      %v1507 = vpop.f32.mrf.mxu0
      %v1508 = vadd.f32 0.0, %v1507
      %v1509 = vpop.f32.mrf.mxu0
      %1510 = vdwg.mxu0
      %v1511 = vadd.f32 %v1248, %v1437
      %v1512 = vadd.f32 %v1250, %v1439
      %v1513 = vadd.f32 %v1319, %v1508
      %v1514 = vld [vmem:[%s9] sm:$0x7]
      %v1516 = vlaneseq
      %v1517 = vshrl.u32 %v1516, 7
      %v1518 = vsub.s32 0, %v1517
      %v1519 = vrot.slane %v1514, %v1518
      %v1520 = vlaneseq
      %v1521 = vshrl.u32 %v1520, 7
      %v1522 = vsub.s32 1, %v1521
      %v1523 = vrot.slane %v1514, %v1522
      %v1524 = vlaneseq
      %v1525 = vshrl.u32 %v1524, 7
      %v1526 = vsub.s32 2, %v1525
      %v1527 = vrot.slane %v1514, %v1526
      %v1531 = vadd.f32 %v1511, %v1519
      %v1532 = vadd.f32 %v1512, %v1523
      %v1533 = vadd.f32 %v1513, %v1527
      %v1534 = vld [vmem:[%s8] sm:$0xff]
      %v1535 = vld [vmem:[%s8 + $0x8] sm:$0xff]
      %v1536 = vld [vmem:[%s8 + $0x10] sm:$0xff]
      %v1537 = vld [vmem:[%s8 + $0x18] sm:$0xff]
      %v1538 = vld [vmem:[%s8 + $0x20] sm:$0xff]
      %v1539 = vld [vmem:[%s8 + $0x28] sm:$0xff]
      %v1540 = vld [vmem:[%s8 + $0x30] sm:$0xff]
      %v1541 = vld [vmem:[%s8 + $0x38] sm:$0xff]
      %v1542 = vld [vmem:[%s8 + $0x40] sm:$0xff]
      %v1543 = vld [vmem:[%s8 + $0x48] sm:$0xff]
      %v1544 = vld [vmem:[%s8 + $0x50] sm:$0xff]
      %v1545 = vld [vmem:[%s8 + $0x58] sm:$0xff]
      %v1546 = vld [vmem:[%s8 + $0x60] sm:$0xff]
      %v1547 = vld [vmem:[%s8 + $0x68] sm:$0xff]
      %v1548 = vld [vmem:[%s8 + $0x70] sm:$0xff]
      %v1549 = vld [vmem:[%s8 + $0x78] sm:$0xff]
      %v1550 = vld [vmem:[%s8 + $0x80] sm:$0xff]
      %v1551 = vld [vmem:[%s8 + $0x88] sm:$0xff]
      %v1552 = vld [vmem:[%s8 + $0x90] sm:$0xff]
      %v1553 = vld [vmem:[%s8 + $0x98] sm:$0xff]
      %v1554 = vld [vmem:[%s8 + $0xa0] sm:$0xff]
      %v1555 = vld [vmem:[%s8 + $0xa8] sm:$0xff]
      %v1556 = vld [vmem:[%s8 + $0xb0] sm:$0xff]
      %v1557 = vld [vmem:[%s8 + $0xb8] sm:$0xff]
      %v1558 = vld [vmem:[%s8 + $0xc0] sm:$0xff]
      %v1559 = vld [vmem:[%s8 + $0xc8] sm:$0xff]
      %v1560 = vld [vmem:[%s8 + $0xd0] sm:$0xff]
      %v1561 = vld [vmem:[%s8 + $0xd8] sm:$0xff]
      %v1562 = vld [vmem:[%s8 + $0xe0] sm:$0xff]
      %v1563 = vld [vmem:[%s8 + $0xe8] sm:$0xff]
      %v1564 = vld [vmem:[%s8 + $0xf0] sm:$0xff]
      %v1565 = vld [vmem:[%s8 + $0xf8] sm:$0xff]
      %v1566 = vld [vmem:[%s8 + $0x100] sm:$0xff]
      %v1567 = vld [vmem:[%s8 + $0x108] sm:$0xff]
      %v1568 = vld [vmem:[%s8 + $0x110] sm:$0xff]
      %v1569 = vld [vmem:[%s8 + $0x118] sm:$0xff]
      %v1570 = vld [vmem:[%s8 + $0x120] sm:$0xff]
      %v1571 = vld [vmem:[%s8 + $0x128] sm:$0xff]
      %v1572 = vld [vmem:[%s8 + $0x130] sm:$0xff]
      %v1573 = vld [vmem:[%s8 + $0x138] sm:$0xff]
      %v1574 = vld [vmem:[%s8 + $0x140] sm:$0xff]
      %v1575 = vld [vmem:[%s8 + $0x148] sm:$0xff]
      %v1576 = vld [vmem:[%s8 + $0x150] sm:$0xff]
      %v1577 = vld [vmem:[%s8 + $0x158] sm:$0xff]
      %v1578 = vld [vmem:[%s8 + $0x160] sm:$0xff]
      %v1579 = vld [vmem:[%s8 + $0x168] sm:$0xff]
      %v1580 = vld [vmem:[%s8 + $0x170] sm:$0xff]
      %v1581 = vld [vmem:[%s8 + $0x178] sm:$0xff]
      %v1582 = vld [vmem:[%s10] sm:$0x7]
      %v1584 = vlaneseq
      %v1585 = vshrl.u32 %v1584, 7
      %v1586 = vsub.s32 0, %v1585
      %v1587 = vrot.slane %v1582, %v1586
      %v1588 = vlaneseq
      %v1589 = vshrl.u32 %v1588, 7
      %v1590 = vsub.s32 1, %v1589
      %v1591 = vrot.slane %v1582, %v1590
      %v1592 = vlaneseq
      %v1593 = vshrl.u32 %v1592, 7
      %v1594 = vsub.s32 2, %v1593
      %v1595 = vrot.slane %v1582, %v1594
      %1599 = vmatprep.subr.mxu0 %v1580
      %1600 = vmatpush1.msra.mxu0 %v1579
      %1601 = vmatprep.subr.mxu0 %v1577
      %1602 = vmatpush1.msra.mxu0 %v1576
      %1603 = vmatprep.subr.mxu0 %v1574
      %1604 = vmatpush1.msra.mxu0 %v1573
      %1605 = vmatprep.subr.mxu0 %v1571
      %1606 = vmatpush1.msra.mxu0 %v1570
      %1607 = vmatprep.subr.mxu0 %v1568
      %1608 = vmatpush1.msra.mxu0 %v1567
      %1609 = vmatprep.subr.mxu0 %v1565
      %1610 = vmatpush1.msra.mxu0 %v1564
      %1611 = vmatprep.subr.mxu0 %v1562
      %1612 = vmatpush1.msra.mxu0 %v1561
      %1613 = vmatprep.subr.mxu0 %v1559
      %1614 = vmatpush1.msra.mxu0 %v1558
      %1615 = vmatprep.subr.mxu0 %v1556
      %1616 = vmatpush1.msra.mxu0 %v1555
      %1617 = vmatprep.subr.mxu0 %v1553
      %1618 = vmatpush1.msra.mxu0 %v1552
      %1619 = vmatprep.subr.mxu0 %v1550
      %1620 = vmatpush1.msra.mxu0 %v1549
      %1621 = vmatprep.subr.mxu0 %v1547
      %1622 = vmatpush1.msra.mxu0 %v1546
      %1623 = vmatprep.subr.mxu0 %v1544
      %1624 = vmatpush1.msra.mxu0 %v1543
      %1625 = vmatprep.subr.mxu0 %v1541
      %1626 = vmatpush1.msra.mxu0 %v1540
      %1627 = vmatprep.subr.mxu0 %v1538
      %1628 = vmatpush1.msra.mxu0 %v1537
      %1629 = vmatprep.subr.mxu0 %v1535
      %1630 = vmatpush1.msra.mxu0 %v1534
      %1631 = vmatprep.subr.mxu0 0.0
      %1632 = vmatpush2.msra.mxu0 0.0
      %1633 = vmatprep.subr.mxu0 0.0
      %1634 = vmatpush2.msra.mxu0 0.0
      %1635 = vmatprep.subr.mxu0 0.0
      %1636 = vmatpush2.msra.mxu0 0.0
      %1637 = vmatprep.subr.mxu0 0.0
      %1638 = vmatpush2.msra.mxu0 0.0
      %1639 = vmatprep.subr.mxu0 0.0
      %1640 = vmatpush2.msra.mxu0 0.0
      %1641 = vmatprep.subr.mxu0 0.0
      %1642 = vmatpush2.msra.mxu0 0.0
      %1643 = vmatprep.subr.mxu0 0.0
      %1644 = vmatpush2.msra.mxu0 0.0
      %1645 = vmatprep.subr.mxu0 0.0
      %1646 = vmatpush2.msra.mxu0 0.0
      %1647 = vmatprep.subr.mxu0 0.0
      %1648 = vmatpush2.msra.mxu0 0.0
      %1649 = vmatprep.subr.mxu0 0.0
      %1650 = vmatpush2.msra.mxu0 0.0
      %1651 = vmatprep.subr.mxu0 0.0
      %1652 = vmatpush2.msra.mxu0 0.0
      %1653 = vmatprep.subr.mxu0 0.0
      %1654 = vmatpush2.msra.mxu0 0.0
      %1655 = vmatprep.subr.mxu0 0.0
      %1656 = vmatpush2.msra.mxu0 0.0
      %1657 = vmatprep.subr.mxu0 0.0
      %1658 = vmatpush2.msra.mxu0 0.0
      %1659 = vmatprep.subr.mxu0 0.0
      %1660 = vmatpush2.msra.mxu0 0.0
      %1661 = vmatprep.subr.mxu0 0.0
      %1662 = vmatpush2.msra.mxu0 0.0
      %1663 = vmatprep.mubr.f32.mxu0 0.0
      %1664 = vmatmul.mubr.f32.gmra.mxu0 %v628
      %v1665 = vpop.f32.mrf.mxu0
      %v1666 = vadd.f32 %v1587, %v1665
      %v1667 = vpop.f32.mrf.mxu0
      %v1668 = vadd.f32 %v1591, %v1667
      %1669 = vdwg.mxu0
      %1670 = vmatprep.subr.mxu0 0.0
      %1671 = vmatpush1.msra.mxu0 %v1581
      %1672 = vmatprep.subr.mxu0 0.0
      %1673 = vmatpush1.msra.mxu0 %v1578
      %1674 = vmatprep.subr.mxu0 0.0
      %1675 = vmatpush1.msra.mxu0 %v1575
      %1676 = vmatprep.subr.mxu0 0.0
      %1677 = vmatpush1.msra.mxu0 %v1572
      %1678 = vmatprep.subr.mxu0 0.0
      %1679 = vmatpush1.msra.mxu0 %v1569
      %1680 = vmatprep.subr.mxu0 0.0
      %1681 = vmatpush1.msra.mxu0 %v1566
      %1682 = vmatprep.subr.mxu0 0.0
      %1683 = vmatpush1.msra.mxu0 %v1563
      %1684 = vmatprep.subr.mxu0 0.0
      %1685 = vmatpush1.msra.mxu0 %v1560
      %1686 = vmatprep.subr.mxu0 0.0
      %1687 = vmatpush1.msra.mxu0 %v1557
      %1688 = vmatprep.subr.mxu0 0.0
      %1689 = vmatpush1.msra.mxu0 %v1554
      %1690 = vmatprep.subr.mxu0 0.0
      %1691 = vmatpush1.msra.mxu0 %v1551
      %1692 = vmatprep.subr.mxu0 0.0
      %1693 = vmatpush1.msra.mxu0 %v1548
      %1694 = vmatprep.subr.mxu0 0.0
      %1695 = vmatpush1.msra.mxu0 %v1545
      %1696 = vmatprep.subr.mxu0 0.0
      %1697 = vmatpush1.msra.mxu0 %v1542
      %1698 = vmatprep.subr.mxu0 0.0
      %1699 = vmatpush1.msra.mxu0 %v1539
      %1700 = vmatprep.subr.mxu0 0.0
      %1701 = vmatpush1.msra.mxu0 %v1536
      %1702 = vmatprep.subr.mxu0 0.0
      %1703 = vmatpush2.msra.mxu0 0.0
      %1704 = vmatprep.subr.mxu0 0.0
      %1705 = vmatpush2.msra.mxu0 0.0
      %1706 = vmatprep.subr.mxu0 0.0
      %1707 = vmatpush2.msra.mxu0 0.0
      %1708 = vmatprep.subr.mxu0 0.0
      %1709 = vmatpush2.msra.mxu0 0.0
      %1710 = vmatprep.subr.mxu0 0.0
      %1711 = vmatpush2.msra.mxu0 0.0
      %1712 = vmatprep.subr.mxu0 0.0
      %1713 = vmatpush2.msra.mxu0 0.0
      %1714 = vmatprep.subr.mxu0 0.0
      %1715 = vmatpush2.msra.mxu0 0.0
      %1716 = vmatprep.subr.mxu0 0.0
      %1717 = vmatpush2.msra.mxu0 0.0
      %1718 = vmatprep.subr.mxu0 0.0
      %1719 = vmatpush2.msra.mxu0 0.0
      %1720 = vmatprep.subr.mxu0 0.0
      %1721 = vmatpush2.msra.mxu0 0.0
      %1722 = vmatprep.subr.mxu0 0.0
      %1723 = vmatpush2.msra.mxu0 0.0
      %1724 = vmatprep.subr.mxu0 0.0
      %1725 = vmatpush2.msra.mxu0 0.0
      %1726 = vmatprep.subr.mxu0 0.0
      %1727 = vmatpush2.msra.mxu0 0.0
      %1728 = vmatprep.subr.mxu0 0.0
      %1729 = vmatpush2.msra.mxu0 0.0
      %1730 = vmatprep.subr.mxu0 0.0
      %1731 = vmatpush2.msra.mxu0 0.0
      %1732 = vmatprep.subr.mxu0 0.0
      %1733 = vmatpush2.msra.mxu0 0.0
      %1734 = vmatprep.mubr.f32.mxu0 0.0
      %1735 = vmatmul.mubr.f32.gmra.mxu0 %v628
      %v1736 = vpop.f32.mrf.mxu0
      %v1737 = vadd.f32 %v1595, %v1736
      %v1738 = vpop.f32.mrf.mxu0
      %1739 = vdwg.mxu0
      %v1740 = vadd.f32 %v1531, %v1666
      %v1741 = vxor.u32 %v1740, 2147483648
      %v1742 = vmul.f32 %v1741, 1.442695
      %v1743 = vpow.pop %v1742
      %v1744 = vadd.f32 %v1743, 1.0
      %v1745 = vrcp.pop %v1744
      %v1746 = vmul.f32 1.0, %v1745
      %v1747 = vadd.f32 %v1532, %v1668
      %v1748 = vxor.u32 %v1747, 2147483648
      %v1749 = vmul.f32 %v1748, 1.442695
      %v1750 = vpow.pop %v1749
      %v1751 = vadd.f32 %v1750, 1.0
      %v1752 = vrcp.pop %v1751
      %v1753 = vmul.f32 1.0, %v1752
      %v1754 = vmul.f32 %v1746, %v1737
      %v1755 = vadd.f32 %v1533, %v1754
      %v1756 = vtanh.pop %v1755
      %v1757 = vsub.f32 1.0, %v1753
      %v1758 = vmul.f32 %v1757, %v1756
      %v1759 = vmul.f32 %v1753, %v628
      %v1760 = vadd.f32 %v1758, %v1759
      %1761 = vst [vmem:[#allocation2] sm:$0xff] %v1760
      %1762 = vst [vmem:[%s381] sm:$0xff] %v1760
      %p1763 = scmp.lt.s32.totalorder %s22, 7
      %s1764 = scalar_select %p1763, %s22, 7
      %s1765 = smul.addr %s1764, 8
      %s1766 = scalar_lea.vmem %s11, %s1765
      // Predicated region
      $region69: #{seq2seq_forward.4} parent=63 // pred_check
        %p1767 = pneg %p276
      $region70: #{seq2seq_forward.4} parent=63 // pred_check_branch
        %1769 = sbr.rel (%p1767) target = $region72
      $region71: #{seq2seq_forward.4} parent=63 // pred_region
        _
      $region72: #{seq2seq_forward.4} parent=63 // pred_fallthru
        _
    $region64: #{seq2seq_forward.4} parent=5 // pred_fallthru
      _
    %p1770 = scmp.le.s32.totalorder 2, %s17
    // Predicated region
    $region73: #{seq2seq_forward.4} parent=5 // pred_check
      %p1771 = pneg %p1770
    $region74: #{seq2seq_forward.4} parent=5 // pred_check_branch
      %1773 = sbr.rel (%p1771) target = $region76
    $region75: #{seq2seq_forward.4} parent=5 // pred_region
      %s1774 = ssub.s32 %s17, 2
      // Predicated region
      $region77: #{seq2seq_forward.4} parent=75 // pred_check
        %p1775 = pneg %p282
      $region78: #{seq2seq_forward.4} parent=75 // pred_check_branch
        %1777 = sbr.rel (%p1775) target = $region80
      $region79: #{seq2seq_forward.4} parent=75 // pred_region
        %p1778 = scmp.lt.s32.totalorder %s23, 7
        %s1779 = scalar_select %p1778, %s23, 7
        %s1780 = smul.addr %s1779, 8
        %s1781 = scalar_lea.vmem %s11, %s1780
      $region80: #{seq2seq_forward.4} parent=75 // pred_fallthru
        _
    $region76: #{seq2seq_forward.4} parent=5 // pred_fallthru
      _
  $region6: #{seq2seq_forward.4} parent=0 // loop_footer
    %s21 = sadd.s32 1, %s17
  $region7: #{seq2seq_forward.4} parent=0 // loop_footer_branch
    %16 = sbr.rel target = $region3
  $region8: #{seq2seq_forward.4} parent=0 // loop_exit
    _

</llo_original>
